<compile_context>
chip_gen: v6e
topology: v6e:2x2x1
jax: 0.10.0
libtpu: 0.0.40
codegen_flags: <defaults>
</compile_context>

<pallas_src>
import functools

import jax
import jax.numpy as jnp
from jax import lax
from jax.experimental import pallas as pl
from jax.experimental.pallas import tpu as pltpu


# ----------------------------------------------------------------------------
# Kernel
# ----------------------------------------------------------------------------
def _layernorm(x, gamma, beta, eps=1e-5):
    mu = jnp.mean(x, axis=-1, keepdims=True)
    var = jnp.mean((x - mu) ** 2, axis=-1, keepdims=True)
    return (x - mu) * lax.rsqrt(var + eps) * gamma + beta


def _slot_attention_kernel(num_iters, scale, eps, bt, S, n_pad, d,
                           x_ref, mask_ref, slots0_ref,
                           wq_ref, bq_ref, wkv_ref, bkv_ref,
                           wih_ref, bih_ref, whh_ref, bhh_ref,
                           w1_ref, b1_ref, w2_ref, b2_ref, ln_ref,
                           attn_ref):
    f32 = jnp.float32
    bf16 = jnp.bfloat16

    x = x_ref[...]                                  # (bt, n_pad, d)  f32
    mask = mask_ref[...]                            # (bt, 1, n_pad)  f32
    slots = slots0_ref[...].reshape(bt * S, d)      # (bt*S, d)       f32
    ln = ln_ref[...]                                # (6, d)          f32

    # norm_input + fused k/v projection, hoisted out of the iteration loop.
    xin = _layernorm(x.reshape(bt * n_pad, d), ln[0:1], ln[1:2])     # f32
    kv = (jnp.dot(xin.astype(bf16), wkv_ref[...],
                  preferred_element_type=f32) + bkv_ref[...])        # (bt*n_pad, 2d)
    k3 = kv[:, :d].reshape(bt, n_pad, d)
    v3 = kv[:, d:].reshape(bt, n_pad, d).astype(bf16)
    # Hoisted transpose: one XLU transpose instead of one per iteration.
    kT = jnp.swapaxes(k3, 1, 2).astype(bf16)                         # (bt, d, n_pad)

    wq, bq = wq_ref[...], bq_ref[...]
    wih, bih = wih_ref[...], bih_ref[...]
    whh, bhh = whh_ref[...], bhh_ref[...]
    w1, b1 = w1_ref[...], b1_ref[...]
    w2, b2 = w2_ref[...], b2_ref[...]

    def body(_, carry):
        slots, _unused_attn = carry
        slots_prev = slots

        s_norm = _layernorm(slots, ln[2:3], ln[3:4])
        q = jnp.dot(s_norm.astype(bf16), wq, preferred_element_type=f32) + bq
        q3 = q.reshape(bt, S, d).astype(bf16)

        dots = jnp.einsum('bsd,bdn->bsn', q3, kT,
                          preferred_element_type=f32) * scale        # (bt, S, n_pad)

        # softmax over the slot axis (dim=1 in the torch reference)
        m = jnp.max(dots, axis=1, keepdims=True)
        e = jnp.exp(dots - m)
        inv_den = pl.reciprocal(jnp.sum(e, axis=1, keepdims=True), approx=True)
        attn = (e * inv_den + eps) * mask                            # (bt, S, n_pad)

        # NOTE: a row whose mask is entirely zero divides by zero here, exactly
        # like the reference module (attn / attn.sum(-1)).
        inv_row = pl.reciprocal(jnp.sum(attn, axis=-1, keepdims=True), approx=True)
        weights = attn * inv_row

        updates = jnp.einsum('bsn,bnd->bsd', weights.astype(bf16), v3,
                             preferred_element_type=f32).reshape(bt * S, d)

        # Fused GRUCell: 2 matmuls instead of 6; gate column layout [r | z | n].
        gi = jnp.dot(updates.astype(bf16), wih, preferred_element_type=f32) + bih
        gh = jnp.dot(slots_prev.astype(bf16), whh, preferred_element_type=f32) + bhh
        r = jax.nn.sigmoid(gi[:, :d] + gh[:, :d])
        z = jax.nn.sigmoid(gi[:, d:2 * d] + gh[:, d:2 * d])
        ng = jnp.tanh(gi[:, 2 * d:] + r * gh[:, 2 * d:])
        slots = (1.0 - z) * ng + z * slots_prev

        # Residual MLP on norm_pre_ff(slots).
        s_ff = _layernorm(slots, ln[4:5], ln[5:6])
        h = jnp.maximum(jnp.dot(s_ff.astype(bf16), w1,
                                preferred_element_type=f32) + b1, 0.0)
        slots = slots + jnp.dot(h.astype(bf16), w2,
                                preferred_element_type=f32) + b2
        return slots, attn

    attn0 = jnp.zeros((bt, S, n_pad), f32)
    _, attn = lax.fori_loop(0, num_iters, body, (slots, attn0), unroll=True)
    attn_ref[...] = attn.astype(attn_ref.dtype)


# ----------------------------------------------------------------------------
# Parameter initialisation (deterministic, synthetic)
# TODO(synk): pretrained-checkpoint loading (AutoModel.from_pretrained) has no
# in-kernel equivalent; synthetic parameters are generated instead.
# ----------------------------------------------------------------------------
def init_params(key, d):
    ks = jax.random.split(key, 12)

    def linear(k, out_f, in_f):
        k1, k2 = jax.random.split(k)
        bound = 1.0 / (in_f ** 0.5)
        w = jax.random.uniform(k1, (out_f, in_f), minval=-bound, maxval=bound)
        b = jax.random.uniform(k2, (out_f,), minval=-bound, maxval=bound)
        return w.astype(jnp.float32), b.astype(jnp.float32)

    p = {}
    p["slots_mu"] = jax.random.normal(ks[0], (1, 1, d), jnp.float32)
    xb = (6.0 / (1 + d)) ** 0.5
    p["slots_logsigma"] = jax.random.uniform(ks[1], (1, 1, d),
                                             minval=-xb, maxval=xb).astype(jnp.float32)
    p["default_slot"] = jax.random.normal(ks[2], (1, 1, d), jnp.float32)

    p["to_q"] = linear(ks[3], d, d)
    p["to_k"] = linear(ks[4], d, d)
    p["to_v"] = linear(ks[5], d, d)

    # GRUCell: weight_ih (3d, d), weight_hh (3d, d), biases (3d,), gate order r,z,n
    p["gru_w_ih"], p["gru_b_ih"] = linear(ks[6], 3 * d, d)
    p["gru_w_hh"], p["gru_b_hh"] = linear(ks[7], 3 * d, d)

    p["mlp1"] = linear(ks[8], d, d)
    p["mlp2"] = linear(ks[9], d, d)

    p["ln_input"] = (jnp.ones((d,), jnp.float32), jnp.zeros((d,), jnp.float32))
    p["ln_slots"] = (jnp.ones((d,), jnp.float32), jnp.zeros((d,), jnp.float32))
    p["ln_pre_ff"] = (jnp.ones((d,), jnp.float32), jnp.zeros((d,), jnp.float32))
    return p


# ----------------------------------------------------------------------------
# Wrapper
# ----------------------------------------------------------------------------
def _pick_block_batch(b, cap=8):
    """Largest divisor of b not exceeding cap (batch elements per grid step)."""
    for c in range(min(b, cap), 0, -1):
        if b % c == 0:
            return c
    return 1


def slot_attention_forward(params, input_embeds, mask, num_slots, num_iters, noise_key):
    if num_iters < 1:
        raise ValueError("num_iters must be >= 1")

    b, n, d = input_embeds.shape
    S = 1 + num_slots
    eps = 1e-8
    scale = d ** (-0.5)

    # Pad the sequence axis to a multiple of 128 lanes: lane-dense MXU tiles and
    # unmasked output stores. Padded columns get mask == 0, so results over the
    # real columns are unchanged.
    n_pad = ((n + 127) // 128) * 128

    bt = _pick_block_batch(b)
    grid_b = b // bt

    # Initial slots (the torch.randn sampling step) — plain-JAX glue.
    mu = jnp.broadcast_to(params["slots_mu"], (b, num_slots, d))
    sigma = jnp.exp(params["slots_logsigma"])
    noise = jax.random.normal(noise_key, (b, num_slots, d), jnp.float32)
    random_slots = mu + sigma * noise
    default = jnp.broadcast_to(params["default_slot"], (b, 1, d))
    slots0 = jnp.concatenate([default, random_slots], axis=1)        # (b, S, d)

    # Pack weights: (in, out) layout, fused along the output (lane) dimension,
    # bf16 matmul operands; biases / layernorm params stay f32.
    bf16 = jnp.bfloat16
    wq, bq = params["to_q"]
    wk, bk = params["to_k"]
    wv, bv = params["to_v"]
    wq_t = wq.T.astype(bf16)                                         # (d, d)
    wkv = jnp.concatenate([wk.T, wv.T], axis=1).astype(bf16)         # (d, 2d)
    bq_r = bq.reshape(1, d)
    bkv = jnp.concatenate([bk, bv]).reshape(1, 2 * d)

    w_ih, b_ih = params["gru_w_ih"], params["gru_b_ih"]
    w_hh, b_hh = params["gru_w_hh"], params["gru_b_hh"]
    wih = w_ih.T.astype(bf16)                                        # (d, 3d) [r|z|n]
    whh = w_hh.T.astype(bf16)                                        # (d, 3d) [r|z|n]
    bih = b_ih.reshape(1, 3 * d)
    bhh = b_hh.reshape(1, 3 * d)

    w1, b1 = params["mlp1"]
    w2, b2 = params["mlp2"]
    w1_t = w1.T.astype(bf16)
    w2_t = w2.T.astype(bf16)
    b1_r = b1.reshape(1, d)
    b2_r = b2.reshape(1, d)

    ln = jnp.stack([params["ln_input"][0], params["ln_input"][1],
                    params["ln_slots"][0], params["ln_slots"][1],
                    params["ln_pre_ff"][0], params["ln_pre_ff"][1]])  # (6, d)

    x = input_embeds.astype(jnp.float32)
    mask_f = mask.astype(jnp.float32)
    if n_pad != n:
        x = jnp.pad(x, ((0, 0), (0, n_pad - n), (0, 0)))
        mask_f = jnp.pad(mask_f, ((0, 0), (0, n_pad - n)))
    mask3 = mask_f.reshape(b, 1, n_pad)

    kernel = functools.partial(_slot_attention_kernel,
                               num_iters, scale, eps, bt, S, n_pad, d)

    def weight_spec(shape):
        return pl.BlockSpec(shape, lambda i, _s=shape: (0,) * len(_s))

    def batch_spec(shape):
        return pl.BlockSpec(shape, lambda i: (i, 0, 0))

    grid_spec = pltpu.PrefetchScalarGridSpec(
        num_scalar_prefetch=0,
        grid=(grid_b,),
        in_specs=[
            batch_spec((bt, n_pad, d)),        # input_embeds (padded)
            batch_spec((bt, 1, n_pad)),        # mask (padded)
            batch_spec((bt, S, d)),            # initial slots
            weight_spec((d, d)),               # W_q
            weight_spec((1, d)),               # b_q
            weight_spec((d, 2 * d)),           # W_kv (fused)
            weight_spec((1, 2 * d)),           # b_kv
            weight_spec((d, 3 * d)),           # GRU W_ih (fused)
            weight_spec((1, 3 * d)),           # GRU b_ih
            weight_spec((d, 3 * d)),           # GRU W_hh (fused)
            weight_spec((1, 3 * d)),           # GRU b_hh
            weight_spec((d, d)),               # MLP W1
            weight_spec((1, d)),               # MLP b1
            weight_spec((d, d)),               # MLP W2
            weight_spec((1, d)),               # MLP b2
            weight_spec((6, d)),               # layernorm params
        ],
        out_specs=pl.BlockSpec((bt, S, n_pad), lambda i: (i, 0, 0)),
    )

    inputs = (x, mask3, slots0, wq_t, bq_r, wkv, bkv, wih, bih, whh, bhh,
              w1_t, b1_r, w2_t, b2_r, ln)

    # Advisory cost estimate so XLA can schedule/overlap this small custom call.
    mm_flops_iter = (2 * S * d * d            # q projection
                     + 4 * S * n_pad * d      # dots + updates
                     + 2 * 2 * S * d * 3 * d  # GRU ih + hh
                     + 2 * 2 * S * d * d)     # MLP
    flops = b * (num_iters * mm_flops_iter + 2 * n_pad * d * 2 * d)
    transcendentals = b * num_iters * (S * n_pad + 3 * S * d + S + n_pad)
    bytes_accessed = (sum(int(a.size) * a.dtype.itemsize for a in inputs)
                      + b * S * n_pad * 4)
    cost = pl.CostEstimate(flops=flops, transcendentals=transcendentals,
                           bytes_accessed=bytes_accessed)

    attn = pl.pallas_call(
        kernel,
        out_shape=jax.ShapeDtypeStruct((b, S, n_pad), jnp.float32),
        grid_spec=grid_spec,
        compiler_params=pltpu.CompilerParams(
            dimension_semantics=("parallel",)),
        cost_estimate=cost,
    )(*inputs)

    return attn[:, :, :n]


# ----------------------------------------------------------------------------
# Demo
# ----------------------------------------------------------------------------
if __name__ == "__main__":
    B, N, D = 2, 8, 32          # batch, sequence length, feature dim
    NUM_SLOTS = 3               # output has 1 + NUM_SLOTS = 4 slots
    NUM_ITERS = 3

    key = jax.random.PRNGKey(0)
    k_param, k_x, k_noise = jax.random.split(key, 3)

    params = init_params(k_param, D)
    input_embeds = jax.random.normal(k_x, (B, N, D), jnp.float32)
    # mask: first 6 positions valid, last 2 padded
    mask = jnp.concatenate(
        [jnp.ones((B, 6), jnp.float32), jnp.zeros((B, 2), jnp.float32)], axis=1)

    attention = slot_attention_forward(params, input_embeds, mask,
                                       NUM_SLOTS, NUM_ITERS, k_noise)
    jax.block_until_ready(attention)
    assert attention.shape == (B, 1 + NUM_SLOTS, N)
    assert bool(jnp.all(jnp.isfinite(attention)))
    print("KERNEL_OK")
</pallas_src>

<mosaic_0001>
module attributes {stable_mosaic.version = 11 : i64} {
  func.func @_slot_attention_kernel(%arg0: i32, %arg1: memref<2x128x32xf32, #tpu.memory_space<vmem>>, %arg2: memref<2x1x128xf32, #tpu.memory_space<vmem>>, %arg3: memref<2x4x32xf32, #tpu.memory_space<vmem>>, %arg4: memref<32x32xbf16, #tpu.memory_space<vmem>>, %arg5: memref<1x32xf32, #tpu.memory_space<vmem>>, %arg6: memref<32x64xbf16, #tpu.memory_space<vmem>>, %arg7: memref<1x64xf32, #tpu.memory_space<vmem>>, %arg8: memref<32x96xbf16, #tpu.memory_space<vmem>>, %arg9: memref<1x96xf32, #tpu.memory_space<vmem>>, %arg10: memref<32x96xbf16, #tpu.memory_space<vmem>>, %arg11: memref<1x96xf32, #tpu.memory_space<vmem>>, %arg12: memref<32x32xbf16, #tpu.memory_space<vmem>>, %arg13: memref<1x32xf32, #tpu.memory_space<vmem>>, %arg14: memref<32x32xbf16, #tpu.memory_space<vmem>>, %arg15: memref<1x32xf32, #tpu.memory_space<vmem>>, %arg16: memref<6x32xf32, #tpu.memory_space<vmem>>, %arg17: memref<2x4x128xf32, #tpu.memory_space<vmem>>) attributes {dimension_semantics = [#tpu.dimension_semantics<parallel>], iteration_bounds = array<i64: 1>, scalar_prefetch = 0 : i64, scratch_operands = 0 : i64, tpu.core_type = #tpu.core_type<tc>, window_params = [{transform_indices = @transform_0, window_bounds = array<i64: 2, 128, 32>}, {transform_indices = @transform_1, window_bounds = array<i64: 2, 1, 128>}, {transform_indices = @transform_2, window_bounds = array<i64: 2, 4, 32>}, {pipeline_mode = #tpu.pipeline_mode<synchronous>, transform_indices = @transform_3, window_bounds = array<i64: 32, 32>}, {pipeline_mode = #tpu.pipeline_mode<synchronous>, transform_indices = @transform_4, window_bounds = array<i64: 1, 32>}, {pipeline_mode = #tpu.pipeline_mode<synchronous>, transform_indices = @transform_5, window_bounds = array<i64: 32, 64>}, {pipeline_mode = #tpu.pipeline_mode<synchronous>, transform_indices = @transform_6, window_bounds = array<i64: 1, 64>}, {pipeline_mode = #tpu.pipeline_mode<synchronous>, transform_indices = @transform_7, window_bounds = array<i64: 32, 96>}, {pipeline_mode = #tpu.pipeline_mode<synchronous>, transform_indices = @transform_8, window_bounds = array<i64: 1, 96>}, {pipeline_mode = #tpu.pipeline_mode<synchronous>, transform_indices = @transform_9, window_bounds = array<i64: 32, 96>}, {pipeline_mode = #tpu.pipeline_mode<synchronous>, transform_indices = @transform_10, window_bounds = array<i64: 1, 96>}, {pipeline_mode = #tpu.pipeline_mode<synchronous>, transform_indices = @transform_11, window_bounds = array<i64: 32, 32>}, {pipeline_mode = #tpu.pipeline_mode<synchronous>, transform_indices = @transform_12, window_bounds = array<i64: 1, 32>}, {pipeline_mode = #tpu.pipeline_mode<synchronous>, transform_indices = @transform_13, window_bounds = array<i64: 32, 32>}, {pipeline_mode = #tpu.pipeline_mode<synchronous>, transform_indices = @transform_14, window_bounds = array<i64: 1, 32>}, {pipeline_mode = #tpu.pipeline_mode<synchronous>, transform_indices = @transform_15, window_bounds = array<i64: 6, 32>}, {transform_indices = @transform_16, window_bounds = array<i64: 2, 4, 128>}]} {
    %c0 = arith.constant 0 : index
    %c0_0 = arith.constant 0 : index
    %c0_1 = arith.constant 0 : index
    %0 = vector.load %arg1[%c0, %c0_0, %c0_1] : memref<2x128x32xf32, #tpu.memory_space<vmem>>, vector<2x128x32xf32>
    %c0_2 = arith.constant 0 : index
    %c0_3 = arith.constant 0 : index
    %c0_4 = arith.constant 0 : index
    %1 = vector.load %arg2[%c0_2, %c0_3, %c0_4] : memref<2x1x128xf32, #tpu.memory_space<vmem>>, vector<2x1x128xf32>
    %c0_5 = arith.constant 0 : index
    %c0_6 = arith.constant 0 : index
    %c0_7 = arith.constant 0 : index
    %2 = vector.load %arg3[%c0_5, %c0_6, %c0_7] : memref<2x4x32xf32, #tpu.memory_space<vmem>>, vector<2x4x32xf32>
    %3 = vector.shape_cast %2 : vector<2x4x32xf32> to vector<8x32xf32>
    %c0_8 = arith.constant 0 : index
    %c0_9 = arith.constant 0 : index
    %4 = vector.load %arg16[%c0_8, %c0_9] : memref<6x32xf32, #tpu.memory_space<vmem>>, vector<6x32xf32>
    %5 = vector.shape_cast %0 : vector<2x128x32xf32> to vector<256x32xf32>
    %6 = vector.extract_strided_slice %4 {offsets = [0, 0], sizes = [1, 32], strides = [1, 1]} : vector<6x32xf32> to vector<1x32xf32>
    %7 = vector.extract_strided_slice %4 {offsets = [1, 0], sizes = [1, 32], strides = [1, 1]} : vector<6x32xf32> to vector<1x32xf32>
    %cst = arith.constant dense<0.000000e+00> : vector<256xf32>
    %8 = vector.multi_reduction <add>, %5, %cst [1] : vector<256x32xf32> to vector<256xf32>
    %9 = vector.shape_cast %8 : vector<256xf32> to vector<256x1xf32>
    %cst_10 = arith.constant 3.200000e+01 : f32
    %10 = vector.broadcast %cst_10 : f32 to vector<256x1xf32>
    %11 = arith.divf %9, %10 : vector<256x1xf32>
    %12 = vector.broadcast %11 : vector<256x1xf32> to vector<256x32xf32>
    %13 = arith.subf %5, %12 : vector<256x32xf32>
    %14 = arith.mulf %13, %13 : vector<256x32xf32>
    %cst_11 = arith.constant dense<0.000000e+00> : vector<256xf32>
    %15 = vector.multi_reduction <add>, %14, %cst_11 [1] : vector<256x32xf32> to vector<256xf32>
    %16 = vector.shape_cast %15 : vector<256xf32> to vector<256x1xf32>
    %cst_12 = arith.constant 3.200000e+01 : f32
    %17 = vector.broadcast %cst_12 : f32 to vector<256x1xf32>
    %18 = arith.divf %16, %17 : vector<256x1xf32>
    %19 = vector.broadcast %11 : vector<256x1xf32> to vector<256x32xf32>
    %20 = arith.subf %5, %19 : vector<256x32xf32>
    %cst_13 = arith.constant 9.99999974E-6 : f32
    %21 = vector.broadcast %cst_13 : f32 to vector<256x1xf32>
    %22 = arith.addf %18, %21 : vector<256x1xf32>
    %23 = math.rsqrt %22 : vector<256x1xf32>
    %24 = vector.broadcast %23 : vector<256x1xf32> to vector<256x32xf32>
    %25 = arith.mulf %20, %24 : vector<256x32xf32>
    %26 = vector.broadcast %6 : vector<1x32xf32> to vector<256x32xf32>
    %27 = arith.mulf %25, %26 : vector<256x32xf32>
    %28 = vector.broadcast %7 : vector<1x32xf32> to vector<256x32xf32>
    %29 = arith.addf %27, %28 : vector<256x32xf32>
    %30 = arith.truncf %29 : vector<256x32xf32> to vector<256x32xbf16>
    %c0_14 = arith.constant 0 : index
    %c0_15 = arith.constant 0 : index
    %31 = vector.load %arg6[%c0_14, %c0_15] : memref<32x64xbf16, #tpu.memory_space<vmem>>, vector<32x64xbf16>
    %cst_16 = arith.constant dense<0.000000e+00> : vector<256x64xf32>
    %32 = tpu.matmul %30, %31, %cst_16 {dimension_numbers = #tpu.dot_dimension_numbers<[1], [0], [0], [1], [0, 0, 1, 1], [], []>} : vector<256x32xbf16>, vector<32x64xbf16>, vector<256x64xf32> -> vector<256x64xf32>
    %c0_17 = arith.constant 0 : index
    %c0_18 = arith.constant 0 : index
    %33 = vector.load %arg7[%c0_17, %c0_18] : memref<1x64xf32, #tpu.memory_space<vmem>>, vector<1x64xf32>
    %34 = vector.broadcast %33 : vector<1x64xf32> to vector<256x64xf32>
    %35 = arith.addf %32, %34 : vector<256x64xf32>
    %36 = vector.extract_strided_slice %35 {offsets = [0, 0], sizes = [256, 32], strides = [1, 1]} : vector<256x64xf32> to vector<256x32xf32>
    %37 = vector.shape_cast %36 : vector<256x32xf32> to vector<2x128x32xf32>
    %38 = vector.extract_strided_slice %35 {offsets = [0, 32], sizes = [256, 32], strides = [1, 1]} : vector<256x64xf32> to vector<256x32xf32>
    %39 = vector.shape_cast %38 : vector<256x32xf32> to vector<2x128x32xf32>
    %40 = arith.truncf %39 : vector<2x128x32xf32> to vector<2x128x32xbf16>
    %41 = tpu.transpose %37, [0, 2, 1] : vector<2x128x32xf32> -> vector<2x32x128xf32>
    %42 = arith.truncf %41 : vector<2x32x128xf32> to vector<2x32x128xbf16>
    %c0_19 = arith.constant 0 : index
    %c0_20 = arith.constant 0 : index
    %43 = vector.load %arg4[%c0_19, %c0_20] : memref<32x32xbf16, #tpu.memory_space<vmem>>, vector<32x32xbf16>
    %c0_21 = arith.constant 0 : index
    %c0_22 = arith.constant 0 : index
    %44 = vector.load %arg5[%c0_21, %c0_22] : memref<1x32xf32, #tpu.memory_space<vmem>>, vector<1x32xf32>
    %c0_23 = arith.constant 0 : index
    %c0_24 = arith.constant 0 : index
    %45 = vector.load %arg8[%c0_23, %c0_24] : memref<32x96xbf16, #tpu.memory_space<vmem>>, vector<32x96xbf16>
    %c0_25 = arith.constant 0 : index
    %c0_26 = arith.constant 0 : index
    %46 = vector.load %arg9[%c0_25, %c0_26] : memref<1x96xf32, #tpu.memory_space<vmem>>, vector<1x96xf32>
    %c0_27 = arith.constant 0 : index
    %c0_28 = arith.constant 0 : index
    %47 = vector.load %arg10[%c0_27, %c0_28] : memref<32x96xbf16, #tpu.memory_space<vmem>>, vector<32x96xbf16>
    %c0_29 = arith.constant 0 : index
    %c0_30 = arith.constant 0 : index
    %48 = vector.load %arg11[%c0_29, %c0_30] : memref<1x96xf32, #tpu.memory_space<vmem>>, vector<1x96xf32>
    %c0_31 = arith.constant 0 : index
    %c0_32 = arith.constant 0 : index
    %49 = vector.load %arg12[%c0_31, %c0_32] : memref<32x32xbf16, #tpu.memory_space<vmem>>, vector<32x32xbf16>
    %c0_33 = arith.constant 0 : index
    %c0_34 = arith.constant 0 : index
    %50 = vector.load %arg13[%c0_33, %c0_34] : memref<1x32xf32, #tpu.memory_space<vmem>>, vector<1x32xf32>
    %c0_35 = arith.constant 0 : index
    %c0_36 = arith.constant 0 : index
    %51 = vector.load %arg14[%c0_35, %c0_36] : memref<32x32xbf16, #tpu.memory_space<vmem>>, vector<32x32xbf16>
    %c0_37 = arith.constant 0 : index
    %c0_38 = arith.constant 0 : index
    %52 = vector.load %arg15[%c0_37, %c0_38] : memref<1x32xf32, #tpu.memory_space<vmem>>, vector<1x32xf32>
    %cst_39 = arith.constant 0.000000e+00 : f32
    %53 = vector.broadcast %cst_39 : f32 to vector<2x4x128xf32>
    %c0_i32 = arith.constant 0 : i32
    %54 = vector.extract_strided_slice %4 {offsets = [2, 0], sizes = [1, 32], strides = [1, 1]} : vector<6x32xf32> to vector<1x32xf32>
    %55 = vector.extract_strided_slice %4 {offsets = [3, 0], sizes = [1, 32], strides = [1, 1]} : vector<6x32xf32> to vector<1x32xf32>
    %cst_40 = arith.constant dense<0.000000e+00> : vector<8xf32>
    %56 = vector.multi_reduction <add>, %3, %cst_40 [1] : vector<8x32xf32> to vector<8xf32>
    %57 = vector.shape_cast %56 : vector<8xf32> to vector<8x1xf32>
    %cst_41 = arith.constant 3.200000e+01 : f32
    %58 = vector.broadcast %cst_41 : f32 to vector<8x1xf32>
    %59 = arith.divf %57, %58 : vector<8x1xf32>
    %60 = vector.broadcast %59 : vector<8x1xf32> to vector<8x32xf32>
    %61 = arith.subf %3, %60 : vector<8x32xf32>
    %62 = arith.mulf %61, %61 : vector<8x32xf32>
    %cst_42 = arith.constant dense<0.000000e+00> : vector<8xf32>
    %63 = vector.multi_reduction <add>, %62, %cst_42 [1] : vector<8x32xf32> to vector<8xf32>
    %64 = vector.shape_cast %63 : vector<8xf32> to vector<8x1xf32>
    %cst_43 = arith.constant 3.200000e+01 : f32
    %65 = vector.broadcast %cst_43 : f32 to vector<8x1xf32>
    %66 = arith.divf %64, %65 : vector<8x1xf32>
    %67 = vector.broadcast %59 : vector<8x1xf32> to vector<8x32xf32>
    %68 = arith.subf %3, %67 : vector<8x32xf32>
    %cst_44 = arith.constant 9.99999974E-6 : f32
    %69 = vector.broadcast %cst_44 : f32 to vector<8x1xf32>
    %70 = arith.addf %66, %69 : vector<8x1xf32>
    %71 = math.rsqrt %70 : vector<8x1xf32>
    %72 = vector.broadcast %71 : vector<8x1xf32> to vector<8x32xf32>
    %73 = arith.mulf %68, %72 : vector<8x32xf32>
    %74 = vector.broadcast %54 : vector<1x32xf32> to vector<8x32xf32>
    %75 = arith.mulf %73, %74 : vector<8x32xf32>
    %76 = vector.broadcast %55 : vector<1x32xf32> to vector<8x32xf32>
    %77 = arith.addf %75, %76 : vector<8x32xf32>
    %78 = arith.truncf %77 : vector<8x32xf32> to vector<8x32xbf16>
    %cst_45 = arith.constant dense<0.000000e+00> : vector<8x32xf32>
    %79 = tpu.matmul %78, %43, %cst_45 {dimension_numbers = #tpu.dot_dimension_numbers<[1], [0], [0], [1], [0, 0, 1, 1], [], []>} : vector<8x32xbf16>, vector<32x32xbf16>, vector<8x32xf32> -> vector<8x32xf32>
    %80 = vector.broadcast %44 : vector<1x32xf32> to vector<8x32xf32>
    %81 = arith.addf %79, %80 : vector<8x32xf32>
    %82 = vector.shape_cast %81 : vector<8x32xf32> to vector<2x4x32xf32>
    %83 = arith.truncf %82 : vector<2x4x32xf32> to vector<2x4x32xbf16>
    "tpu.trace_start"() <{level = 10 : i32, message = "bsd,bdn->bsn"}> : () -> ()
    %cst_46 = arith.constant dense<0.000000e+00> : vector<2x4x128xf32>
    %84 = tpu.matmul %83, %42, %cst_46 {dimension_numbers = #tpu.dot_dimension_numbers<[2], [1], [1], [2], [0, 0, 0, 1, 1, 2], [0], [0]>} : vector<2x4x32xbf16>, vector<2x32x128xbf16>, vector<2x4x128xf32> -> vector<2x4x128xf32>
    "tpu.trace_stop"() : () -> ()
    %cst_47 = arith.constant 0.176776692 : f32
    %85 = vector.broadcast %cst_47 : f32 to vector<2x4x128xf32>
    %86 = arith.mulf %84, %85 : vector<2x4x128xf32>
    %cst_48 = arith.constant dense<0xFF800000> : vector<2x128xf32>
    %87 = vector.multi_reduction <maximumf>, %86, %cst_48 [1] : vector<2x4x128xf32> to vector<2x128xf32>
    %88 = vector.shape_cast %87 : vector<2x128xf32> to vector<2x1x128xf32>
    %89 = vector.broadcast %88 : vector<2x1x128xf32> to vector<2x4x128xf32>
    %90 = arith.subf %86, %89 : vector<2x4x128xf32>
    %91 = math.exp %90 : vector<2x4x128xf32>
    %cst_49 = arith.constant dense<0.000000e+00> : vector<2x128xf32>
    %92 = vector.multi_reduction <add>, %91, %cst_49 [1] : vector<2x4x128xf32> to vector<2x128xf32>
    %93 = vector.shape_cast %92 : vector<2x128xf32> to vector<2x1x128xf32>
    %94 = tpu.reciprocal %93 {approx = true} : vector<2x1x128xf32> -> vector<2x1x128xf32>
    %95 = vector.broadcast %94 : vector<2x1x128xf32> to vector<2x4x128xf32>
    %96 = arith.mulf %91, %95 : vector<2x4x128xf32>
    %cst_50 = arith.constant 9.99999993E-9 : f32
    %97 = vector.broadcast %cst_50 : f32 to vector<2x4x128xf32>
    %98 = arith.addf %96, %97 : vector<2x4x128xf32>
    %99 = vector.broadcast %1 : vector<2x1x128xf32> to vector<2x4x128xf32>
    %100 = arith.mulf %98, %99 : vector<2x4x128xf32>
    %cst_51 = arith.constant dense<0.000000e+00> : vector<2x4xf32>
    %101 = vector.multi_reduction <add>, %100, %cst_51 [2] : vector<2x4x128xf32> to vector<2x4xf32>
    %102 = vector.shape_cast %101 : vector<2x4xf32> to vector<2x4x1xf32>
    %103 = tpu.reciprocal %102 {approx = true} : vector<2x4x1xf32> -> vector<2x4x1xf32>
    %104 = vector.broadcast %103 : vector<2x4x1xf32> to vector<2x4x128xf32>
    %105 = arith.mulf %100, %104 : vector<2x4x128xf32>
    %106 = arith.truncf %105 : vector<2x4x128xf32> to vector<2x4x128xbf16>
    "tpu.trace_start"() <{level = 10 : i32, message = "bsn,bnd->bsd"}> : () -> ()
    %cst_52 = arith.constant dense<0.000000e+00> : vector<2x4x32xf32>
    %107 = tpu.matmul %106, %40, %cst_52 {dimension_numbers = #tpu.dot_dimension_numbers<[2], [1], [1], [2], [0, 0, 0, 1, 1, 2], [0], [0]>} : vector<2x4x128xbf16>, vector<2x128x32xbf16>, vector<2x4x32xf32> -> vector<2x4x32xf32>
    "tpu.trace_stop"() : () -> ()
    %108 = vector.shape_cast %107 : vector<2x4x32xf32> to vector<8x32xf32>
    %109 = arith.truncf %108 : vector<8x32xf32> to vector<8x32xbf16>
    %cst_53 = arith.constant dense<0.000000e+00> : vector<8x96xf32>
    %110 = tpu.matmul %109, %45, %cst_53 {dimension_numbers = #tpu.dot_dimension_numbers<[1], [0], [0], [1], [0, 0, 1, 1], [], []>} : vector<8x32xbf16>, vector<32x96xbf16>, vector<8x96xf32> -> vector<8x96xf32>
    %111 = vector.broadcast %46 : vector<1x96xf32> to vector<8x96xf32>
    %112 = arith.addf %110, %111 : vector<8x96xf32>
    %113 = arith.truncf %3 : vector<8x32xf32> to vector<8x32xbf16>
    %cst_54 = arith.constant dense<0.000000e+00> : vector<8x96xf32>
    %114 = tpu.matmul %113, %47, %cst_54 {dimension_numbers = #tpu.dot_dimension_numbers<[1], [0], [0], [1], [0, 0, 1, 1], [], []>} : vector<8x32xbf16>, vector<32x96xbf16>, vector<8x96xf32> -> vector<8x96xf32>
    %115 = vector.broadcast %48 : vector<1x96xf32> to vector<8x96xf32>
    %116 = arith.addf %114, %115 : vector<8x96xf32>
    %117 = vector.extract_strided_slice %112 {offsets = [0, 0], sizes = [8, 32], strides = [1, 1]} : vector<8x96xf32> to vector<8x32xf32>
    %118 = vector.extract_strided_slice %116 {offsets = [0, 0], sizes = [8, 32], strides = [1, 1]} : vector<8x96xf32> to vector<8x32xf32>
    %119 = arith.addf %117, %118 : vector<8x32xf32>
    %120 = arith.negf %119 : vector<8x32xf32>
    %121 = math.exp %120 : vector<8x32xf32>
    %cst_55 = arith.constant 1.000000e+00 : f32
    %122 = vector.broadcast %cst_55 : f32 to vector<8x32xf32>
    %123 = arith.addf %122, %121 : vector<8x32xf32>
    %124 = arith.divf %122, %123 : vector<8x32xf32>
    %125 = vector.extract_strided_slice %112 {offsets = [0, 32], sizes = [8, 32], strides = [1, 1]} : vector<8x96xf32> to vector<8x32xf32>
    %126 = vector.extract_strided_slice %116 {offsets = [0, 32], sizes = [8, 32], strides = [1, 1]} : vector<8x96xf32> to vector<8x32xf32>
    %127 = arith.addf %125, %126 : vector<8x32xf32>
    %128 = arith.negf %127 : vector<8x32xf32>
    %129 = math.exp %128 : vector<8x32xf32>
    %cst_56 = arith.constant 1.000000e+00 : f32
    %130 = vector.broadcast %cst_56 : f32 to vector<8x32xf32>
    %131 = arith.addf %130, %129 : vector<8x32xf32>
    %132 = arith.divf %130, %131 : vector<8x32xf32>
    %133 = vector.extract_strided_slice %112 {offsets = [0, 64], sizes = [8, 32], strides = [1, 1]} : vector<8x96xf32> to vector<8x32xf32>
    %134 = vector.extract_strided_slice %116 {offsets = [0, 64], sizes = [8, 32], strides = [1, 1]} : vector<8x96xf32> to vector<8x32xf32>
    %135 = arith.mulf %124, %134 : vector<8x32xf32>
    %136 = arith.addf %133, %135 : vector<8x32xf32>
    %137 = math.tanh %136 : vector<8x32xf32>
    %cst_57 = arith.constant 1.000000e+00 : f32
    %138 = vector.broadcast %cst_57 : f32 to vector<8x32xf32>
    %139 = arith.subf %138, %132 : vector<8x32xf32>
    %140 = arith.mulf %139, %137 : vector<8x32xf32>
    %141 = arith.mulf %132, %3 : vector<8x32xf32>
    %142 = arith.addf %140, %141 : vector<8x32xf32>
    %143 = vector.extract_strided_slice %4 {offsets = [4, 0], sizes = [1, 32], strides = [1, 1]} : vector<6x32xf32> to vector<1x32xf32>
    %144 = vector.extract_strided_slice %4 {offsets = [5, 0], sizes = [1, 32], strides = [1, 1]} : vector<6x32xf32> to vector<1x32xf32>
    %cst_58 = arith.constant dense<0.000000e+00> : vector<8xf32>
    %145 = vector.multi_reduction <add>, %142, %cst_58 [1] : vector<8x32xf32> to vector<8xf32>
    %146 = vector.shape_cast %145 : vector<8xf32> to vector<8x1xf32>
    %cst_59 = arith.constant 3.200000e+01 : f32
    %147 = vector.broadcast %cst_59 : f32 to vector<8x1xf32>
    %148 = arith.divf %146, %147 : vector<8x1xf32>
    %149 = vector.broadcast %148 : vector<8x1xf32> to vector<8x32xf32>
    %150 = arith.subf %142, %149 : vector<8x32xf32>
    %151 = arith.mulf %150, %150 : vector<8x32xf32>
    %cst_60 = arith.constant dense<0.000000e+00> : vector<8xf32>
    %152 = vector.multi_reduction <add>, %151, %cst_60 [1] : vector<8x32xf32> to vector<8xf32>
    %153 = vector.shape_cast %152 : vector<8xf32> to vector<8x1xf32>
    %cst_61 = arith.constant 3.200000e+01 : f32
    %154 = vector.broadcast %cst_61 : f32 to vector<8x1xf32>
    %155 = arith.divf %153, %154 : vector<8x1xf32>
    %156 = vector.broadcast %148 : vector<8x1xf32> to vector<8x32xf32>
    %157 = arith.subf %142, %156 : vector<8x32xf32>
    %cst_62 = arith.constant 9.99999974E-6 : f32
    %158 = vector.broadcast %cst_62 : f32 to vector<8x1xf32>
    %159 = arith.addf %155, %158 : vector<8x1xf32>
    %160 = math.rsqrt %159 : vector<8x1xf32>
    %161 = vector.broadcast %160 : vector<8x1xf32> to vector<8x32xf32>
    %162 = arith.mulf %157, %161 : vector<8x32xf32>
    %163 = vector.broadcast %143 : vector<1x32xf32> to vector<8x32xf32>
    %164 = arith.mulf %162, %163 : vector<8x32xf32>
    %165 = vector.broadcast %144 : vector<1x32xf32> to vector<8x32xf32>
    %166 = arith.addf %164, %165 : vector<8x32xf32>
    %167 = arith.truncf %166 : vector<8x32xf32> to vector<8x32xbf16>
    %cst_63 = arith.constant dense<0.000000e+00> : vector<8x32xf32>
    %168 = tpu.matmul %167, %49, %cst_63 {dimension_numbers = #tpu.dot_dimension_numbers<[1], [0], [0], [1], [0, 0, 1, 1], [], []>} : vector<8x32xbf16>, vector<32x32xbf16>, vector<8x32xf32> -> vector<8x32xf32>
    %169 = vector.broadcast %50 : vector<1x32xf32> to vector<8x32xf32>
    %170 = arith.addf %168, %169 : vector<8x32xf32>
    %cst_64 = arith.constant 0.000000e+00 : f32
    %171 = vector.broadcast %cst_64 : f32 to vector<8x32xf32>
    %172 = arith.maximumf %170, %171 : vector<8x32xf32>
    %173 = arith.truncf %172 : vector<8x32xf32> to vector<8x32xbf16>
    %cst_65 = arith.constant dense<0.000000e+00> : vector<8x32xf32>
    %174 = tpu.matmul %173, %51, %cst_65 {dimension_numbers = #tpu.dot_dimension_numbers<[1], [0], [0], [1], [0, 0, 1, 1], [], []>} : vector<8x32xbf16>, vector<32x32xbf16>, vector<8x32xf32> -> vector<8x32xf32>
    %175 = arith.addf %142, %174 : vector<8x32xf32>
    %176 = vector.broadcast %52 : vector<1x32xf32> to vector<8x32xf32>
    %177 = arith.addf %175, %176 : vector<8x32xf32>
    %c1_i32 = arith.constant 1 : i32
    %178 = vector.extract_strided_slice %4 {offsets = [2, 0], sizes = [1, 32], strides = [1, 1]} : vector<6x32xf32> to vector<1x32xf32>
    %179 = vector.extract_strided_slice %4 {offsets = [3, 0], sizes = [1, 32], strides = [1, 1]} : vector<6x32xf32> to vector<1x32xf32>
    %cst_66 = arith.constant dense<0.000000e+00> : vector<8xf32>
    %180 = vector.multi_reduction <add>, %177, %cst_66 [1] : vector<8x32xf32> to vector<8xf32>
    %181 = vector.shape_cast %180 : vector<8xf32> to vector<8x1xf32>
    %cst_67 = arith.constant 3.200000e+01 : f32
    %182 = vector.broadcast %cst_67 : f32 to vector<8x1xf32>
    %183 = arith.divf %181, %182 : vector<8x1xf32>
    %184 = vector.broadcast %183 : vector<8x1xf32> to vector<8x32xf32>
    %185 = arith.subf %177, %184 : vector<8x32xf32>
    %186 = arith.mulf %185, %185 : vector<8x32xf32>
    %cst_68 = arith.constant dense<0.000000e+00> : vector<8xf32>
    %187 = vector.multi_reduction <add>, %186, %cst_68 [1] : vector<8x32xf32> to vector<8xf32>
    %188 = vector.shape_cast %187 : vector<8xf32> to vector<8x1xf32>
    %cst_69 = arith.constant 3.200000e+01 : f32
    %189 = vector.broadcast %cst_69 : f32 to vector<8x1xf32>
    %190 = arith.divf %188, %189 : vector<8x1xf32>
    %191 = vector.broadcast %183 : vector<8x1xf32> to vector<8x32xf32>
    %192 = arith.subf %177, %191 : vector<8x32xf32>
    %cst_70 = arith.constant 9.99999974E-6 : f32
    %193 = vector.broadcast %cst_70 : f32 to vector<8x1xf32>
    %194 = arith.addf %190, %193 : vector<8x1xf32>
    %195 = math.rsqrt %194 : vector<8x1xf32>
    %196 = vector.broadcast %195 : vector<8x1xf32> to vector<8x32xf32>
    %197 = arith.mulf %192, %196 : vector<8x32xf32>
    %198 = vector.broadcast %178 : vector<1x32xf32> to vector<8x32xf32>
    %199 = arith.mulf %197, %198 : vector<8x32xf32>
    %200 = vector.broadcast %179 : vector<1x32xf32> to vector<8x32xf32>
    %201 = arith.addf %199, %200 : vector<8x32xf32>
    %202 = arith.truncf %201 : vector<8x32xf32> to vector<8x32xbf16>
    %cst_71 = arith.constant dense<0.000000e+00> : vector<8x32xf32>
    %203 = tpu.matmul %202, %43, %cst_71 {dimension_numbers = #tpu.dot_dimension_numbers<[1], [0], [0], [1], [0, 0, 1, 1], [], []>} : vector<8x32xbf16>, vector<32x32xbf16>, vector<8x32xf32> -> vector<8x32xf32>
    %204 = vector.broadcast %44 : vector<1x32xf32> to vector<8x32xf32>
    %205 = arith.addf %203, %204 : vector<8x32xf32>
    %206 = vector.shape_cast %205 : vector<8x32xf32> to vector<2x4x32xf32>
    %207 = arith.truncf %206 : vector<2x4x32xf32> to vector<2x4x32xbf16>
    "tpu.trace_start"() <{level = 10 : i32, message = "bsd,bdn->bsn"}> : () -> ()
    %cst_72 = arith.constant dense<0.000000e+00> : vector<2x4x128xf32>
    %208 = tpu.matmul %207, %42, %cst_72 {dimension_numbers = #tpu.dot_dimension_numbers<[2], [1], [1], [2], [0, 0, 0, 1, 1, 2], [0], [0]>} : vector<2x4x32xbf16>, vector<2x32x128xbf16>, vector<2x4x128xf32> -> vector<2x4x128xf32>
    "tpu.trace_stop"() : () -> ()
    %cst_73 = arith.constant 0.176776692 : f32
    %209 = vector.broadcast %cst_73 : f32 to vector<2x4x128xf32>
    %210 = arith.mulf %208, %209 : vector<2x4x128xf32>
    %cst_74 = arith.constant dense<0xFF800000> : vector<2x128xf32>
    %211 = vector.multi_reduction <maximumf>, %210, %cst_74 [1] : vector<2x4x128xf32> to vector<2x128xf32>
    %212 = vector.shape_cast %211 : vector<2x128xf32> to vector<2x1x128xf32>
    %213 = vector.broadcast %212 : vector<2x1x128xf32> to vector<2x4x128xf32>
    %214 = arith.subf %210, %213 : vector<2x4x128xf32>
    %215 = math.exp %214 : vector<2x4x128xf32>
    %cst_75 = arith.constant dense<0.000000e+00> : vector<2x128xf32>
    %216 = vector.multi_reduction <add>, %215, %cst_75 [1] : vector<2x4x128xf32> to vector<2x128xf32>
    %217 = vector.shape_cast %216 : vector<2x128xf32> to vector<2x1x128xf32>
    %218 = tpu.reciprocal %217 {approx = true} : vector<2x1x128xf32> -> vector<2x1x128xf32>
    %219 = vector.broadcast %218 : vector<2x1x128xf32> to vector<2x4x128xf32>
    %220 = arith.mulf %215, %219 : vector<2x4x128xf32>
    %cst_76 = arith.constant 9.99999993E-9 : f32
    %221 = vector.broadcast %cst_76 : f32 to vector<2x4x128xf32>
    %222 = arith.addf %220, %221 : vector<2x4x128xf32>
    %223 = vector.broadcast %1 : vector<2x1x128xf32> to vector<2x4x128xf32>
    %224 = arith.mulf %222, %223 : vector<2x4x128xf32>
    %cst_77 = arith.constant dense<0.000000e+00> : vector<2x4xf32>
    %225 = vector.multi_reduction <add>, %224, %cst_77 [2] : vector<2x4x128xf32> to vector<2x4xf32>
    %226 = vector.shape_cast %225 : vector<2x4xf32> to vector<2x4x1xf32>
    %227 = tpu.reciprocal %226 {approx = true} : vector<2x4x1xf32> -> vector<2x4x1xf32>
    %228 = vector.broadcast %227 : vector<2x4x1xf32> to vector<2x4x128xf32>
    %229 = arith.mulf %224, %228 : vector<2x4x128xf32>
    %230 = arith.truncf %229 : vector<2x4x128xf32> to vector<2x4x128xbf16>
    "tpu.trace_start"() <{level = 10 : i32, message = "bsn,bnd->bsd"}> : () -> ()
    %cst_78 = arith.constant dense<0.000000e+00> : vector<2x4x32xf32>
    %231 = tpu.matmul %230, %40, %cst_78 {dimension_numbers = #tpu.dot_dimension_numbers<[2], [1], [1], [2], [0, 0, 0, 1, 1, 2], [0], [0]>} : vector<2x4x128xbf16>, vector<2x128x32xbf16>, vector<2x4x32xf32> -> vector<2x4x32xf32>
    "tpu.trace_stop"() : () -> ()
    %232 = vector.shape_cast %231 : vector<2x4x32xf32> to vector<8x32xf32>
    %233 = arith.truncf %232 : vector<8x32xf32> to vector<8x32xbf16>
    %cst_79 = arith.constant dense<0.000000e+00> : vector<8x96xf32>
    %234 = tpu.matmul %233, %45, %cst_79 {dimension_numbers = #tpu.dot_dimension_numbers<[1], [0], [0], [1], [0, 0, 1, 1], [], []>} : vector<8x32xbf16>, vector<32x96xbf16>, vector<8x96xf32> -> vector<8x96xf32>
    %235 = vector.broadcast %46 : vector<1x96xf32> to vector<8x96xf32>
    %236 = arith.addf %234, %235 : vector<8x96xf32>
    %237 = arith.truncf %177 : vector<8x32xf32> to vector<8x32xbf16>
    %cst_80 = arith.constant dense<0.000000e+00> : vector<8x96xf32>
    %238 = tpu.matmul %237, %47, %cst_80 {dimension_numbers = #tpu.dot_dimension_numbers<[1], [0], [0], [1], [0, 0, 1, 1], [], []>} : vector<8x32xbf16>, vector<32x96xbf16>, vector<8x96xf32> -> vector<8x96xf32>
    %239 = vector.broadcast %48 : vector<1x96xf32> to vector<8x96xf32>
    %240 = arith.addf %238, %239 : vector<8x96xf32>
    %241 = vector.extract_strided_slice %236 {offsets = [0, 0], sizes = [8, 32], strides = [1, 1]} : vector<8x96xf32> to vector<8x32xf32>
    %242 = vector.extract_strided_slice %240 {offsets = [0, 0], sizes = [8, 32], strides = [1, 1]} : vector<8x96xf32> to vector<8x32xf32>
    %243 = arith.addf %241, %242 : vector<8x32xf32>
    %244 = arith.negf %243 : vector<8x32xf32>
    %245 = math.exp %244 : vector<8x32xf32>
    %cst_81 = arith.constant 1.000000e+00 : f32
    %246 = vector.broadcast %cst_81 : f32 to vector<8x32xf32>
    %247 = arith.addf %246, %245 : vector<8x32xf32>
    %248 = arith.divf %246, %247 : vector<8x32xf32>
    %249 = vector.extract_strided_slice %236 {offsets = [0, 32], sizes = [8, 32], strides = [1, 1]} : vector<8x96xf32> to vector<8x32xf32>
    %250 = vector.extract_strided_slice %240 {offsets = [0, 32], sizes = [8, 32], strides = [1, 1]} : vector<8x96xf32> to vector<8x32xf32>
    %251 = arith.addf %249, %250 : vector<8x32xf32>
    %252 = arith.negf %251 : vector<8x32xf32>
    %253 = math.exp %252 : vector<8x32xf32>
    %cst_82 = arith.constant 1.000000e+00 : f32
    %254 = vector.broadcast %cst_82 : f32 to vector<8x32xf32>
    %255 = arith.addf %254, %253 : vector<8x32xf32>
    %256 = arith.divf %254, %255 : vector<8x32xf32>
    %257 = vector.extract_strided_slice %236 {offsets = [0, 64], sizes = [8, 32], strides = [1, 1]} : vector<8x96xf32> to vector<8x32xf32>
    %258 = vector.extract_strided_slice %240 {offsets = [0, 64], sizes = [8, 32], strides = [1, 1]} : vector<8x96xf32> to vector<8x32xf32>
    %259 = arith.mulf %248, %258 : vector<8x32xf32>
    %260 = arith.addf %257, %259 : vector<8x32xf32>
    %261 = math.tanh %260 : vector<8x32xf32>
    %cst_83 = arith.constant 1.000000e+00 : f32
    %262 = vector.broadcast %cst_83 : f32 to vector<8x32xf32>
    %263 = arith.subf %262, %256 : vector<8x32xf32>
    %264 = arith.mulf %263, %261 : vector<8x32xf32>
    %265 = arith.mulf %256, %177 : vector<8x32xf32>
    %266 = arith.addf %264, %265 : vector<8x32xf32>
    %267 = vector.extract_strided_slice %4 {offsets = [4, 0], sizes = [1, 32], strides = [1, 1]} : vector<6x32xf32> to vector<1x32xf32>
    %268 = vector.extract_strided_slice %4 {offsets = [5, 0], sizes = [1, 32], strides = [1, 1]} : vector<6x32xf32> to vector<1x32xf32>
    %cst_84 = arith.constant dense<0.000000e+00> : vector<8xf32>
    %269 = vector.multi_reduction <add>, %266, %cst_84 [1] : vector<8x32xf32> to vector<8xf32>
    %270 = vector.shape_cast %269 : vector<8xf32> to vector<8x1xf32>
    %cst_85 = arith.constant 3.200000e+01 : f32
    %271 = vector.broadcast %cst_85 : f32 to vector<8x1xf32>
    %272 = arith.divf %270, %271 : vector<8x1xf32>
    %273 = vector.broadcast %272 : vector<8x1xf32> to vector<8x32xf32>
    %274 = arith.subf %266, %273 : vector<8x32xf32>
    %275 = arith.mulf %274, %274 : vector<8x32xf32>
    %cst_86 = arith.constant dense<0.000000e+00> : vector<8xf32>
    %276 = vector.multi_reduction <add>, %275, %cst_86 [1] : vector<8x32xf32> to vector<8xf32>
    %277 = vector.shape_cast %276 : vector<8xf32> to vector<8x1xf32>
    %cst_87 = arith.constant 3.200000e+01 : f32
    %278 = vector.broadcast %cst_87 : f32 to vector<8x1xf32>
    %279 = arith.divf %277, %278 : vector<8x1xf32>
    %280 = vector.broadcast %272 : vector<8x1xf32> to vector<8x32xf32>
    %281 = arith.subf %266, %280 : vector<8x32xf32>
    %cst_88 = arith.constant 9.99999974E-6 : f32
    %282 = vector.broadcast %cst_88 : f32 to vector<8x1xf32>
    %283 = arith.addf %279, %282 : vector<8x1xf32>
    %284 = math.rsqrt %283 : vector<8x1xf32>
    %285 = vector.broadcast %284 : vector<8x1xf32> to vector<8x32xf32>
    %286 = arith.mulf %281, %285 : vector<8x32xf32>
    %287 = vector.broadcast %267 : vector<1x32xf32> to vector<8x32xf32>
    %288 = arith.mulf %286, %287 : vector<8x32xf32>
    %289 = vector.broadcast %268 : vector<1x32xf32> to vector<8x32xf32>
    %290 = arith.addf %288, %289 : vector<8x32xf32>
    %291 = arith.truncf %290 : vector<8x32xf32> to vector<8x32xbf16>
    %cst_89 = arith.constant dense<0.000000e+00> : vector<8x32xf32>
    %292 = tpu.matmul %291, %49, %cst_89 {dimension_numbers = #tpu.dot_dimension_numbers<[1], [0], [0], [1], [0, 0, 1, 1], [], []>} : vector<8x32xbf16>, vector<32x32xbf16>, vector<8x32xf32> -> vector<8x32xf32>
    %293 = vector.broadcast %50 : vector<1x32xf32> to vector<8x32xf32>
    %294 = arith.addf %292, %293 : vector<8x32xf32>
    %cst_90 = arith.constant 0.000000e+00 : f32
    %295 = vector.broadcast %cst_90 : f32 to vector<8x32xf32>
    %296 = arith.maximumf %294, %295 : vector<8x32xf32>
    %297 = arith.truncf %296 : vector<8x32xf32> to vector<8x32xbf16>
    %cst_91 = arith.constant dense<0.000000e+00> : vector<8x32xf32>
    %298 = tpu.matmul %297, %51, %cst_91 {dimension_numbers = #tpu.dot_dimension_numbers<[1], [0], [0], [1], [0, 0, 1, 1], [], []>} : vector<8x32xbf16>, vector<32x32xbf16>, vector<8x32xf32> -> vector<8x32xf32>
    %299 = arith.addf %266, %298 : vector<8x32xf32>
    %300 = vector.broadcast %52 : vector<1x32xf32> to vector<8x32xf32>
    %301 = arith.addf %299, %300 : vector<8x32xf32>
    %c2_i32 = arith.constant 2 : i32
    %302 = vector.extract_strided_slice %4 {offsets = [2, 0], sizes = [1, 32], strides = [1, 1]} : vector<6x32xf32> to vector<1x32xf32>
    %303 = vector.extract_strided_slice %4 {offsets = [3, 0], sizes = [1, 32], strides = [1, 1]} : vector<6x32xf32> to vector<1x32xf32>
    %cst_92 = arith.constant dense<0.000000e+00> : vector<8xf32>
    %304 = vector.multi_reduction <add>, %301, %cst_92 [1] : vector<8x32xf32> to vector<8xf32>
    %305 = vector.shape_cast %304 : vector<8xf32> to vector<8x1xf32>
    %cst_93 = arith.constant 3.200000e+01 : f32
    %306 = vector.broadcast %cst_93 : f32 to vector<8x1xf32>
    %307 = arith.divf %305, %306 : vector<8x1xf32>
    %308 = vector.broadcast %307 : vector<8x1xf32> to vector<8x32xf32>
    %309 = arith.subf %301, %308 : vector<8x32xf32>
    %310 = arith.mulf %309, %309 : vector<8x32xf32>
    %cst_94 = arith.constant dense<0.000000e+00> : vector<8xf32>
    %311 = vector.multi_reduction <add>, %310, %cst_94 [1] : vector<8x32xf32> to vector<8xf32>
    %312 = vector.shape_cast %311 : vector<8xf32> to vector<8x1xf32>
    %cst_95 = arith.constant 3.200000e+01 : f32
    %313 = vector.broadcast %cst_95 : f32 to vector<8x1xf32>
    %314 = arith.divf %312, %313 : vector<8x1xf32>
    %315 = vector.broadcast %307 : vector<8x1xf32> to vector<8x32xf32>
    %316 = arith.subf %301, %315 : vector<8x32xf32>
    %cst_96 = arith.constant 9.99999974E-6 : f32
    %317 = vector.broadcast %cst_96 : f32 to vector<8x1xf32>
    %318 = arith.addf %314, %317 : vector<8x1xf32>
    %319 = math.rsqrt %318 : vector<8x1xf32>
    %320 = vector.broadcast %319 : vector<8x1xf32> to vector<8x32xf32>
    %321 = arith.mulf %316, %320 : vector<8x32xf32>
    %322 = vector.broadcast %302 : vector<1x32xf32> to vector<8x32xf32>
    %323 = arith.mulf %321, %322 : vector<8x32xf32>
    %324 = vector.broadcast %303 : vector<1x32xf32> to vector<8x32xf32>
    %325 = arith.addf %323, %324 : vector<8x32xf32>
    %326 = arith.truncf %325 : vector<8x32xf32> to vector<8x32xbf16>
    %cst_97 = arith.constant dense<0.000000e+00> : vector<8x32xf32>
    %327 = tpu.matmul %326, %43, %cst_97 {dimension_numbers = #tpu.dot_dimension_numbers<[1], [0], [0], [1], [0, 0, 1, 1], [], []>} : vector<8x32xbf16>, vector<32x32xbf16>, vector<8x32xf32> -> vector<8x32xf32>
    %328 = vector.broadcast %44 : vector<1x32xf32> to vector<8x32xf32>
    %329 = arith.addf %327, %328 : vector<8x32xf32>
    %330 = vector.shape_cast %329 : vector<8x32xf32> to vector<2x4x32xf32>
    %331 = arith.truncf %330 : vector<2x4x32xf32> to vector<2x4x32xbf16>
    "tpu.trace_start"() <{level = 10 : i32, message = "bsd,bdn->bsn"}> : () -> ()
    %cst_98 = arith.constant dense<0.000000e+00> : vector<2x4x128xf32>
    %332 = tpu.matmul %331, %42, %cst_98 {dimension_numbers = #tpu.dot_dimension_numbers<[2], [1], [1], [2], [0, 0, 0, 1, 1, 2], [0], [0]>} : vector<2x4x32xbf16>, vector<2x32x128xbf16>, vector<2x4x128xf32> -> vector<2x4x128xf32>
    "tpu.trace_stop"() : () -> ()
    %cst_99 = arith.constant 0.176776692 : f32
    %333 = vector.broadcast %cst_99 : f32 to vector<2x4x128xf32>
    %334 = arith.mulf %332, %333 : vector<2x4x128xf32>
    %cst_100 = arith.constant dense<0xFF800000> : vector<2x128xf32>
    %335 = vector.multi_reduction <maximumf>, %334, %cst_100 [1] : vector<2x4x128xf32> to vector<2x128xf32>
    %336 = vector.shape_cast %335 : vector<2x128xf32> to vector<2x1x128xf32>
    %337 = vector.broadcast %336 : vector<2x1x128xf32> to vector<2x4x128xf32>
    %338 = arith.subf %334, %337 : vector<2x4x128xf32>
    %339 = math.exp %338 : vector<2x4x128xf32>
    %cst_101 = arith.constant dense<0.000000e+00> : vector<2x128xf32>
    %340 = vector.multi_reduction <add>, %339, %cst_101 [1] : vector<2x4x128xf32> to vector<2x128xf32>
    %341 = vector.shape_cast %340 : vector<2x128xf32> to vector<2x1x128xf32>
    %342 = tpu.reciprocal %341 {approx = true} : vector<2x1x128xf32> -> vector<2x1x128xf32>
    %343 = vector.broadcast %342 : vector<2x1x128xf32> to vector<2x4x128xf32>
    %344 = arith.mulf %339, %343 : vector<2x4x128xf32>
    %cst_102 = arith.constant 9.99999993E-9 : f32
    %345 = vector.broadcast %cst_102 : f32 to vector<2x4x128xf32>
    %346 = arith.addf %344, %345 : vector<2x4x128xf32>
    %347 = vector.broadcast %1 : vector<2x1x128xf32> to vector<2x4x128xf32>
    %348 = arith.mulf %346, %347 : vector<2x4x128xf32>
    %cst_103 = arith.constant dense<0.000000e+00> : vector<2x4xf32>
    %349 = vector.multi_reduction <add>, %348, %cst_103 [2] : vector<2x4x128xf32> to vector<2x4xf32>
    %350 = vector.shape_cast %349 : vector<2x4xf32> to vector<2x4x1xf32>
    %351 = tpu.reciprocal %350 {approx = true} : vector<2x4x1xf32> -> vector<2x4x1xf32>
    %352 = vector.broadcast %351 : vector<2x4x1xf32> to vector<2x4x128xf32>
    %353 = arith.mulf %348, %352 : vector<2x4x128xf32>
    %354 = arith.truncf %353 : vector<2x4x128xf32> to vector<2x4x128xbf16>
    "tpu.trace_start"() <{level = 10 : i32, message = "bsn,bnd->bsd"}> : () -> ()
    %cst_104 = arith.constant dense<0.000000e+00> : vector<2x4x32xf32>
    %355 = tpu.matmul %354, %40, %cst_104 {dimension_numbers = #tpu.dot_dimension_numbers<[2], [1], [1], [2], [0, 0, 0, 1, 1, 2], [0], [0]>} : vector<2x4x128xbf16>, vector<2x128x32xbf16>, vector<2x4x32xf32> -> vector<2x4x32xf32>
    "tpu.trace_stop"() : () -> ()
    %356 = vector.shape_cast %355 : vector<2x4x32xf32> to vector<8x32xf32>
    %357 = arith.truncf %356 : vector<8x32xf32> to vector<8x32xbf16>
    %cst_105 = arith.constant dense<0.000000e+00> : vector<8x96xf32>
    %358 = tpu.matmul %357, %45, %cst_105 {dimension_numbers = #tpu.dot_dimension_numbers<[1], [0], [0], [1], [0, 0, 1, 1], [], []>} : vector<8x32xbf16>, vector<32x96xbf16>, vector<8x96xf32> -> vector<8x96xf32>
    %359 = vector.broadcast %46 : vector<1x96xf32> to vector<8x96xf32>
    %360 = arith.addf %358, %359 : vector<8x96xf32>
    %361 = arith.truncf %301 : vector<8x32xf32> to vector<8x32xbf16>
    %cst_106 = arith.constant dense<0.000000e+00> : vector<8x96xf32>
    %362 = tpu.matmul %361, %47, %cst_106 {dimension_numbers = #tpu.dot_dimension_numbers<[1], [0], [0], [1], [0, 0, 1, 1], [], []>} : vector<8x32xbf16>, vector<32x96xbf16>, vector<8x96xf32> -> vector<8x96xf32>
    %363 = vector.broadcast %48 : vector<1x96xf32> to vector<8x96xf32>
    %364 = arith.addf %362, %363 : vector<8x96xf32>
    %365 = vector.extract_strided_slice %360 {offsets = [0, 0], sizes = [8, 32], strides = [1, 1]} : vector<8x96xf32> to vector<8x32xf32>
    %366 = vector.extract_strided_slice %364 {offsets = [0, 0], sizes = [8, 32], strides = [1, 1]} : vector<8x96xf32> to vector<8x32xf32>
    %367 = arith.addf %365, %366 : vector<8x32xf32>
    %368 = arith.negf %367 : vector<8x32xf32>
    %369 = math.exp %368 : vector<8x32xf32>
    %cst_107 = arith.constant 1.000000e+00 : f32
    %370 = vector.broadcast %cst_107 : f32 to vector<8x32xf32>
    %371 = arith.addf %370, %369 : vector<8x32xf32>
    %372 = arith.divf %370, %371 : vector<8x32xf32>
    %373 = vector.extract_strided_slice %360 {offsets = [0, 32], sizes = [8, 32], strides = [1, 1]} : vector<8x96xf32> to vector<8x32xf32>
    %374 = vector.extract_strided_slice %364 {offsets = [0, 32], sizes = [8, 32], strides = [1, 1]} : vector<8x96xf32> to vector<8x32xf32>
    %375 = arith.addf %373, %374 : vector<8x32xf32>
    %376 = arith.negf %375 : vector<8x32xf32>
    %377 = math.exp %376 : vector<8x32xf32>
    %cst_108 = arith.constant 1.000000e+00 : f32
    %378 = vector.broadcast %cst_108 : f32 to vector<8x32xf32>
    %379 = arith.addf %378, %377 : vector<8x32xf32>
    %380 = arith.divf %378, %379 : vector<8x32xf32>
    %381 = vector.extract_strided_slice %360 {offsets = [0, 64], sizes = [8, 32], strides = [1, 1]} : vector<8x96xf32> to vector<8x32xf32>
    %382 = vector.extract_strided_slice %364 {offsets = [0, 64], sizes = [8, 32], strides = [1, 1]} : vector<8x96xf32> to vector<8x32xf32>
    %383 = arith.mulf %372, %382 : vector<8x32xf32>
    %384 = arith.addf %381, %383 : vector<8x32xf32>
    %385 = math.tanh %384 : vector<8x32xf32>
    %cst_109 = arith.constant 1.000000e+00 : f32
    %386 = vector.broadcast %cst_109 : f32 to vector<8x32xf32>
    %387 = arith.subf %386, %380 : vector<8x32xf32>
    %388 = arith.mulf %387, %385 : vector<8x32xf32>
    %389 = arith.mulf %380, %301 : vector<8x32xf32>
    %390 = arith.addf %388, %389 : vector<8x32xf32>
    %391 = vector.extract_strided_slice %4 {offsets = [4, 0], sizes = [1, 32], strides = [1, 1]} : vector<6x32xf32> to vector<1x32xf32>
    %392 = vector.extract_strided_slice %4 {offsets = [5, 0], sizes = [1, 32], strides = [1, 1]} : vector<6x32xf32> to vector<1x32xf32>
    %cst_110 = arith.constant dense<0.000000e+00> : vector<8xf32>
    %393 = vector.multi_reduction <add>, %390, %cst_110 [1] : vector<8x32xf32> to vector<8xf32>
    %394 = vector.shape_cast %393 : vector<8xf32> to vector<8x1xf32>
    %cst_111 = arith.constant 3.200000e+01 : f32
    %395 = vector.broadcast %cst_111 : f32 to vector<8x1xf32>
    %396 = arith.divf %394, %395 : vector<8x1xf32>
    %397 = vector.broadcast %396 : vector<8x1xf32> to vector<8x32xf32>
    %398 = arith.subf %390, %397 : vector<8x32xf32>
    %399 = arith.mulf %398, %398 : vector<8x32xf32>
    %cst_112 = arith.constant dense<0.000000e+00> : vector<8xf32>
    %400 = vector.multi_reduction <add>, %399, %cst_112 [1] : vector<8x32xf32> to vector<8xf32>
    %401 = vector.shape_cast %400 : vector<8xf32> to vector<8x1xf32>
    %cst_113 = arith.constant 3.200000e+01 : f32
    %402 = vector.broadcast %cst_113 : f32 to vector<8x1xf32>
    %403 = arith.divf %401, %402 : vector<8x1xf32>
    %404 = vector.broadcast %396 : vector<8x1xf32> to vector<8x32xf32>
    %405 = arith.subf %390, %404 : vector<8x32xf32>
    %cst_114 = arith.constant 9.99999974E-6 : f32
    %406 = vector.broadcast %cst_114 : f32 to vector<8x1xf32>
    %407 = arith.addf %403, %406 : vector<8x1xf32>
    %408 = math.rsqrt %407 : vector<8x1xf32>
    %409 = vector.broadcast %408 : vector<8x1xf32> to vector<8x32xf32>
    %410 = arith.mulf %405, %409 : vector<8x32xf32>
    %411 = vector.broadcast %391 : vector<1x32xf32> to vector<8x32xf32>
    %412 = arith.mulf %410, %411 : vector<8x32xf32>
    %413 = vector.broadcast %392 : vector<1x32xf32> to vector<8x32xf32>
    %414 = arith.addf %412, %413 : vector<8x32xf32>
    %415 = arith.truncf %414 : vector<8x32xf32> to vector<8x32xbf16>
    %cst_115 = arith.constant dense<0.000000e+00> : vector<8x32xf32>
    %416 = tpu.matmul %415, %49, %cst_115 {dimension_numbers = #tpu.dot_dimension_numbers<[1], [0], [0], [1], [0, 0, 1, 1], [], []>} : vector<8x32xbf16>, vector<32x32xbf16>, vector<8x32xf32> -> vector<8x32xf32>
    %417 = vector.broadcast %50 : vector<1x32xf32> to vector<8x32xf32>
    %418 = arith.addf %416, %417 : vector<8x32xf32>
    %cst_116 = arith.constant 0.000000e+00 : f32
    %419 = vector.broadcast %cst_116 : f32 to vector<8x32xf32>
    %420 = arith.maximumf %418, %419 : vector<8x32xf32>
    %421 = arith.truncf %420 : vector<8x32xf32> to vector<8x32xbf16>
    %cst_117 = arith.constant dense<0.000000e+00> : vector<8x32xf32>
    %422 = tpu.matmul %421, %51, %cst_117 {dimension_numbers = #tpu.dot_dimension_numbers<[1], [0], [0], [1], [0, 0, 1, 1], [], []>} : vector<8x32xbf16>, vector<32x32xbf16>, vector<8x32xf32> -> vector<8x32xf32>
    %423 = arith.addf %390, %422 : vector<8x32xf32>
    %424 = vector.broadcast %52 : vector<1x32xf32> to vector<8x32xf32>
    %425 = arith.addf %423, %424 : vector<8x32xf32>
    %c0_118 = arith.constant 0 : index
    %c0_119 = arith.constant 0 : index
    %c0_120 = arith.constant 0 : index
    %426 = vector.load %arg17[%c0_118, %c0_119, %c0_120] : memref<2x4x128xf32, #tpu.memory_space<vmem>>, vector<2x4x128xf32>
    tpu.vector_store %arg17[%c0_118, %c0_119, %c0_120], %348 {strides = array<i32>} : memref<2x4x128xf32, #tpu.memory_space<vmem>>, vector<2x4x128xf32>,
    return
  }
  func.func @transform_0(%arg0: i32) -> (i32, i32, i32) {
    %c0_i32 = arith.constant 0 : i32
    %c0_i32_0 = arith.constant 0 : i32
    %c0_i32_1 = arith.constant 0 : i32
    return %arg0, %c0_i32, %c0_i32_0 : i32, i32, i32
  }
  func.func @transform_1(%arg0: i32) -> (i32, i32, i32) {
    %c0_i32 = arith.constant 0 : i32
    %c0_i32_0 = arith.constant 0 : i32
    %c0_i32_1 = arith.constant 0 : i32
    return %arg0, %c0_i32, %c0_i32_0 : i32, i32, i32
  }
  func.func @transform_2(%arg0: i32) -> (i32, i32, i32) {
    %c0_i32 = arith.constant 0 : i32
    %c0_i32_0 = arith.constant 0 : i32
    %c0_i32_1 = arith.constant 0 : i32
    return %arg0, %c0_i32, %c0_i32_0 : i32, i32, i32
  }
  func.func @transform_3(%arg0: i32) -> (i32, i32) {
    %c0_i32 = arith.constant 0 : i32
    %c0_i32_0 = arith.constant 0 : i32
    %c0_i32_1 = arith.constant 0 : i32
    return %c0_i32, %c0_i32_0 : i32, i32
  }
  func.func @transform_4(%arg0: i32) -> (i32, i32) {
    %c0_i32 = arith.constant 0 : i32
    %c0_i32_0 = arith.constant 0 : i32
    %c0_i32_1 = arith.constant 0 : i32
    return %c0_i32, %c0_i32_0 : i32, i32
  }
  func.func @transform_5(%arg0: i32) -> (i32, i32) {
    %c0_i32 = arith.constant 0 : i32
    %c0_i32_0 = arith.constant 0 : i32
    %c0_i32_1 = arith.constant 0 : i32
    return %c0_i32, %c0_i32_0 : i32, i32
  }
  func.func @transform_6(%arg0: i32) -> (i32, i32) {
    %c0_i32 = arith.constant 0 : i32
    %c0_i32_0 = arith.constant 0 : i32
    %c0_i32_1 = arith.constant 0 : i32
    return %c0_i32, %c0_i32_0 : i32, i32
  }
  func.func @transform_7(%arg0: i32) -> (i32, i32) {
    %c0_i32 = arith.constant 0 : i32
    %c0_i32_0 = arith.constant 0 : i32
    %c0_i32_1 = arith.constant 0 : i32
    return %c0_i32, %c0_i32_0 : i32, i32
  }
  func.func @transform_8(%arg0: i32) -> (i32, i32) {
    %c0_i32 = arith.constant 0 : i32
    %c0_i32_0 = arith.constant 0 : i32
    %c0_i32_1 = arith.constant 0 : i32
    return %c0_i32, %c0_i32_0 : i32, i32
  }
  func.func @transform_9(%arg0: i32) -> (i32, i32) {
    %c0_i32 = arith.constant 0 : i32
    %c0_i32_0 = arith.constant 0 : i32
    %c0_i32_1 = arith.constant 0 : i32
    return %c0_i32, %c0_i32_0 : i32, i32
  }
  func.func @transform_10(%arg0: i32) -> (i32, i32) {
    %c0_i32 = arith.constant 0 : i32
    %c0_i32_0 = arith.constant 0 : i32
    %c0_i32_1 = arith.constant 0 : i32
    return %c0_i32, %c0_i32_0 : i32, i32
  }
  func.func @transform_11(%arg0: i32) -> (i32, i32) {
    %c0_i32 = arith.constant 0 : i32
    %c0_i32_0 = arith.constant 0 : i32
    %c0_i32_1 = arith.constant 0 : i32
    return %c0_i32, %c0_i32_0 : i32, i32
  }
  func.func @transform_12(%arg0: i32) -> (i32, i32) {
    %c0_i32 = arith.constant 0 : i32
    %c0_i32_0 = arith.constant 0 : i32
    %c0_i32_1 = arith.constant 0 : i32
    return %c0_i32, %c0_i32_0 : i32, i32
  }
  func.func @transform_13(%arg0: i32) -> (i32, i32) {
    %c0_i32 = arith.constant 0 : i32
    %c0_i32_0 = arith.constant 0 : i32
    %c0_i32_1 = arith.constant 0 : i32
    return %c0_i32, %c0_i32_0 : i32, i32
  }
  func.func @transform_14(%arg0: i32) -> (i32, i32) {
    %c0_i32 = arith.constant 0 : i32
    %c0_i32_0 = arith.constant 0 : i32
    %c0_i32_1 = arith.constant 0 : i32
    return %c0_i32, %c0_i32_0 : i32, i32
  }
  func.func @transform_15(%arg0: i32) -> (i32, i32) {
    %c0_i32 = arith.constant 0 : i32
    %c0_i32_0 = arith.constant 0 : i32
    %c0_i32_1 = arith.constant 0 : i32
    return %c0_i32, %c0_i32_0 : i32, i32
  }
  func.func @transform_16(%arg0: i32) -> (i32, i32, i32) {
    %c0_i32 = arith.constant 0 : i32
    %c0_i32_0 = arith.constant 0 : i32
    %c0_i32_1 = arith.constant 0 : i32
    return %arg0, %c0_i32, %c0_i32_0 : i32, i32, i32
  }
}

</mosaic_0001>

<llo_original>
// kernel: tpu_custom_call.1
$region0: #{tpu_custom_call.1}
  #allocation0 [shape = 'u32[]', space=smem, size = 0x4, offset = 0x4, fixed_abs, tag = 'smem constant byte address 0x4 - core index']
  #allocation1 [shape = 'u32[144,128]{1,0:T(1,128)}', space=vmem, size = 0x12000, scoped, tag = 'internal scratch']
  %s0 = inlined_call_operand.vmem [shape: f32[2,128,32], index: 0, kind: input, shape index: {}]
  %s1 = inlined_call_operand.vmem [shape: f32[2,1,128], index: 1, kind: input, shape index: {}]
  %s2 = inlined_call_operand.vmem [shape: f32[2,4,32], index: 2, kind: input, shape index: {}]
  %s3 = inlined_call_operand.vmem [shape: bf16[32,32], index: 3, kind: input, shape index: {}]
  %s4 = inlined_call_operand.vmem [shape: f32[1,32], index: 4, kind: input, shape index: {}]
  %s5 = inlined_call_operand.vmem [shape: bf16[32,64], index: 5, kind: input, shape index: {}]
  %s6 = inlined_call_operand.vmem [shape: f32[1,64], index: 6, kind: input, shape index: {}]
  %s7 = inlined_call_operand.vmem [shape: bf16[32,96], index: 7, kind: input, shape index: {}]
  %s8 = inlined_call_operand.vmem [shape: f32[1,96], index: 8, kind: input, shape index: {}]
  %s9 = inlined_call_operand.vmem [shape: bf16[32,96], index: 9, kind: input, shape index: {}]
  %s10 = inlined_call_operand.vmem [shape: f32[1,96], index: 10, kind: input, shape index: {}]
  %s11 = inlined_call_operand.vmem [shape: bf16[32,32], index: 11, kind: input, shape index: {}]
  %s12 = inlined_call_operand.vmem [shape: f32[1,32], index: 12, kind: input, shape index: {}]
  %s13 = inlined_call_operand.vmem [shape: bf16[32,32], index: 13, kind: input, shape index: {}]
  %s14 = inlined_call_operand.vmem [shape: f32[1,32], index: 14, kind: input, shape index: {}]
  %s15 = inlined_call_operand.vmem [shape: f32[6,32], index: 15, kind: input, shape index: {}]
  %s16 = inlined_call_operand.hbm [shape: f32[2,4,128], index: 16, kind: output, shape index: {}]
  %s17 = sld [smem:[#allocation0]]
  $region74: #{tpu_custom_call.1} parent=0
    _
  %s19 = ssub.s32 1, %s17
  %s20 = scalar_select 0, %s19, %s17
  $region1: #{tpu_custom_call.1} parent=0
    #allocation2 [shape = 'u8[4096]{0}', space=vmem, size = 0x1000, scoped, tag = 'output window, operand 0, single buffered']
    #allocation3 [shape = 's32[1]{0}', space=sflag, size = 0x4, scoped, tag = 'scoped memory for tpu_custom_call.1']
    %21 = vsyncpa [#allocation3], 0
    // Predicated region
    $region2: #{tpu_custom_call.1} parent=1 // pred_check
      _
    $region3: #{tpu_custom_call.1} parent=1 // pred_check_branch
      %23 = sbr.rel (0) target = $region5
    $region4: #{tpu_custom_call.1} parent=1 // pred_region
      _
    $region5: #{tpu_custom_call.1} parent=1 // pred_fallthru
      _
    // Predicated region
    $region6: #{tpu_custom_call.1} parent=1 // pred_check
      _
    $region7: #{tpu_custom_call.1} parent=1 // pred_check_branch
      %25 = sbr.rel (0) target = $region9
    $region8: #{tpu_custom_call.1} parent=1 // pred_region
      _
    $region9: #{tpu_custom_call.1} parent=1 // pred_fallthru
      _
    // Predicated region
    $region10: #{tpu_custom_call.1} parent=1 // pred_check
      _
    $region11: #{tpu_custom_call.1} parent=1 // pred_check_branch
      %27 = sbr.rel (0) target = $region13
    $region12: #{tpu_custom_call.1} parent=1 // pred_region
      _
    $region13: #{tpu_custom_call.1} parent=1 // pred_fallthru
      _
    // Predicated region
    $region14: #{tpu_custom_call.1} parent=1 // pred_check
      _
    $region15: #{tpu_custom_call.1} parent=1 // pred_check_branch
      %29 = sbr.rel (0) target = $region17
    $region16: #{tpu_custom_call.1} parent=1 // pred_region
      _
    $region17: #{tpu_custom_call.1} parent=1 // pred_fallthru
      _
    // Predicated region
    $region18: #{tpu_custom_call.1} parent=1 // pred_check
      _
    $region19: #{tpu_custom_call.1} parent=1 // pred_check_branch
      %31 = sbr.rel (0) target = $region21
    $region20: #{tpu_custom_call.1} parent=1 // pred_region
      _
    $region21: #{tpu_custom_call.1} parent=1 // pred_fallthru
      _
    // Predicated region
    $region22: #{tpu_custom_call.1} parent=1 // pred_check
      _
    $region23: #{tpu_custom_call.1} parent=1 // pred_check_branch
      %33 = sbr.rel (0) target = $region25
    $region24: #{tpu_custom_call.1} parent=1 // pred_region
      _
    $region25: #{tpu_custom_call.1} parent=1 // pred_fallthru
      _
    // Predicated region
    $region26: #{tpu_custom_call.1} parent=1 // pred_check
      _
    $region27: #{tpu_custom_call.1} parent=1 // pred_check_branch
      %35 = sbr.rel (0) target = $region29
    $region28: #{tpu_custom_call.1} parent=1 // pred_region
      _
    $region29: #{tpu_custom_call.1} parent=1 // pred_fallthru
      _
    // Predicated region
    $region30: #{tpu_custom_call.1} parent=1 // pred_check
      _
    $region31: #{tpu_custom_call.1} parent=1 // pred_check_branch
      %37 = sbr.rel (0) target = $region33
    $region32: #{tpu_custom_call.1} parent=1 // pred_region
      _
    $region33: #{tpu_custom_call.1} parent=1 // pred_fallthru
      _
    // Predicated region
    $region34: #{tpu_custom_call.1} parent=1 // pred_check
      _
    $region35: #{tpu_custom_call.1} parent=1 // pred_check_branch
      %39 = sbr.rel (0) target = $region37
    $region36: #{tpu_custom_call.1} parent=1 // pred_region
      _
    $region37: #{tpu_custom_call.1} parent=1 // pred_fallthru
      _
    // Predicated region
    $region38: #{tpu_custom_call.1} parent=1 // pred_check
      _
    $region39: #{tpu_custom_call.1} parent=1 // pred_check_branch
      %41 = sbr.rel (0) target = $region41
    $region40: #{tpu_custom_call.1} parent=1 // pred_region
      _
    $region41: #{tpu_custom_call.1} parent=1 // pred_fallthru
      _
    // Predicated region
    $region42: #{tpu_custom_call.1} parent=1 // pred_check
      _
    $region43: #{tpu_custom_call.1} parent=1 // pred_check_branch
      %43 = sbr.rel (0) target = $region45
    $region44: #{tpu_custom_call.1} parent=1 // pred_region
      _
    $region45: #{tpu_custom_call.1} parent=1 // pred_fallthru
      _
    // Predicated region
    $region46: #{tpu_custom_call.1} parent=1 // pred_check
      _
    $region47: #{tpu_custom_call.1} parent=1 // pred_check_branch
      %45 = sbr.rel (0) target = $region49
    $region48: #{tpu_custom_call.1} parent=1 // pred_region
      _
    $region49: #{tpu_custom_call.1} parent=1 // pred_fallthru
      _
    // Predicated region
    $region50: #{tpu_custom_call.1} parent=1 // pred_check
      _
    $region51: #{tpu_custom_call.1} parent=1 // pred_check_branch
      %47 = sbr.rel (0) target = $region53
    $region52: #{tpu_custom_call.1} parent=1 // pred_region
      _
    $region53: #{tpu_custom_call.1} parent=1 // pred_fallthru
      _
    // Predicated region
    $region54: #{tpu_custom_call.1} parent=1 // pred_check
      _
    $region55: #{tpu_custom_call.1} parent=1 // pred_check_branch
      %49 = sbr.rel (0) target = $region57
    $region56: #{tpu_custom_call.1} parent=1 // pred_region
      _
    $region57: #{tpu_custom_call.1} parent=1 // pred_fallthru
      _
    // Predicated region
    $region58: #{tpu_custom_call.1} parent=1 // pred_check
      _
    $region59: #{tpu_custom_call.1} parent=1 // pred_check_branch
      %51 = sbr.rel (0) target = $region61
    $region60: #{tpu_custom_call.1} parent=1 // pred_region
      _
    $region61: #{tpu_custom_call.1} parent=1 // pred_fallthru
      _
    // Predicated region
    $region62: #{tpu_custom_call.1} parent=1 // pred_check
      _
    $region63: #{tpu_custom_call.1} parent=1 // pred_check_branch
      %53 = sbr.rel (0) target = $region65
    $region64: #{tpu_custom_call.1} parent=1 // pred_region
      _
    $region65: #{tpu_custom_call.1} parent=1 // pred_fallthru
      _
    %v55 = vld [vmem:[%s0] sm:$0xff]
    %v56 = vld [vmem:[%s0 + $0x8] sm:$0xff]
    %v57 = vld [vmem:[%s0 + $0x10] sm:$0xff]
    %v58 = vld [vmem:[%s0 + $0x18] sm:$0xff]
    %v59 = vld [vmem:[%s0 + $0x20] sm:$0xff]
    %v60 = vld [vmem:[%s0 + $0x28] sm:$0xff]
    %v61 = vld [vmem:[%s0 + $0x30] sm:$0xff]
    %v62 = vld [vmem:[%s0 + $0x38] sm:$0xff]
    %v63 = vld [vmem:[%s0 + $0x40] sm:$0xff]
    %v64 = vld [vmem:[%s0 + $0x48] sm:$0xff]
    %v65 = vld [vmem:[%s0 + $0x50] sm:$0xff]
    %v66 = vld [vmem:[%s0 + $0x58] sm:$0xff]
    %v67 = vld [vmem:[%s0 + $0x60] sm:$0xff]
    %v68 = vld [vmem:[%s0 + $0x68] sm:$0xff]
    %v69 = vld [vmem:[%s0 + $0x70] sm:$0xff]
    %v70 = vld [vmem:[%s0 + $0x78] sm:$0xff]
    %v71 = vld [vmem:[%s0 + $0x80] sm:$0xff]
    %v72 = vld [vmem:[%s0 + $0x88] sm:$0xff]
    %v73 = vld [vmem:[%s0 + $0x90] sm:$0xff]
    %v74 = vld [vmem:[%s0 + $0x98] sm:$0xff]
    %v75 = vld [vmem:[%s0 + $0xa0] sm:$0xff]
    %v76 = vld [vmem:[%s0 + $0xa8] sm:$0xff]
    %v77 = vld [vmem:[%s0 + $0xb0] sm:$0xff]
    %v78 = vld [vmem:[%s0 + $0xb8] sm:$0xff]
    %v79 = vld [vmem:[%s0 + $0xc0] sm:$0xff]
    %v80 = vld [vmem:[%s0 + $0xc8] sm:$0xff]
    %v81 = vld [vmem:[%s0 + $0xd0] sm:$0xff]
    %v82 = vld [vmem:[%s0 + $0xd8] sm:$0xff]
    %v83 = vld [vmem:[%s0 + $0xe0] sm:$0xff]
    %v84 = vld [vmem:[%s0 + $0xe8] sm:$0xff]
    %v85 = vld [vmem:[%s0 + $0xf0] sm:$0xff]
    %v86 = vld [vmem:[%s0 + $0xf8] sm:$0xff]
    %v87 = vld [vmem:[%s1] sm:$0x1]
    %v88 = vld [vmem:[%s1 + $0x1] sm:$0x1]
    %v89 = vld [vmem:[%s2] sm:$0xf]
    %v90 = vld [vmem:[%s2 + $0x4] sm:$0xf]
    %v91 = vld [vmem:[%s15] sm:$0x3f]
    %vm92 = vcmask 261120
    %v93 = vsel %vm92, %v55, 0.0
    %94 = vadd.xlane.f32.xlu0 %v93
    %v95 = vpop.xlane.xlu0 %94
    %v96 = vsel %vm92, %v56, 0.0
    %97 = vadd.xlane.f32.xlu0 %v96
    %v98 = vpop.xlane.xlu0 %97
    %v99 = vsel %vm92, %v57, 0.0
    %100 = vadd.xlane.f32.xlu0 %v99
    %v101 = vpop.xlane.xlu0 %100
    %v102 = vsel %vm92, %v58, 0.0
    %103 = vadd.xlane.f32.xlu0 %v102
    %v104 = vpop.xlane.xlu0 %103
    %v105 = vsel %vm92, %v59, 0.0
    %106 = vadd.xlane.f32.xlu0 %v105
    %v107 = vpop.xlane.xlu0 %106
    %v108 = vsel %vm92, %v60, 0.0
    %109 = vadd.xlane.f32.xlu0 %v108
    %v110 = vpop.xlane.xlu0 %109
    %v111 = vsel %vm92, %v61, 0.0
    %112 = vadd.xlane.f32.xlu0 %v111
    %v113 = vpop.xlane.xlu0 %112
    %v114 = vsel %vm92, %v62, 0.0
    %115 = vadd.xlane.f32.xlu0 %v114
    %v116 = vpop.xlane.xlu0 %115
    %v117 = vsel %vm92, %v63, 0.0
    %118 = vadd.xlane.f32.xlu0 %v117
    %v119 = vpop.xlane.xlu0 %118
    %v120 = vsel %vm92, %v64, 0.0
    %121 = vadd.xlane.f32.xlu0 %v120
    %v122 = vpop.xlane.xlu0 %121
    %v123 = vsel %vm92, %v65, 0.0
    %124 = vadd.xlane.f32.xlu0 %v123
    %v125 = vpop.xlane.xlu0 %124
    %v126 = vsel %vm92, %v66, 0.0
    %127 = vadd.xlane.f32.xlu0 %v126
    %v128 = vpop.xlane.xlu0 %127
    %v129 = vsel %vm92, %v67, 0.0
    %130 = vadd.xlane.f32.xlu0 %v129
    %v131 = vpop.xlane.xlu0 %130
    %v132 = vsel %vm92, %v68, 0.0
    %133 = vadd.xlane.f32.xlu0 %v132
    %v134 = vpop.xlane.xlu0 %133
    %v135 = vsel %vm92, %v69, 0.0
    %136 = vadd.xlane.f32.xlu0 %v135
    %v137 = vpop.xlane.xlu0 %136
    %v138 = vsel %vm92, %v70, 0.0
    %139 = vadd.xlane.f32.xlu0 %v138
    %v140 = vpop.xlane.xlu0 %139
    %v141 = vsel %vm92, %v71, 0.0
    %142 = vadd.xlane.f32.xlu0 %v141
    %v143 = vpop.xlane.xlu0 %142
    %v144 = vsel %vm92, %v72, 0.0
    %145 = vadd.xlane.f32.xlu0 %v144
    %v146 = vpop.xlane.xlu0 %145
    %v147 = vsel %vm92, %v73, 0.0
    %148 = vadd.xlane.f32.xlu0 %v147
    %v149 = vpop.xlane.xlu0 %148
    %v150 = vsel %vm92, %v74, 0.0
    %151 = vadd.xlane.f32.xlu0 %v150
    %v152 = vpop.xlane.xlu0 %151
    %v153 = vsel %vm92, %v75, 0.0
    %154 = vadd.xlane.f32.xlu0 %v153
    %v155 = vpop.xlane.xlu0 %154
    %v156 = vsel %vm92, %v76, 0.0
    %157 = vadd.xlane.f32.xlu0 %v156
    %v158 = vpop.xlane.xlu0 %157
    %v159 = vsel %vm92, %v77, 0.0
    %160 = vadd.xlane.f32.xlu0 %v159
    %v161 = vpop.xlane.xlu0 %160
    %v162 = vsel %vm92, %v78, 0.0
    %163 = vadd.xlane.f32.xlu0 %v162
    %v164 = vpop.xlane.xlu0 %163
    %v165 = vsel %vm92, %v79, 0.0
    %166 = vadd.xlane.f32.xlu0 %v165
    %v167 = vpop.xlane.xlu0 %166
    %v168 = vsel %vm92, %v80, 0.0
    %169 = vadd.xlane.f32.xlu0 %v168
    %v170 = vpop.xlane.xlu0 %169
    %v171 = vsel %vm92, %v81, 0.0
    %172 = vadd.xlane.f32.xlu0 %v171
    %v173 = vpop.xlane.xlu0 %172
    %v174 = vsel %vm92, %v82, 0.0
    %175 = vadd.xlane.f32.xlu0 %v174
    %v176 = vpop.xlane.xlu0 %175
    %v177 = vsel %vm92, %v83, 0.0
    %178 = vadd.xlane.f32.xlu0 %v177
    %v179 = vpop.xlane.xlu0 %178
    %v180 = vsel %vm92, %v84, 0.0
    %181 = vadd.xlane.f32.xlu0 %v180
    %v182 = vpop.xlane.xlu0 %181
    %v183 = vsel %vm92, %v85, 0.0
    %184 = vadd.xlane.f32.xlu0 %v183
    %v185 = vpop.xlane.xlu0 %184
    %v186 = vsel %vm92, %v86, 0.0
    %187 = vadd.xlane.f32.xlu0 %v186
    %v188 = vpop.xlane.xlu0 %187
    %v189 = vrcp.pop 32.0
    %v190 = vmul.f32 %v95, %v189
    %v191 = vmul.f32 %v98, %v189
    %v192 = vmul.f32 %v101, %v189
    %v193 = vmul.f32 %v104, %v189
    %v194 = vmul.f32 %v107, %v189
    %v195 = vmul.f32 %v110, %v189
    %v196 = vmul.f32 %v113, %v189
    %v197 = vmul.f32 %v116, %v189
    %v198 = vmul.f32 %v119, %v189
    %v199 = vmul.f32 %v122, %v189
    %v200 = vmul.f32 %v125, %v189
    %v201 = vmul.f32 %v128, %v189
    %v202 = vmul.f32 %v131, %v189
    %v203 = vmul.f32 %v134, %v189
    %v204 = vmul.f32 %v137, %v189
    %v205 = vmul.f32 %v140, %v189
    %v206 = vmul.f32 %v143, %v189
    %v207 = vmul.f32 %v146, %v189
    %v208 = vmul.f32 %v149, %v189
    %v209 = vmul.f32 %v152, %v189
    %v210 = vmul.f32 %v155, %v189
    %v211 = vmul.f32 %v158, %v189
    %v212 = vmul.f32 %v161, %v189
    %v213 = vmul.f32 %v164, %v189
    %v214 = vmul.f32 %v167, %v189
    %v215 = vmul.f32 %v170, %v189
    %v216 = vmul.f32 %v173, %v189
    %v217 = vmul.f32 %v176, %v189
    %v218 = vmul.f32 %v179, %v189
    %v219 = vmul.f32 %v182, %v189
    %v220 = vmul.f32 %v185, %v189
    %v221 = vmul.f32 %v188, %v189
    %v222 = vsub.f32 %v55, %v190
    %v223 = vsub.f32 %v56, %v191
    %v224 = vsub.f32 %v57, %v192
    %v225 = vsub.f32 %v58, %v193
    %v226 = vsub.f32 %v59, %v194
    %v227 = vsub.f32 %v60, %v195
    %v228 = vsub.f32 %v61, %v196
    %v229 = vsub.f32 %v62, %v197
    %v230 = vsub.f32 %v63, %v198
    %v231 = vsub.f32 %v64, %v199
    %v232 = vsub.f32 %v65, %v200
    %v233 = vsub.f32 %v66, %v201
    %v234 = vsub.f32 %v67, %v202
    %v235 = vsub.f32 %v68, %v203
    %v236 = vsub.f32 %v69, %v204
    %v237 = vsub.f32 %v70, %v205
    %v238 = vsub.f32 %v71, %v206
    %v239 = vsub.f32 %v72, %v207
    %v240 = vsub.f32 %v73, %v208
    %v241 = vsub.f32 %v74, %v209
    %v242 = vsub.f32 %v75, %v210
    %v243 = vsub.f32 %v76, %v211
    %v244 = vsub.f32 %v77, %v212
    %v245 = vsub.f32 %v78, %v213
    %v246 = vsub.f32 %v79, %v214
    %v247 = vsub.f32 %v80, %v215
    %v248 = vsub.f32 %v81, %v216
    %v249 = vsub.f32 %v82, %v217
    %v250 = vsub.f32 %v83, %v218
    %v251 = vsub.f32 %v84, %v219
    %v252 = vsub.f32 %v85, %v220
    %v253 = vsub.f32 %v86, %v221
    %v254 = vmul.f32 %v222, %v222
    %v255 = vmul.f32 %v223, %v223
    %v256 = vmul.f32 %v224, %v224
    %v257 = vmul.f32 %v225, %v225
    %v258 = vmul.f32 %v226, %v226
    %v259 = vmul.f32 %v227, %v227
    %v260 = vmul.f32 %v228, %v228
    %v261 = vmul.f32 %v229, %v229
    %v262 = vmul.f32 %v230, %v230
    %v263 = vmul.f32 %v231, %v231
    %v264 = vmul.f32 %v232, %v232
    %v265 = vmul.f32 %v233, %v233
    %v266 = vmul.f32 %v234, %v234
    %v267 = vmul.f32 %v235, %v235
    %v268 = vmul.f32 %v236, %v236
    %v269 = vmul.f32 %v237, %v237
    %v270 = vmul.f32 %v238, %v238
    %v271 = vmul.f32 %v239, %v239
    %v272 = vmul.f32 %v240, %v240
    %v273 = vmul.f32 %v241, %v241
    %v274 = vmul.f32 %v242, %v242
    %v275 = vmul.f32 %v243, %v243
    %v276 = vmul.f32 %v244, %v244
    %v277 = vmul.f32 %v245, %v245
    %v278 = vmul.f32 %v246, %v246
    %v279 = vmul.f32 %v247, %v247
    %v280 = vmul.f32 %v248, %v248
    %v281 = vmul.f32 %v249, %v249
    %v282 = vmul.f32 %v250, %v250
    %v283 = vmul.f32 %v251, %v251
    %v284 = vmul.f32 %v252, %v252
    %v285 = vmul.f32 %v253, %v253
    %v286 = vsel %vm92, %v254, 0.0
    %287 = vadd.xlane.f32.xlu0 %v286
    %v288 = vpop.xlane.xlu0 %287
    %v289 = vsel %vm92, %v255, 0.0
    %290 = vadd.xlane.f32.xlu0 %v289
    %v291 = vpop.xlane.xlu0 %290
    %v292 = vsel %vm92, %v256, 0.0
    %293 = vadd.xlane.f32.xlu0 %v292
    %v294 = vpop.xlane.xlu0 %293
    %v295 = vsel %vm92, %v257, 0.0
    %296 = vadd.xlane.f32.xlu0 %v295
    %v297 = vpop.xlane.xlu0 %296
    %v298 = vsel %vm92, %v258, 0.0
    %299 = vadd.xlane.f32.xlu0 %v298
    %v300 = vpop.xlane.xlu0 %299
    %v301 = vsel %vm92, %v259, 0.0
    %302 = vadd.xlane.f32.xlu0 %v301
    %v303 = vpop.xlane.xlu0 %302
    %v304 = vsel %vm92, %v260, 0.0
    %305 = vadd.xlane.f32.xlu0 %v304
    %v306 = vpop.xlane.xlu0 %305
    %v307 = vsel %vm92, %v261, 0.0
    %308 = vadd.xlane.f32.xlu0 %v307
    %v309 = vpop.xlane.xlu0 %308
    %v310 = vsel %vm92, %v262, 0.0
    %311 = vadd.xlane.f32.xlu0 %v310
    %v312 = vpop.xlane.xlu0 %311
    %v313 = vsel %vm92, %v263, 0.0
    %314 = vadd.xlane.f32.xlu0 %v313
    %v315 = vpop.xlane.xlu0 %314
    %v316 = vsel %vm92, %v264, 0.0
    %317 = vadd.xlane.f32.xlu0 %v316
    %v318 = vpop.xlane.xlu0 %317
    %v319 = vsel %vm92, %v265, 0.0
    %320 = vadd.xlane.f32.xlu0 %v319
    %v321 = vpop.xlane.xlu0 %320
    %v322 = vsel %vm92, %v266, 0.0
    %323 = vadd.xlane.f32.xlu0 %v322
    %v324 = vpop.xlane.xlu0 %323
    %v325 = vsel %vm92, %v267, 0.0
    %326 = vadd.xlane.f32.xlu0 %v325
    %v327 = vpop.xlane.xlu0 %326
    %v328 = vsel %vm92, %v268, 0.0
    %329 = vadd.xlane.f32.xlu0 %v328
    %v330 = vpop.xlane.xlu0 %329
    %v331 = vsel %vm92, %v269, 0.0
    %332 = vadd.xlane.f32.xlu0 %v331
    %v333 = vpop.xlane.xlu0 %332
    %v334 = vsel %vm92, %v270, 0.0
    %335 = vadd.xlane.f32.xlu0 %v334
    %v336 = vpop.xlane.xlu0 %335
    %v337 = vsel %vm92, %v271, 0.0
    %338 = vadd.xlane.f32.xlu0 %v337
    %v339 = vpop.xlane.xlu0 %338
    %v340 = vsel %vm92, %v272, 0.0
    %341 = vadd.xlane.f32.xlu0 %v340
    %v342 = vpop.xlane.xlu0 %341
    %v343 = vsel %vm92, %v273, 0.0
    %344 = vadd.xlane.f32.xlu0 %v343
    %v345 = vpop.xlane.xlu0 %344
    %v346 = vsel %vm92, %v274, 0.0
    %347 = vadd.xlane.f32.xlu0 %v346
    %v348 = vpop.xlane.xlu0 %347
    %v349 = vsel %vm92, %v275, 0.0
    %350 = vadd.xlane.f32.xlu0 %v349
    %v351 = vpop.xlane.xlu0 %350
    %v352 = vsel %vm92, %v276, 0.0
    %353 = vadd.xlane.f32.xlu0 %v352
    %v354 = vpop.xlane.xlu0 %353
    %v355 = vsel %vm92, %v277, 0.0
    %356 = vadd.xlane.f32.xlu0 %v355
    %v357 = vpop.xlane.xlu0 %356
    %v358 = vsel %vm92, %v278, 0.0
    %359 = vadd.xlane.f32.xlu0 %v358
    %v360 = vpop.xlane.xlu0 %359
    %v361 = vsel %vm92, %v279, 0.0
    %362 = vadd.xlane.f32.xlu0 %v361
    %v363 = vpop.xlane.xlu0 %362
    %v364 = vsel %vm92, %v280, 0.0
    %365 = vadd.xlane.f32.xlu0 %v364
    %v366 = vpop.xlane.xlu0 %365
    %v367 = vsel %vm92, %v281, 0.0
    %368 = vadd.xlane.f32.xlu0 %v367
    %v369 = vpop.xlane.xlu0 %368
    %v370 = vsel %vm92, %v282, 0.0
    %371 = vadd.xlane.f32.xlu0 %v370
    %v372 = vpop.xlane.xlu0 %371
    %v373 = vsel %vm92, %v283, 0.0
    %374 = vadd.xlane.f32.xlu0 %v373
    %v375 = vpop.xlane.xlu0 %374
    %v376 = vsel %vm92, %v284, 0.0
    %377 = vadd.xlane.f32.xlu0 %v376
    %v378 = vpop.xlane.xlu0 %377
    %v379 = vsel %vm92, %v285, 0.0
    %380 = vadd.xlane.f32.xlu0 %v379
    %v381 = vpop.xlane.xlu0 %380
    %v382 = vmul.f32 %v288, %v189
    %v383 = vmul.f32 %v291, %v189
    %v384 = vmul.f32 %v294, %v189
    %v385 = vmul.f32 %v297, %v189
    %v386 = vmul.f32 %v300, %v189
    %v387 = vmul.f32 %v303, %v189
    %v388 = vmul.f32 %v306, %v189
    %v389 = vmul.f32 %v309, %v189
    %v390 = vmul.f32 %v312, %v189
    %v391 = vmul.f32 %v315, %v189
    %v392 = vmul.f32 %v318, %v189
    %v393 = vmul.f32 %v321, %v189
    %v394 = vmul.f32 %v324, %v189
    %v395 = vmul.f32 %v327, %v189
    %v396 = vmul.f32 %v330, %v189
    %v397 = vmul.f32 %v333, %v189
    %v398 = vmul.f32 %v336, %v189
    %v399 = vmul.f32 %v339, %v189
    %v400 = vmul.f32 %v342, %v189
    %v401 = vmul.f32 %v345, %v189
    %v402 = vmul.f32 %v348, %v189
    %v403 = vmul.f32 %v351, %v189
    %v404 = vmul.f32 %v354, %v189
    %v405 = vmul.f32 %v357, %v189
    %v406 = vmul.f32 %v360, %v189
    %v407 = vmul.f32 %v363, %v189
    %v408 = vmul.f32 %v366, %v189
    %v409 = vmul.f32 %v369, %v189
    %v410 = vmul.f32 %v372, %v189
    %v411 = vmul.f32 %v375, %v189
    %v412 = vmul.f32 %v378, %v189
    %v413 = vmul.f32 %v381, %v189
    %v414 = vadd.f32 %v382, 1e-05
    %v415 = vadd.f32 %v383, 1e-05
    %v416 = vadd.f32 %v384, 1e-05
    %v417 = vadd.f32 %v385, 1e-05
    %v418 = vadd.f32 %v386, 1e-05
    %v419 = vadd.f32 %v387, 1e-05
    %v420 = vadd.f32 %v388, 1e-05
    %v421 = vadd.f32 %v389, 1e-05
    %v422 = vadd.f32 %v390, 1e-05
    %v423 = vadd.f32 %v391, 1e-05
    %v424 = vadd.f32 %v392, 1e-05
    %v425 = vadd.f32 %v393, 1e-05
    %v426 = vadd.f32 %v394, 1e-05
    %v427 = vadd.f32 %v395, 1e-05
    %v428 = vadd.f32 %v396, 1e-05
    %v429 = vadd.f32 %v397, 1e-05
    %v430 = vadd.f32 %v398, 1e-05
    %v431 = vadd.f32 %v399, 1e-05
    %v432 = vadd.f32 %v400, 1e-05
    %v433 = vadd.f32 %v401, 1e-05
    %v434 = vadd.f32 %v402, 1e-05
    %v435 = vadd.f32 %v403, 1e-05
    %v436 = vadd.f32 %v404, 1e-05
    %v437 = vadd.f32 %v405, 1e-05
    %v438 = vadd.f32 %v406, 1e-05
    %v439 = vadd.f32 %v407, 1e-05
    %v440 = vadd.f32 %v408, 1e-05
    %v441 = vadd.f32 %v409, 1e-05
    %v442 = vadd.f32 %v410, 1e-05
    %v443 = vadd.f32 %v411, 1e-05
    %v444 = vadd.f32 %v412, 1e-05
    %v445 = vadd.f32 %v413, 1e-05
    %v446 = vrsqrt.pop %v414
    %v447 = vrsqrt.pop %v415
    %v448 = vrsqrt.pop %v416
    %v449 = vrsqrt.pop %v417
    %v450 = vrsqrt.pop %v418
    %v451 = vrsqrt.pop %v419
    %v452 = vrsqrt.pop %v420
    %v453 = vrsqrt.pop %v421
    %v454 = vrsqrt.pop %v422
    %v455 = vrsqrt.pop %v423
    %v456 = vrsqrt.pop %v424
    %v457 = vrsqrt.pop %v425
    %v458 = vrsqrt.pop %v426
    %v459 = vrsqrt.pop %v427
    %v460 = vrsqrt.pop %v428
    %v461 = vrsqrt.pop %v429
    %v462 = vrsqrt.pop %v430
    %v463 = vrsqrt.pop %v431
    %v464 = vrsqrt.pop %v432
    %v465 = vrsqrt.pop %v433
    %v466 = vrsqrt.pop %v434
    %v467 = vrsqrt.pop %v435
    %v468 = vrsqrt.pop %v436
    %v469 = vrsqrt.pop %v437
    %v470 = vrsqrt.pop %v438
    %v471 = vrsqrt.pop %v439
    %v472 = vrsqrt.pop %v440
    %v473 = vrsqrt.pop %v441
    %v474 = vrsqrt.pop %v442
    %v475 = vrsqrt.pop %v443
    %v476 = vrsqrt.pop %v444
    %v477 = vrsqrt.pop %v445
    %v478 = vmul.f32 %v222, %v446
    %v479 = vmul.f32 %v223, %v447
    %v480 = vmul.f32 %v224, %v448
    %v481 = vmul.f32 %v225, %v449
    %v482 = vmul.f32 %v226, %v450
    %v483 = vmul.f32 %v227, %v451
    %v484 = vmul.f32 %v228, %v452
    %v485 = vmul.f32 %v229, %v453
    %v486 = vmul.f32 %v230, %v454
    %v487 = vmul.f32 %v231, %v455
    %v488 = vmul.f32 %v232, %v456
    %v489 = vmul.f32 %v233, %v457
    %v490 = vmul.f32 %v234, %v458
    %v491 = vmul.f32 %v235, %v459
    %v492 = vmul.f32 %v236, %v460
    %v493 = vmul.f32 %v237, %v461
    %v494 = vmul.f32 %v238, %v462
    %v495 = vmul.f32 %v239, %v463
    %v496 = vmul.f32 %v240, %v464
    %v497 = vmul.f32 %v241, %v465
    %v498 = vmul.f32 %v242, %v466
    %v499 = vmul.f32 %v243, %v467
    %v500 = vmul.f32 %v244, %v468
    %v501 = vmul.f32 %v245, %v469
    %v502 = vmul.f32 %v246, %v470
    %v503 = vmul.f32 %v247, %v471
    %v504 = vmul.f32 %v248, %v472
    %v505 = vmul.f32 %v249, %v473
    %v506 = vmul.f32 %v250, %v474
    %v507 = vmul.f32 %v251, %v475
    %v508 = vmul.f32 %v252, %v476
    %v509 = vmul.f32 %v253, %v477
    %v510 = vlaneseq
    %v511 = vshrl.u32 %v510, 7
    %v512 = vsub.s32 0, %v511
    %v513 = vrot.slane %v91, %v512
    %v514 = vmul.f32 %v478, %v513
    %v515 = vmul.f32 %v479, %v513
    %v516 = vmul.f32 %v480, %v513
    %v517 = vmul.f32 %v481, %v513
    %v518 = vmul.f32 %v482, %v513
    %v519 = vmul.f32 %v483, %v513
    %v520 = vmul.f32 %v484, %v513
    %v521 = vmul.f32 %v485, %v513
    %v522 = vmul.f32 %v486, %v513
    %v523 = vmul.f32 %v487, %v513
    %v524 = vmul.f32 %v488, %v513
    %v525 = vmul.f32 %v489, %v513
    %v526 = vmul.f32 %v490, %v513
    %v527 = vmul.f32 %v491, %v513
    %v528 = vmul.f32 %v492, %v513
    %v529 = vmul.f32 %v493, %v513
    %v530 = vmul.f32 %v494, %v513
    %v531 = vmul.f32 %v495, %v513
    %v532 = vmul.f32 %v496, %v513
    %v533 = vmul.f32 %v497, %v513
    %v534 = vmul.f32 %v498, %v513
    %v535 = vmul.f32 %v499, %v513
    %v536 = vmul.f32 %v500, %v513
    %v537 = vmul.f32 %v501, %v513
    %v538 = vmul.f32 %v502, %v513
    %v539 = vmul.f32 %v503, %v513
    %v540 = vmul.f32 %v504, %v513
    %v541 = vmul.f32 %v505, %v513
    %v542 = vmul.f32 %v506, %v513
    %v543 = vmul.f32 %v507, %v513
    %v544 = vmul.f32 %v508, %v513
    %v545 = vmul.f32 %v509, %v513
    %v546 = vlaneseq
    %v547 = vshrl.u32 %v546, 7
    %v548 = vsub.s32 1, %v547
    %v549 = vrot.slane %v91, %v548
    %v550 = vadd.f32 %v514, %v549
    %v551 = vadd.f32 %v515, %v549
    %v552 = vadd.f32 %v516, %v549
    %v553 = vadd.f32 %v517, %v549
    %v554 = vadd.f32 %v518, %v549
    %v555 = vadd.f32 %v519, %v549
    %v556 = vadd.f32 %v520, %v549
    %v557 = vadd.f32 %v521, %v549
    %v558 = vadd.f32 %v522, %v549
    %v559 = vadd.f32 %v523, %v549
    %v560 = vadd.f32 %v524, %v549
    %v561 = vadd.f32 %v525, %v549
    %v562 = vadd.f32 %v526, %v549
    %v563 = vadd.f32 %v527, %v549
    %v564 = vadd.f32 %v528, %v549
    %v565 = vadd.f32 %v529, %v549
    %v566 = vadd.f32 %v530, %v549
    %v567 = vadd.f32 %v531, %v549
    %v568 = vadd.f32 %v532, %v549
    %v569 = vadd.f32 %v533, %v549
    %v570 = vadd.f32 %v534, %v549
    %v571 = vadd.f32 %v535, %v549
    %v572 = vadd.f32 %v536, %v549
    %v573 = vadd.f32 %v537, %v549
    %v574 = vadd.f32 %v538, %v549
    %v575 = vadd.f32 %v539, %v549
    %v576 = vadd.f32 %v540, %v549
    %v577 = vadd.f32 %v541, %v549
    %v578 = vadd.f32 %v542, %v549
    %v579 = vadd.f32 %v543, %v549
    %v580 = vadd.f32 %v544, %v549
    %v581 = vadd.f32 %v545, %v549
    %v582 = vpack.c.bf16 %v551, %v550
    %v583 = vpack.c.bf16 %v553, %v552
    %v584 = vpack.c.bf16 %v555, %v554
    %v585 = vpack.c.bf16 %v557, %v556
    %v586 = vpack.c.bf16 %v559, %v558
    %v587 = vpack.c.bf16 %v561, %v560
    %v588 = vpack.c.bf16 %v563, %v562
    %v589 = vpack.c.bf16 %v565, %v564
    %v590 = vpack.c.bf16 %v567, %v566
    %v591 = vpack.c.bf16 %v569, %v568
    %v592 = vpack.c.bf16 %v571, %v570
    %v593 = vpack.c.bf16 %v573, %v572
    %v594 = vpack.c.bf16 %v575, %v574
    %v595 = vpack.c.bf16 %v577, %v576
    %v596 = vpack.c.bf16 %v579, %v578
    %v597 = vpack.c.bf16 %v581, %v580
    %v598 = vld [vmem:[%s5] sm:$0xf]
    %v599 = vld [vmem:[%s5 + $0x4] sm:$0xf]
    %v600 = vld [vmem:[%s5 + $0x8] sm:$0xf]
    %v601 = vld [vmem:[%s5 + $0xc] sm:$0xf]
    %v602 = vld [vmem:[%s6] sm:$0x1]
    %v604 = vlaneseq
    %v605 = vshrl.u32 %v604, 7
    %v606 = vsub.s32 0, %v605
    %v607 = vrot.slane %v602, %v606
    %v613 = vunpack.c.l.b16 %v598
    %v614 = vunpack.c.l.b16 %v599
    %v615 = vunpack.c.l.b16 %v600
    %v616 = vunpack.c.l.b16 %v601
    %v617 = vpack.c.b16 %v614, %v613
    %v618 = vpack.c.b16 %v616, %v615
    %v622 = vsel %vm92, %v582, 0
    %v625 = vsel %vm92, %v583, 0
    %v628 = vsel %vm92, %v584, 0
    %v631 = vsel %vm92, %v585, 0
    %v634 = vsel %vm92, %v586, 0
    %v637 = vsel %vm92, %v587, 0
    %v640 = vsel %vm92, %v588, 0
    %v643 = vsel %vm92, %v589, 0
    %v646 = vsel %vm92, %v590, 0
    %v649 = vsel %vm92, %v591, 0
    %v652 = vsel %vm92, %v592, 0
    %v655 = vsel %vm92, %v593, 0
    %v658 = vsel %vm92, %v594, 0
    %v661 = vsel %vm92, %v595, 0
    %v664 = vsel %vm92, %v596, 0
    %v667 = vsel %vm92, %v597, 0
    %669 = vmatprep.subr.bf16.mxu0 0
    %670 = vmatpush1.bf16.msra.mxu0 0
    %671 = vmatprep.subr.bf16.mxu0 0
    %672 = vmatpush1.bf16.msra.mxu0 0
    %673 = vmatprep.subr.bf16.mxu0 0
    %674 = vmatpush1.bf16.msra.mxu0 0
    %675 = vmatprep.subr.bf16.mxu0 0
    %676 = vmatpush1.bf16.msra.mxu0 0
    %677 = vmatprep.subr.bf16.mxu0 0
    %678 = vmatpush1.bf16.msra.mxu0 0
    %679 = vmatprep.subr.bf16.mxu0 0
    %680 = vmatpush1.bf16.msra.mxu0 0
    %681 = vmatprep.subr.bf16.mxu0 0
    %682 = vmatpush1.bf16.msra.mxu0 %v618
    %683 = vmatprep.subr.bf16.mxu0 0
    %684 = vmatpush1.bf16.msra.mxu0 %v617
    %685 = vmatprep.subr.bf16.mxu0 0
    %686 = vmatpush2.bf16.msra.mxu0 0
    %687 = vmatprep.subr.bf16.mxu0 0
    %688 = vmatpush2.bf16.msra.mxu0 0
    %689 = vmatprep.subr.bf16.mxu0 0
    %690 = vmatpush2.bf16.msra.mxu0 0
    %691 = vmatprep.subr.bf16.mxu0 0
    %692 = vmatpush2.bf16.msra.mxu0 0
    %693 = vmatprep.subr.bf16.mxu0 0
    %694 = vmatpush2.bf16.msra.mxu0 0
    %695 = vmatprep.subr.bf16.mxu0 0
    %696 = vmatpush2.bf16.msra.mxu0 0
    %697 = vmatprep.subr.bf16.mxu0 0
    %698 = vmatpush2.bf16.msra.mxu0 0
    %699 = vmatprep.subr.bf16.mxu0 0
    %700 = vmatpush2.bf16.msra.mxu0 0
    %701 = vmatprep.mubr.bf16.mxu0 0
    %702 = vmatmul.mubr.bf16.gmra.mxu0 %v622
    %v703 = vpop.f32.mrf.mxu0
    %v704 = vadd.f32 %v607, %v703
    %v705 = vpop.f32.mrf.mxu0
    %v706 = vpop.f32.mrf.mxu0
    %v707 = vadd.f32 %v607, %v706
    %v708 = vpop.f32.mrf.mxu0
    %709 = vmatprep.mubr.bf16.mxu0 0
    %710 = vmatmul.mubr.bf16.gmra.mxu0 %v625
    %v711 = vpop.f32.mrf.mxu0
    %v712 = vadd.f32 %v607, %v711
    %v713 = vpop.f32.mrf.mxu0
    %v714 = vpop.f32.mrf.mxu0
    %v715 = vadd.f32 %v607, %v714
    %v716 = vpop.f32.mrf.mxu0
    %717 = vmatprep.mubr.bf16.mxu0 0
    %718 = vmatmul.mubr.bf16.gmra.mxu0 %v628
    %v719 = vpop.f32.mrf.mxu0
    %v720 = vadd.f32 %v607, %v719
    %v721 = vpop.f32.mrf.mxu0
    %v722 = vpop.f32.mrf.mxu0
    %v723 = vadd.f32 %v607, %v722
    %v724 = vpop.f32.mrf.mxu0
    %725 = vmatprep.mubr.bf16.mxu0 0
    %726 = vmatmul.mubr.bf16.gmra.mxu0 %v631
    %v727 = vpop.f32.mrf.mxu0
    %v728 = vadd.f32 %v607, %v727
    %v729 = vpop.f32.mrf.mxu0
    %v730 = vpop.f32.mrf.mxu0
    %v731 = vadd.f32 %v607, %v730
    %v732 = vpop.f32.mrf.mxu0
    %733 = vmatprep.mubr.bf16.mxu0 0
    %734 = vmatmul.mubr.bf16.gmra.mxu0 %v634
    %v735 = vpop.f32.mrf.mxu0
    %v736 = vadd.f32 %v607, %v735
    %v737 = vpop.f32.mrf.mxu0
    %v738 = vpop.f32.mrf.mxu0
    %v739 = vadd.f32 %v607, %v738
    %v740 = vpop.f32.mrf.mxu0
    %741 = vmatprep.mubr.bf16.mxu0 0
    %742 = vmatmul.mubr.bf16.gmra.mxu0 %v637
    %v743 = vpop.f32.mrf.mxu0
    %v744 = vadd.f32 %v607, %v743
    %v745 = vpop.f32.mrf.mxu0
    %v746 = vpop.f32.mrf.mxu0
    %v747 = vadd.f32 %v607, %v746
    %v748 = vpop.f32.mrf.mxu0
    %749 = vmatprep.mubr.bf16.mxu0 0
    %750 = vmatmul.mubr.bf16.gmra.mxu0 %v640
    %v751 = vpop.f32.mrf.mxu0
    %v752 = vadd.f32 %v607, %v751
    %v753 = vpop.f32.mrf.mxu0
    %v754 = vpop.f32.mrf.mxu0
    %v755 = vadd.f32 %v607, %v754
    %v756 = vpop.f32.mrf.mxu0
    %757 = vmatprep.mubr.bf16.mxu0 0
    %758 = vmatmul.mubr.bf16.gmra.mxu0 %v643
    %v759 = vpop.f32.mrf.mxu0
    %v760 = vadd.f32 %v607, %v759
    %v761 = vpop.f32.mrf.mxu0
    %v762 = vpop.f32.mrf.mxu0
    %v763 = vadd.f32 %v607, %v762
    %v764 = vpop.f32.mrf.mxu0
    %765 = vmatprep.mubr.bf16.mxu0 0
    %766 = vmatmul.mubr.bf16.gmra.mxu0 %v646
    %v767 = vpop.f32.mrf.mxu0
    %v768 = vadd.f32 %v607, %v767
    %v769 = vpop.f32.mrf.mxu0
    %v770 = vpop.f32.mrf.mxu0
    %v771 = vadd.f32 %v607, %v770
    %v772 = vpop.f32.mrf.mxu0
    %773 = vmatprep.mubr.bf16.mxu0 0
    %774 = vmatmul.mubr.bf16.gmra.mxu0 %v649
    %v775 = vpop.f32.mrf.mxu0
    %v776 = vadd.f32 %v607, %v775
    %v777 = vpop.f32.mrf.mxu0
    %v778 = vpop.f32.mrf.mxu0
    %v779 = vadd.f32 %v607, %v778
    %v780 = vpop.f32.mrf.mxu0
    %781 = vmatprep.mubr.bf16.mxu0 0
    %782 = vmatmul.mubr.bf16.gmra.mxu0 %v652
    %v783 = vpop.f32.mrf.mxu0
    %v784 = vadd.f32 %v607, %v783
    %v785 = vpop.f32.mrf.mxu0
    %v786 = vpop.f32.mrf.mxu0
    %v787 = vadd.f32 %v607, %v786
    %v788 = vpop.f32.mrf.mxu0
    %789 = vmatprep.mubr.bf16.mxu0 0
    %790 = vmatmul.mubr.bf16.gmra.mxu0 %v655
    %v791 = vpop.f32.mrf.mxu0
    %v792 = vadd.f32 %v607, %v791
    %v793 = vpop.f32.mrf.mxu0
    %v794 = vpop.f32.mrf.mxu0
    %v795 = vadd.f32 %v607, %v794
    %v796 = vpop.f32.mrf.mxu0
    %797 = vmatprep.mubr.bf16.mxu0 0
    %798 = vmatmul.mubr.bf16.gmra.mxu0 %v658
    %v799 = vpop.f32.mrf.mxu0
    %v800 = vadd.f32 %v607, %v799
    %v801 = vpop.f32.mrf.mxu0
    %v802 = vpop.f32.mrf.mxu0
    %v803 = vadd.f32 %v607, %v802
    %v804 = vpop.f32.mrf.mxu0
    %805 = vmatprep.mubr.bf16.mxu0 0
    %806 = vmatmul.mubr.bf16.gmra.mxu0 %v661
    %v807 = vpop.f32.mrf.mxu0
    %v808 = vadd.f32 %v607, %v807
    %v809 = vpop.f32.mrf.mxu0
    %v810 = vpop.f32.mrf.mxu0
    %v811 = vadd.f32 %v607, %v810
    %v812 = vpop.f32.mrf.mxu0
    %813 = vmatprep.mubr.bf16.mxu0 0
    %814 = vmatmul.mubr.bf16.gmra.mxu0 %v664
    %v815 = vpop.f32.mrf.mxu0
    %v816 = vadd.f32 %v607, %v815
    %v817 = vpop.f32.mrf.mxu0
    %v818 = vpop.f32.mrf.mxu0
    %v819 = vadd.f32 %v607, %v818
    %v820 = vpop.f32.mrf.mxu0
    %821 = vmatprep.mubr.bf16.mxu0 0
    %822 = vmatmul.mubr.bf16.gmra.mxu0 %v667
    %v823 = vpop.f32.mrf.mxu0
    %v824 = vadd.f32 %v607, %v823
    %v825 = vpop.f32.mrf.mxu0
    %v826 = vpop.f32.mrf.mxu0
    %v827 = vadd.f32 %v607, %v826
    %v828 = vpop.f32.mrf.mxu0
    %829 = vdwg.mxu0
    %v830 = vpack.c.bf16 %v707, %v704
    %v831 = vpack.c.bf16 %v715, %v712
    %v832 = vpack.c.bf16 %v723, %v720
    %v833 = vpack.c.bf16 %v731, %v728
    %v834 = vpack.c.bf16 %v739, %v736
    %v835 = vpack.c.bf16 %v747, %v744
    %v836 = vpack.c.bf16 %v755, %v752
    %v837 = vpack.c.bf16 %v763, %v760
    %v838 = vpack.c.bf16 %v771, %v768
    %v839 = vpack.c.bf16 %v779, %v776
    %v840 = vpack.c.bf16 %v787, %v784
    %v841 = vpack.c.bf16 %v795, %v792
    %v842 = vpack.c.bf16 %v803, %v800
    %v843 = vpack.c.bf16 %v811, %v808
    %v844 = vpack.c.bf16 %v819, %v816
    %v845 = vpack.c.bf16 %v827, %v824
    %846 = vxpose.xlu0.b32.start [1/16] %v704, 128
    %847 = vxpose.xlu0.b32.cont [2/16] %v707, 128
    %848 = vxpose.xlu0.b32.cont [3/16] %v712, 128
    %849 = vxpose.xlu0.b32.cont [4/16] %v715, 128
    %850 = vxpose.xlu0.b32.cont [5/16] %v720, 128
    %851 = vxpose.xlu0.b32.cont [6/16] %v723, 128
    %852 = vxpose.xlu0.b32.cont [7/16] %v728, 128
    %853 = vxpose.xlu0.b32.cont [8/16] %v731, 128
    %854 = vxpose.xlu0.b32.cont [9/16] %v736, 128
    %855 = vxpose.xlu0.b32.cont [10/16] %v739, 128
    %856 = vxpose.xlu0.b32.cont [11/16] %v744, 128
    %857 = vxpose.xlu0.b32.cont [12/16] %v747, 128
    %858 = vxpose.xlu0.b32.cont [13/16] %v752, 128
    %859 = vxpose.xlu0.b32.cont [14/16] %v755, 128
    %860 = vxpose.xlu0.b32.cont [15/16] %v760, 128
    %861 = vxpose.xlu0.b32.end [16/16] %v763, 128
    %v862 = vpop.trf.xlu0
    %v863 = vpop.trf.xlu0
    %v864 = vpop.trf.xlu0
    %v865 = vpop.trf.xlu0
    %v866 = vpop.trf.xlu0
    %v867 = vpop.trf.xlu0
    %v868 = vpop.trf.xlu0
    %v869 = vpop.trf.xlu0
    %v870 = vpop.trf.xlu0
    %v871 = vpop.trf.xlu0
    %v872 = vpop.trf.xlu0
    %v873 = vpop.trf.xlu0
    %v874 = vpop.trf.xlu0
    %v875 = vpop.trf.xlu0
    %v876 = vpop.trf.xlu0
    %v877 = vpop.trf.xlu0
    %878 = vxpose.xlu0.b32.start [1/16] %v768, 128
    %879 = vxpose.xlu0.b32.cont [2/16] %v771, 128
    %880 = vxpose.xlu0.b32.cont [3/16] %v776, 128
    %881 = vxpose.xlu0.b32.cont [4/16] %v779, 128
    %882 = vxpose.xlu0.b32.cont [5/16] %v784, 128
    %883 = vxpose.xlu0.b32.cont [6/16] %v787, 128
    %884 = vxpose.xlu0.b32.cont [7/16] %v792, 128
    %885 = vxpose.xlu0.b32.cont [8/16] %v795, 128
    %886 = vxpose.xlu0.b32.cont [9/16] %v800, 128
    %887 = vxpose.xlu0.b32.cont [10/16] %v803, 128
    %888 = vxpose.xlu0.b32.cont [11/16] %v808, 128
    %889 = vxpose.xlu0.b32.cont [12/16] %v811, 128
    %890 = vxpose.xlu0.b32.cont [13/16] %v816, 128
    %891 = vxpose.xlu0.b32.cont [14/16] %v819, 128
    %892 = vxpose.xlu0.b32.cont [15/16] %v824, 128
    %893 = vxpose.xlu0.b32.end [16/16] %v827, 128
    %v894 = vpop.trf.xlu0
    %v895 = vpop.trf.xlu0
    %v896 = vpop.trf.xlu0
    %v897 = vpop.trf.xlu0
    %v898 = vpop.trf.xlu0
    %v899 = vpop.trf.xlu0
    %v900 = vpop.trf.xlu0
    %v901 = vpop.trf.xlu0
    %v902 = vpop.trf.xlu0
    %v903 = vpop.trf.xlu0
    %v904 = vpop.trf.xlu0
    %v905 = vpop.trf.xlu0
    %v906 = vpop.trf.xlu0
    %v907 = vpop.trf.xlu0
    %v908 = vpop.trf.xlu0
    %v909 = vpop.trf.xlu0
    %v910 = vpack.c.bf16 %v863, %v862
    %v911 = vpack.c.bf16 %v865, %v864
    %v912 = vpack.c.bf16 %v895, %v894
    %v913 = vpack.c.bf16 %v897, %v896
    %v914 = vld [vmem:[%s3] sm:$0xf]
    %v915 = vld [vmem:[%s3 + $0x4] sm:$0xf]
    %v916 = vld [vmem:[%s3 + $0x8] sm:$0xf]
    %v917 = vld [vmem:[%s3 + $0xc] sm:$0xf]
    %v918 = vld [vmem:[%s4] sm:$0x1]
    %v919 = vld [vmem:[%s7] sm:$0xf]
    %v920 = vld [vmem:[%s7 + $0x4] sm:$0xf]
    %v921 = vld [vmem:[%s7 + $0x8] sm:$0xf]
    %v922 = vld [vmem:[%s7 + $0xc] sm:$0xf]
    %v923 = vld [vmem:[%s8] sm:$0x1]
    %v924 = vld [vmem:[%s9] sm:$0xf]
    %v925 = vld [vmem:[%s9 + $0x4] sm:$0xf]
    %v926 = vld [vmem:[%s9 + $0x8] sm:$0xf]
    %v927 = vld [vmem:[%s9 + $0xc] sm:$0xf]
    %v928 = vld [vmem:[%s10] sm:$0x1]
    %v929 = vld [vmem:[%s11] sm:$0xf]
    %v930 = vld [vmem:[%s11 + $0x4] sm:$0xf]
    %v931 = vld [vmem:[%s11 + $0x8] sm:$0xf]
    %v932 = vld [vmem:[%s11 + $0xc] sm:$0xf]
    %v933 = vld [vmem:[%s12] sm:$0x1]
    %v934 = vld [vmem:[%s13] sm:$0xf]
    %v935 = vld [vmem:[%s13 + $0x4] sm:$0xf]
    %v936 = vld [vmem:[%s13 + $0x8] sm:$0xf]
    %v937 = vld [vmem:[%s13 + $0xc] sm:$0xf]
    %v938 = vld [vmem:[%s14] sm:$0x1]
    %v941 = vcombine.low %v89, %v90
    %v943 = vsel %vm92, %v941, 0.0
    %944 = vadd.xlane.f32.xlu0 %v943
    %v945 = vpop.xlane.xlu0 %944
    %v946 = vmul.f32 %v945, %v189
    %v949 = vunpack.c.l.s4 839922192
    %v950 = vunpack.c.0.s8 %v949
    %v951 = vlaneseq
    %v952 = vshrl.u32 %v951, 7
    %v953 = vsub.s32 %v950, %v952
    %v954 = vrot.slane %v946, %v953
    %v956 = vunpack.c.l.s4 1985246804
    %v957 = vunpack.c.0.s8 %v956
    %v958 = vlaneseq
    %v959 = vshrl.u32 %v958, 7
    %v960 = vsub.s32 %v957, %v959
    %v961 = vrot.slane %v946, %v960
    %v964 = vsub.f32 %v89, %v954
    %v965 = vsub.f32 %v90, %v961
    %v966 = vmul.f32 %v964, %v964
    %v967 = vmul.f32 %v965, %v965
    %v970 = vcombine.low %v966, %v967
    %v972 = vsel %vm92, %v970, 0.0
    %973 = vadd.xlane.f32.xlu0 %v972
    %v974 = vpop.xlane.xlu0 %973
    %v975 = vmul.f32 %v974, %v189
    %v976 = vadd.f32 %v975, 1e-05
    %v977 = vrsqrt.pop %v976
    %v980 = vunpack.c.l.s4 839922192
    %v981 = vunpack.c.0.s8 %v980
    %v982 = vlaneseq
    %v983 = vshrl.u32 %v982, 7
    %v984 = vsub.s32 %v981, %v983
    %v985 = vrot.slane %v977, %v984
    %v987 = vunpack.c.l.s4 1985246804
    %v988 = vunpack.c.0.s8 %v987
    %v989 = vlaneseq
    %v990 = vshrl.u32 %v989, 7
    %v991 = vsub.s32 %v988, %v990
    %v992 = vrot.slane %v977, %v991
    %v995 = vmul.f32 %v964, %v985
    %v996 = vmul.f32 %v965, %v992
    %v997 = vlaneseq
    %v998 = vshrl.u32 %v997, 7
    %v999 = vsub.s32 2, %v998
    %v1000 = vrot.slane %v91, %v999
    %v1002 = vcombine.high %v1000, %v1000
    %v1004 = vmul.f32 %v995, %v1000
    %v1005 = vmul.f32 %v996, %v1002
    %v1006 = vlaneseq
    %v1007 = vshrl.u32 %v1006, 7
    %v1008 = vsub.s32 3, %v1007
    %v1009 = vrot.slane %v91, %v1008
    %v1011 = vcombine.high %v1009, %v1009
    %v1013 = vadd.f32 %v1004, %v1009
    %v1014 = vadd.f32 %v1005, %v1011
    %v1017 = vcombine.low %v1013, %v1014
    %v1019 = vpack.c.bf16 %v1017, %v1017
    %v1021 = vlaneseq
    %v1022 = vshrl.u32 %v1021, 7
    %v1023 = vsub.s32 0, %v1022
    %v1024 = vrot.slane %v918, %v1023
    %v1030 = vunpack.c.l.b16 %v914
    %v1031 = vunpack.c.l.b16 %v915
    %v1032 = vunpack.c.l.b16 %v916
    %v1033 = vunpack.c.l.b16 %v917
    %v1034 = vpack.c.b16 %v1031, %v1030
    %v1035 = vpack.c.b16 %v1033, %v1032
    %v1039 = vsel %vm92, %v1019, 0
    %1041 = vmatprep.subr.bf16.mxu0 0
    %1042 = vmatpush1.bf16.msra.mxu0 0
    %1043 = vmatprep.subr.bf16.mxu0 0
    %1044 = vmatpush1.bf16.msra.mxu0 0
    %1045 = vmatprep.subr.bf16.mxu0 0
    %1046 = vmatpush1.bf16.msra.mxu0 0
    %1047 = vmatprep.subr.bf16.mxu0 0
    %1048 = vmatpush1.bf16.msra.mxu0 0
    %1049 = vmatprep.subr.bf16.mxu0 0
    %1050 = vmatpush1.bf16.msra.mxu0 0
    %1051 = vmatprep.subr.bf16.mxu0 0
    %1052 = vmatpush1.bf16.msra.mxu0 0
    %1053 = vmatprep.subr.bf16.mxu0 0
    %1054 = vmatpush1.bf16.msra.mxu0 %v1035
    %1055 = vmatprep.subr.bf16.mxu0 0
    %1056 = vmatpush1.bf16.msra.mxu0 %v1034
    %1057 = vmatprep.subr.bf16.mxu0 0
    %1058 = vmatpush2.bf16.msra.mxu0 0
    %1059 = vmatprep.subr.bf16.mxu0 0
    %1060 = vmatpush2.bf16.msra.mxu0 0
    %1061 = vmatprep.subr.bf16.mxu0 0
    %1062 = vmatpush2.bf16.msra.mxu0 0
    %1063 = vmatprep.subr.bf16.mxu0 0
    %1064 = vmatpush2.bf16.msra.mxu0 0
    %1065 = vmatprep.subr.bf16.mxu0 0
    %1066 = vmatpush2.bf16.msra.mxu0 0
    %1067 = vmatprep.subr.bf16.mxu0 0
    %1068 = vmatpush2.bf16.msra.mxu0 0
    %1069 = vmatprep.subr.bf16.mxu0 0
    %1070 = vmatpush2.bf16.msra.mxu0 0
    %1071 = vmatprep.subr.bf16.mxu0 0
    %1072 = vmatpush2.bf16.msra.mxu0 0
    %1073 = vmatprep.mubr.bf16.mxu0 0
    %1074 = vmatmul.mubr.bf16.gmra.mxu0 %v1039
    %v1075 = vpop.f32.mrf.mxu0
    %v1076 = vadd.f32 %v1024, %v1075
    %v1077 = vpop.f32.mrf.mxu0
    %v1078 = vpop.f32.mrf.mxu0
    %v1079 = vpop.f32.mrf.mxu0
    %1080 = vdwg.mxu0
    %v1082 = vcombine.high %v1076, %v1076
    %v1084 = vpack.c.bf16 %v1076, %v1076
    %v1085 = vpack.c.bf16 %v1082, %v1082
    %v1087 = vsel %vm92, %v1084, 0
    %1089 = vmatprep.subr.bf16.mxu0 0
    %1090 = vmatpush1.bf16.msra.mxu0 0
    %1091 = vmatprep.subr.bf16.mxu0 0
    %1092 = vmatpush1.bf16.msra.mxu0 0
    %1093 = vmatprep.subr.bf16.mxu0 0
    %1094 = vmatpush1.bf16.msra.mxu0 0
    %1095 = vmatprep.subr.bf16.mxu0 0
    %1096 = vmatpush1.bf16.msra.mxu0 0
    %1097 = vmatprep.subr.bf16.mxu0 0
    %1098 = vmatpush1.bf16.msra.mxu0 0
    %1099 = vmatprep.subr.bf16.mxu0 0
    %1100 = vmatpush1.bf16.msra.mxu0 0
    %1101 = vmatprep.subr.bf16.mxu0 0
    %1102 = vmatpush1.bf16.msra.mxu0 %v911
    %1103 = vmatprep.subr.bf16.mxu0 0
    %1104 = vmatpush1.bf16.msra.mxu0 %v910
    %1105 = vmatprep.subr.bf16.mxu0 0
    %1106 = vmatpush2.bf16.msra.mxu0 0
    %1107 = vmatprep.subr.bf16.mxu0 0
    %1108 = vmatpush2.bf16.msra.mxu0 0
    %1109 = vmatprep.subr.bf16.mxu0 0
    %1110 = vmatpush2.bf16.msra.mxu0 0
    %1111 = vmatprep.subr.bf16.mxu0 0
    %1112 = vmatpush2.bf16.msra.mxu0 0
    %1113 = vmatprep.subr.bf16.mxu0 0
    %1114 = vmatpush2.bf16.msra.mxu0 0
    %1115 = vmatprep.subr.bf16.mxu0 0
    %1116 = vmatpush2.bf16.msra.mxu0 0
    %1117 = vmatprep.subr.bf16.mxu0 0
    %1118 = vmatpush2.bf16.msra.mxu0 0
    %1119 = vmatprep.subr.bf16.mxu0 0
    %1120 = vmatpush2.bf16.msra.mxu0 0
    %1121 = vmatprep.mubr.bf16.mxu0 0
    %1122 = vmatmul.mubr.bf16.gmra.mxu0 %v1087
    %v1123 = vpop.f32.mrf.mxu0
    %v1124 = vadd.f32 0.0, %v1123
    %v1125 = vpop.f32.mrf.mxu0
    %v1126 = vpop.f32.mrf.mxu0
    %v1127 = vpop.f32.mrf.mxu0
    %1128 = vdwg.mxu0
    %v1130 = vsel %vm92, %v1085, 0
    %1132 = vmatprep.subr.bf16.mxu0 0
    %1133 = vmatpush1.bf16.msra.mxu0 0
    %1134 = vmatprep.subr.bf16.mxu0 0
    %1135 = vmatpush1.bf16.msra.mxu0 0
    %1136 = vmatprep.subr.bf16.mxu0 0
    %1137 = vmatpush1.bf16.msra.mxu0 0
    %1138 = vmatprep.subr.bf16.mxu0 0
    %1139 = vmatpush1.bf16.msra.mxu0 0
    %1140 = vmatprep.subr.bf16.mxu0 0
    %1141 = vmatpush1.bf16.msra.mxu0 0
    %1142 = vmatprep.subr.bf16.mxu0 0
    %1143 = vmatpush1.bf16.msra.mxu0 0
    %1144 = vmatprep.subr.bf16.mxu0 0
    %1145 = vmatpush1.bf16.msra.mxu0 %v913
    %1146 = vmatprep.subr.bf16.mxu0 0
    %1147 = vmatpush1.bf16.msra.mxu0 %v912
    %1148 = vmatprep.subr.bf16.mxu0 0
    %1149 = vmatpush2.bf16.msra.mxu0 0
    %1150 = vmatprep.subr.bf16.mxu0 0
    %1151 = vmatpush2.bf16.msra.mxu0 0
    %1152 = vmatprep.subr.bf16.mxu0 0
    %1153 = vmatpush2.bf16.msra.mxu0 0
    %1154 = vmatprep.subr.bf16.mxu0 0
    %1155 = vmatpush2.bf16.msra.mxu0 0
    %1156 = vmatprep.subr.bf16.mxu0 0
    %1157 = vmatpush2.bf16.msra.mxu0 0
    %1158 = vmatprep.subr.bf16.mxu0 0
    %1159 = vmatpush2.bf16.msra.mxu0 0
    %1160 = vmatprep.subr.bf16.mxu0 0
    %1161 = vmatpush2.bf16.msra.mxu0 0
    %1162 = vmatprep.subr.bf16.mxu0 0
    %1163 = vmatpush2.bf16.msra.mxu0 0
    %1164 = vmatprep.mubr.bf16.mxu0 0
    %1165 = vmatmul.mubr.bf16.gmra.mxu0 %v1130
    %v1166 = vpop.f32.mrf.mxu0
    %v1167 = vadd.f32 0.0, %v1166
    %v1168 = vpop.f32.mrf.mxu0
    %v1169 = vpop.f32.mrf.mxu0
    %v1170 = vpop.f32.mrf.mxu0
    %1171 = vdwg.mxu0
    %v1172 = vmul.f32 %v1124, 0.17677669
    %v1173 = vmul.f32 %v1167, 0.17677669
    %vm1174 = vcmask 1043456
    %v1175 = vsel %vm1174, %v1172, -inf
    %v1176 = vrot.slane %v1175, 4
    %v1177 = vmax.f32 %v1175, %v1176
    %v1178 = vrot.slane %v1177, 2
    %v1179 = vmax.f32 %v1177, %v1178
    %v1180 = vrot.slane %v1179, 1
    %v1181 = vmax.f32 %v1179, %v1180
    %v1182 = vsel %vm1174, %v1173, -inf
    %v1183 = vrot.slane %v1182, 4
    %v1184 = vmax.f32 %v1182, %v1183
    %v1185 = vrot.slane %v1184, 2
    %v1186 = vmax.f32 %v1184, %v1185
    %v1187 = vrot.slane %v1186, 1
    %v1188 = vmax.f32 %v1186, %v1187
    %v1189 = vsub.f32 %v1172, %v1181
    %v1190 = vsub.f32 %v1173, %v1188
    %v1191 = vmul.f32 %v1189, 1.442695
    %v1192 = vpow.pop %v1191
    %v1193 = vmul.f32 %v1190, 1.442695
    %v1194 = vpow.pop %v1193
    %v1195 = vsel %vm1174, %v1192, 0.0
    %v1196 = vrot.slane %v1195, 4
    %v1197 = vadd.f32 %v1195, %v1196
    %v1198 = vrot.slane %v1197, 2
    %v1199 = vadd.f32 %v1197, %v1198
    %v1200 = vrot.slane %v1199, 1
    %v1201 = vadd.f32 %v1199, %v1200
    %v1202 = vsel %vm1174, %v1194, 0.0
    %v1203 = vrot.slane %v1202, 4
    %v1204 = vadd.f32 %v1202, %v1203
    %v1205 = vrot.slane %v1204, 2
    %v1206 = vadd.f32 %v1204, %v1205
    %v1207 = vrot.slane %v1206, 1
    %v1208 = vadd.f32 %v1206, %v1207
    %v1209 = vrcp.pop %v1201
    %v1210 = vrcp.pop %v1208
    %v1211 = vmul.f32 %v1192, %v1209
    %v1212 = vmul.f32 %v1194, %v1210
    %v1213 = vadd.f32 %v1211, 1e-08
    %v1214 = vadd.f32 %v1212, 1e-08
    %v1217 = vlaneseq
    %v1218 = vshrl.u32 %v1217, 7
    %v1219 = vsub.s32 0, %v1218
    %v1220 = vrot.slane %v87, %v1219
    %v1221 = vlaneseq
    %v1222 = vshrl.u32 %v1221, 7
    %v1223 = vsub.s32 0, %v1222
    %v1224 = vrot.slane %v88, %v1223
    %v1227 = vmul.f32 %v1213, %v1220
    %v1228 = vmul.f32 %v1214, %v1224
    %v1229 = vsel %vm1174, %v1227, 0.0
    %1230 = vadd.xlane.f32.xlu0 %v1229
    %v1231 = vpop.xlane.xlu0 %1230
    %v1232 = vsel %vm1174, %v1228, 0.0
    %1233 = vadd.xlane.f32.xlu0 %v1232
    %v1234 = vpop.xlane.xlu0 %1233
    %v1235 = vrcp.pop %v1231
    %v1236 = vrcp.pop %v1234
    %v1237 = vmul.f32 %v1227, %v1235
    %v1238 = vmul.f32 %v1228, %v1236
    %v1239 = vpack.c.bf16 %v1237, %v1237
    %v1240 = vpack.c.bf16 %v1238, %v1238
    %1249 = vrot.lane.b32.xlu0 %v830, 96
    %v1250 = vpop.permute.xlu0 %1249
    %1251 = vrot.lane.b32.xlu0 %v831, 96
    %v1252 = vpop.permute.xlu0 %1251
    %1253 = vrot.lane.b32.xlu0 %v832, 96
    %v1254 = vpop.permute.xlu0 %1253
    %1255 = vrot.lane.b32.xlu0 %v833, 96
    %v1256 = vpop.permute.xlu0 %1255
    %1257 = vrot.lane.b32.xlu0 %v834, 96
    %v1258 = vpop.permute.xlu0 %1257
    %1259 = vrot.lane.b32.xlu0 %v835, 96
    %v1260 = vpop.permute.xlu0 %1259
    %1261 = vrot.lane.b32.xlu0 %v836, 96
    %v1262 = vpop.permute.xlu0 %1261
    %1263 = vrot.lane.b32.xlu0 %v837, 96
    %v1264 = vpop.permute.xlu0 %1263
    %1273 = vmatprep.subr.bf16.mxu0 0
    %1274 = vmatpush1.bf16.msra.mxu0 %v1264
    %1275 = vmatprep.subr.bf16.mxu0 0
    %1276 = vmatpush1.bf16.msra.mxu0 %v1262
    %1277 = vmatprep.subr.bf16.mxu0 0
    %1278 = vmatpush1.bf16.msra.mxu0 %v1260
    %1279 = vmatprep.subr.bf16.mxu0 0
    %1280 = vmatpush1.bf16.msra.mxu0 %v1258
    %1281 = vmatprep.subr.bf16.mxu0 0
    %1282 = vmatpush1.bf16.msra.mxu0 %v1256
    %1283 = vmatprep.subr.bf16.mxu0 0
    %1284 = vmatpush1.bf16.msra.mxu0 %v1254
    %1285 = vmatprep.subr.bf16.mxu0 0
    %1286 = vmatpush1.bf16.msra.mxu0 %v1252
    %1287 = vmatprep.subr.bf16.mxu0 0
    %1288 = vmatpush1.bf16.msra.mxu0 %v1250
    %1289 = vmatprep.subr.bf16.mxu0 0
    %1290 = vmatpush2.bf16.msra.mxu0 0
    %1291 = vmatprep.subr.bf16.mxu0 0
    %1292 = vmatpush2.bf16.msra.mxu0 0
    %1293 = vmatprep.subr.bf16.mxu0 0
    %1294 = vmatpush2.bf16.msra.mxu0 0
    %1295 = vmatprep.subr.bf16.mxu0 0
    %1296 = vmatpush2.bf16.msra.mxu0 0
    %1297 = vmatprep.subr.bf16.mxu0 0
    %1298 = vmatpush2.bf16.msra.mxu0 0
    %1299 = vmatprep.subr.bf16.mxu0 0
    %1300 = vmatpush2.bf16.msra.mxu0 0
    %1301 = vmatprep.subr.bf16.mxu0 0
    %1302 = vmatpush2.bf16.msra.mxu0 0
    %1303 = vmatprep.subr.bf16.mxu0 0
    %1304 = vmatpush2.bf16.msra.mxu0 0
    %1305 = vmatprep.mubr.bf16.mxu0 0
    %1306 = vmatmul.mubr.bf16.gmra.mxu0 %v1239
    %v1307 = vpop.f32.mrf.mxu0
    %v1308 = vadd.f32 0.0, %v1307
    %v1309 = vpop.f32.mrf.mxu0
    %v1310 = vpop.f32.mrf.mxu0
    %v1311 = vpop.f32.mrf.mxu0
    %1312 = vdwg.mxu0
    %1321 = vrot.lane.b32.xlu0 %v838, 96
    %v1322 = vpop.permute.xlu0 %1321
    %1323 = vrot.lane.b32.xlu0 %v839, 96
    %v1324 = vpop.permute.xlu0 %1323
    %1325 = vrot.lane.b32.xlu0 %v840, 96
    %v1326 = vpop.permute.xlu0 %1325
    %1327 = vrot.lane.b32.xlu0 %v841, 96
    %v1328 = vpop.permute.xlu0 %1327
    %1329 = vrot.lane.b32.xlu0 %v842, 96
    %v1330 = vpop.permute.xlu0 %1329
    %1331 = vrot.lane.b32.xlu0 %v843, 96
    %v1332 = vpop.permute.xlu0 %1331
    %1333 = vrot.lane.b32.xlu0 %v844, 96
    %v1334 = vpop.permute.xlu0 %1333
    %1335 = vrot.lane.b32.xlu0 %v845, 96
    %v1336 = vpop.permute.xlu0 %1335
    %1345 = vmatprep.subr.bf16.mxu0 0
    %1346 = vmatpush1.bf16.msra.mxu0 %v1336
    %1347 = vmatprep.subr.bf16.mxu0 0
    %1348 = vmatpush1.bf16.msra.mxu0 %v1334
    %1349 = vmatprep.subr.bf16.mxu0 0
    %1350 = vmatpush1.bf16.msra.mxu0 %v1332
    %1351 = vmatprep.subr.bf16.mxu0 0
    %1352 = vmatpush1.bf16.msra.mxu0 %v1330
    %1353 = vmatprep.subr.bf16.mxu0 0
    %1354 = vmatpush1.bf16.msra.mxu0 %v1328
    %1355 = vmatprep.subr.bf16.mxu0 0
    %1356 = vmatpush1.bf16.msra.mxu0 %v1326
    %1357 = vmatprep.subr.bf16.mxu0 0
    %1358 = vmatpush1.bf16.msra.mxu0 %v1324
    %1359 = vmatprep.subr.bf16.mxu0 0
    %1360 = vmatpush1.bf16.msra.mxu0 %v1322
    %1361 = vmatprep.subr.bf16.mxu0 0
    %1362 = vmatpush2.bf16.msra.mxu0 0
    %1363 = vmatprep.subr.bf16.mxu0 0
    %1364 = vmatpush2.bf16.msra.mxu0 0
    %1365 = vmatprep.subr.bf16.mxu0 0
    %1366 = vmatpush2.bf16.msra.mxu0 0
    %1367 = vmatprep.subr.bf16.mxu0 0
    %1368 = vmatpush2.bf16.msra.mxu0 0
    %1369 = vmatprep.subr.bf16.mxu0 0
    %1370 = vmatpush2.bf16.msra.mxu0 0
    %1371 = vmatprep.subr.bf16.mxu0 0
    %1372 = vmatpush2.bf16.msra.mxu0 0
    %1373 = vmatprep.subr.bf16.mxu0 0
    %1374 = vmatpush2.bf16.msra.mxu0 0
    %1375 = vmatprep.subr.bf16.mxu0 0
    %1376 = vmatpush2.bf16.msra.mxu0 0
    %1377 = vmatprep.mubr.bf16.mxu0 0
    %1378 = vmatmul.mubr.bf16.gmra.mxu0 %v1240
    %v1379 = vpop.f32.mrf.mxu0
    %v1380 = vadd.f32 0.0, %v1379
    %v1381 = vpop.f32.mrf.mxu0
    %v1382 = vpop.f32.mrf.mxu0
    %v1383 = vpop.f32.mrf.mxu0
    %1384 = vdwg.mxu0
    %v1387 = vcombine.low %v1308, %v1380
    %v1389 = vpack.c.bf16 %v1387, %v1387
    %v1391 = vlaneseq
    %v1392 = vshrl.u32 %v1391, 7
    %v1393 = vsub.s32 0, %v1392
    %v1394 = vrot.slane %v923, %v1393
    %v1400 = vunpack.c.l.b16 %v919
    %v1401 = vunpack.c.l.b16 %v920
    %v1402 = vunpack.c.l.b16 %v921
    %v1403 = vunpack.c.l.b16 %v922
    %v1404 = vpack.c.b16 %v1401, %v1400
    %v1405 = vpack.c.b16 %v1403, %v1402
    %v1409 = vsel %vm92, %v1389, 0
    %1411 = vmatprep.subr.bf16.mxu0 0
    %1412 = vmatpush1.bf16.msra.mxu0 0
    %1413 = vmatprep.subr.bf16.mxu0 0
    %1414 = vmatpush1.bf16.msra.mxu0 0
    %1415 = vmatprep.subr.bf16.mxu0 0
    %1416 = vmatpush1.bf16.msra.mxu0 0
    %1417 = vmatprep.subr.bf16.mxu0 0
    %1418 = vmatpush1.bf16.msra.mxu0 0
    %1419 = vmatprep.subr.bf16.mxu0 0
    %1420 = vmatpush1.bf16.msra.mxu0 0
    %1421 = vmatprep.subr.bf16.mxu0 0
    %1422 = vmatpush1.bf16.msra.mxu0 0
    %1423 = vmatprep.subr.bf16.mxu0 0
    %1424 = vmatpush1.bf16.msra.mxu0 %v1405
    %1425 = vmatprep.subr.bf16.mxu0 0
    %1426 = vmatpush1.bf16.msra.mxu0 %v1404
    %1427 = vmatprep.subr.bf16.mxu0 0
    %1428 = vmatpush2.bf16.msra.mxu0 0
    %1429 = vmatprep.subr.bf16.mxu0 0
    %1430 = vmatpush2.bf16.msra.mxu0 0
    %1431 = vmatprep.subr.bf16.mxu0 0
    %1432 = vmatpush2.bf16.msra.mxu0 0
    %1433 = vmatprep.subr.bf16.mxu0 0
    %1434 = vmatpush2.bf16.msra.mxu0 0
    %1435 = vmatprep.subr.bf16.mxu0 0
    %1436 = vmatpush2.bf16.msra.mxu0 0
    %1437 = vmatprep.subr.bf16.mxu0 0
    %1438 = vmatpush2.bf16.msra.mxu0 0
    %1439 = vmatprep.subr.bf16.mxu0 0
    %1440 = vmatpush2.bf16.msra.mxu0 0
    %1441 = vmatprep.subr.bf16.mxu0 0
    %1442 = vmatpush2.bf16.msra.mxu0 0
    %1443 = vmatprep.mubr.bf16.mxu0 0
    %1444 = vmatmul.mubr.bf16.gmra.mxu0 %v1409
    %v1445 = vpop.f32.mrf.mxu0
    %v1446 = vadd.f32 %v1394, %v1445
    %v1447 = vpop.f32.mrf.mxu0
    %v1448 = vpop.f32.mrf.mxu0
    %v1449 = vpop.f32.mrf.mxu0
    %1450 = vdwg.mxu0
    %v1451 = vpack.c.bf16 %v941, %v941
    %v1453 = vlaneseq
    %v1454 = vshrl.u32 %v1453, 7
    %v1455 = vsub.s32 0, %v1454
    %v1456 = vrot.slane %v928, %v1455
    %v1462 = vunpack.c.l.b16 %v924
    %v1463 = vunpack.c.l.b16 %v925
    %v1464 = vunpack.c.l.b16 %v926
    %v1465 = vunpack.c.l.b16 %v927
    %v1466 = vpack.c.b16 %v1463, %v1462
    %v1467 = vpack.c.b16 %v1465, %v1464
    %v1471 = vsel %vm92, %v1451, 0
    %1473 = vmatprep.subr.bf16.mxu0 0
    %1474 = vmatpush1.bf16.msra.mxu0 0
    %1475 = vmatprep.subr.bf16.mxu0 0
    %1476 = vmatpush1.bf16.msra.mxu0 0
    %1477 = vmatprep.subr.bf16.mxu0 0
    %1478 = vmatpush1.bf16.msra.mxu0 0
    %1479 = vmatprep.subr.bf16.mxu0 0
    %1480 = vmatpush1.bf16.msra.mxu0 0
    %1481 = vmatprep.subr.bf16.mxu0 0
    %1482 = vmatpush1.bf16.msra.mxu0 0
    %1483 = vmatprep.subr.bf16.mxu0 0
    %1484 = vmatpush1.bf16.msra.mxu0 0
    %1485 = vmatprep.subr.bf16.mxu0 0
    %1486 = vmatpush1.bf16.msra.mxu0 %v1467
    %1487 = vmatprep.subr.bf16.mxu0 0
    %1488 = vmatpush1.bf16.msra.mxu0 %v1466
    %1489 = vmatprep.subr.bf16.mxu0 0
    %1490 = vmatpush2.bf16.msra.mxu0 0
    %1491 = vmatprep.subr.bf16.mxu0 0
    %1492 = vmatpush2.bf16.msra.mxu0 0
    %1493 = vmatprep.subr.bf16.mxu0 0
    %1494 = vmatpush2.bf16.msra.mxu0 0
    %1495 = vmatprep.subr.bf16.mxu0 0
    %1496 = vmatpush2.bf16.msra.mxu0 0
    %1497 = vmatprep.subr.bf16.mxu0 0
    %1498 = vmatpush2.bf16.msra.mxu0 0
    %1499 = vmatprep.subr.bf16.mxu0 0
    %1500 = vmatpush2.bf16.msra.mxu0 0
    %1501 = vmatprep.subr.bf16.mxu0 0
    %1502 = vmatpush2.bf16.msra.mxu0 0
    %1503 = vmatprep.subr.bf16.mxu0 0
    %1504 = vmatpush2.bf16.msra.mxu0 0
    %1505 = vmatprep.mubr.bf16.mxu0 0
    %1506 = vmatmul.mubr.bf16.gmra.mxu0 %v1471
    %v1507 = vpop.f32.mrf.mxu0
    %v1508 = vadd.f32 %v1456, %v1507
    %v1509 = vpop.f32.mrf.mxu0
    %v1510 = vpop.f32.mrf.mxu0
    %v1511 = vpop.f32.mrf.mxu0
    %1512 = vdwg.mxu0
    %v1513 = vadd.f32 %v1446, %v1508
    %v1514 = vxor.u32 %v1513, 2147483648
    %v1515 = vmul.f32 %v1514, 1.442695
    %v1516 = vpow.pop %v1515
    %v1517 = vadd.f32 %v1516, 1.0
    %v1518 = vrcp.pop %v1517
    %v1519 = vmul.f32 1.0, %v1518
    %1521 = vrot.lane.b32.xlu0 %v1508, 64
    %v1522 = vpop.permute.xlu0 %1521
    %v1524 = vmul.f32 %v1519, %v1522
    %1526 = vrot.lane.b32.xlu0 %v1524, 64
    %v1527 = vpop.permute.xlu0 %1526
    %v1529 = vadd.f32 %v1446, %v1527
    %v1530 = vtanh.pop %v1529
    %v1531 = vsub.f32 1.0, %v1519
    %1533 = vrot.lane.b32.xlu0 %v1530, 96
    %v1534 = vpop.permute.xlu0 %1533
    %v1536 = vmul.f32 %v1531, %v1534
    %1537 = vrot.lane.b32.xlu0 %v941, 32
    %v1538 = vpop.permute.xlu0 %1537
    %v1540 = vmul.f32 %v1519, %v1538
    %v1541 = vadd.f32 %v1536, %v1540
    %1543 = vrot.lane.b32.xlu0 %v1541, 96
    %v1544 = vpop.permute.xlu0 %1543
    %v1546 = vsel %vm92, %v1544, 0.0
    %1547 = vadd.xlane.f32.xlu0 %v1546
    %v1548 = vpop.xlane.xlu0 %1547
    %v1549 = vmul.f32 %v1548, %v189
    %v1550 = vsub.f32 %v1541, %v1549
    %v1551 = vmul.f32 %v1550, %v1550
    %1553 = vrot.lane.b32.xlu0 %v1551, 96
    %v1554 = vpop.permute.xlu0 %1553
    %v1556 = vsel %vm92, %v1554, 0.0
    %1557 = vadd.xlane.f32.xlu0 %v1556
    %v1558 = vpop.xlane.xlu0 %1557
    %v1559 = vmul.f32 %v1558, %v189
    %v1560 = vadd.f32 %v1559, 1e-05
    %v1561 = vrsqrt.pop %v1560
    %v1562 = vmul.f32 %v1550, %v1561
    %v1563 = vlaneseq
    %v1564 = vshrl.u32 %v1563, 7
    %v1565 = vsub.s32 4, %v1564
    %v1566 = vrot.slane %v91, %v1565
    %1568 = vrot.lane.b32.xlu0 %v1566, 32
    %v1569 = vpop.permute.xlu0 %1568
    %v1571 = vmul.f32 %v1562, %v1569
    %v1572 = vlaneseq
    %v1573 = vshrl.u32 %v1572, 7
    %v1574 = vsub.s32 5, %v1573
    %v1575 = vrot.slane %v91, %v1574
    %1577 = vrot.lane.b32.xlu0 %v1575, 32
    %v1578 = vpop.permute.xlu0 %1577
    %v1580 = vadd.f32 %v1571, %v1578
    %v1581 = vpack.c.bf16 %v1580, %v1580
    %v1583 = vlaneseq
    %v1584 = vshrl.u32 %v1583, 7
    %v1585 = vsub.s32 0, %v1584
    %v1586 = vrot.slane %v933, %v1585
    %1589 = vrot.lane.b32.xlu0 %v1581, 96
    %v1590 = vpop.permute.xlu0 %1589
    %v1595 = vunpack.c.l.b16 %v929
    %v1596 = vunpack.c.l.b16 %v930
    %v1597 = vunpack.c.l.b16 %v931
    %v1598 = vunpack.c.l.b16 %v932
    %v1599 = vpack.c.b16 %v1596, %v1595
    %v1600 = vpack.c.b16 %v1598, %v1597
    %v1604 = vsel %vm92, %v1590, 0
    %1606 = vmatprep.subr.bf16.mxu0 0
    %1607 = vmatpush1.bf16.msra.mxu0 0
    %1608 = vmatprep.subr.bf16.mxu0 0
    %1609 = vmatpush1.bf16.msra.mxu0 0
    %1610 = vmatprep.subr.bf16.mxu0 0
    %1611 = vmatpush1.bf16.msra.mxu0 0
    %1612 = vmatprep.subr.bf16.mxu0 0
    %1613 = vmatpush1.bf16.msra.mxu0 0
    %1614 = vmatprep.subr.bf16.mxu0 0
    %1615 = vmatpush1.bf16.msra.mxu0 0
    %1616 = vmatprep.subr.bf16.mxu0 0
    %1617 = vmatpush1.bf16.msra.mxu0 0
    %1618 = vmatprep.subr.bf16.mxu0 0
    %1619 = vmatpush1.bf16.msra.mxu0 %v1600
    %1620 = vmatprep.subr.bf16.mxu0 0
    %1621 = vmatpush1.bf16.msra.mxu0 %v1599
    %1622 = vmatprep.subr.bf16.mxu0 0
    %1623 = vmatpush2.bf16.msra.mxu0 0
    %1624 = vmatprep.subr.bf16.mxu0 0
    %1625 = vmatpush2.bf16.msra.mxu0 0
    %1626 = vmatprep.subr.bf16.mxu0 0
    %1627 = vmatpush2.bf16.msra.mxu0 0
    %1628 = vmatprep.subr.bf16.mxu0 0
    %1629 = vmatpush2.bf16.msra.mxu0 0
    %1630 = vmatprep.subr.bf16.mxu0 0
    %1631 = vmatpush2.bf16.msra.mxu0 0
    %1632 = vmatprep.subr.bf16.mxu0 0
    %1633 = vmatpush2.bf16.msra.mxu0 0
    %1634 = vmatprep.subr.bf16.mxu0 0
    %1635 = vmatpush2.bf16.msra.mxu0 0
    %1636 = vmatprep.subr.bf16.mxu0 0
    %1637 = vmatpush2.bf16.msra.mxu0 0
    %1638 = vmatprep.mubr.bf16.mxu0 0
    %1639 = vmatmul.mubr.bf16.gmra.mxu0 %v1604
    %v1640 = vpop.f32.mrf.mxu0
    %v1641 = vadd.f32 %v1586, %v1640
    %v1642 = vpop.f32.mrf.mxu0
    %v1643 = vpop.f32.mrf.mxu0
    %v1644 = vpop.f32.mrf.mxu0
    %1645 = vdwg.mxu0
    %v1646 = vmax.f32 %v1641, 0.0
    %v1647 = vpack.c.bf16 %v1646, %v1646
    %v1652 = vunpack.c.l.b16 %v934
    %v1653 = vunpack.c.l.b16 %v935
    %v1654 = vunpack.c.l.b16 %v936
    %v1655 = vunpack.c.l.b16 %v937
    %v1656 = vpack.c.b16 %v1653, %v1652
    %v1657 = vpack.c.b16 %v1655, %v1654
    %v1661 = vsel %vm92, %v1647, 0
    %1663 = vmatprep.subr.bf16.mxu0 0
    %1664 = vmatpush1.bf16.msra.mxu0 0
    %1665 = vmatprep.subr.bf16.mxu0 0
    %1666 = vmatpush1.bf16.msra.mxu0 0
    %1667 = vmatprep.subr.bf16.mxu0 0
    %1668 = vmatpush1.bf16.msra.mxu0 0
    %1669 = vmatprep.subr.bf16.mxu0 0
    %1670 = vmatpush1.bf16.msra.mxu0 0
    %1671 = vmatprep.subr.bf16.mxu0 0
    %1672 = vmatpush1.bf16.msra.mxu0 0
    %1673 = vmatprep.subr.bf16.mxu0 0
    %1674 = vmatpush1.bf16.msra.mxu0 0
    %1675 = vmatprep.subr.bf16.mxu0 0
    %1676 = vmatpush1.bf16.msra.mxu0 %v1657
    %1677 = vmatprep.subr.bf16.mxu0 0
    %1678 = vmatpush1.bf16.msra.mxu0 %v1656
    %1679 = vmatprep.subr.bf16.mxu0 0
    %1680 = vmatpush2.bf16.msra.mxu0 0
    %1681 = vmatprep.subr.bf16.mxu0 0
    %1682 = vmatpush2.bf16.msra.mxu0 0
    %1683 = vmatprep.subr.bf16.mxu0 0
    %1684 = vmatpush2.bf16.msra.mxu0 0
    %1685 = vmatprep.subr.bf16.mxu0 0
    %1686 = vmatpush2.bf16.msra.mxu0 0
    %1687 = vmatprep.subr.bf16.mxu0 0
    %1688 = vmatpush2.bf16.msra.mxu0 0
    %1689 = vmatprep.subr.bf16.mxu0 0
    %1690 = vmatpush2.bf16.msra.mxu0 0
    %1691 = vmatprep.subr.bf16.mxu0 0
    %1692 = vmatpush2.bf16.msra.mxu0 0
    %1693 = vmatprep.subr.bf16.mxu0 0
    %1694 = vmatpush2.bf16.msra.mxu0 0
    %1695 = vmatprep.mubr.bf16.mxu0 0
    %1696 = vmatmul.mubr.bf16.gmra.mxu0 %v1661
    %v1697 = vpop.f32.mrf.mxu0
    %v1698 = vadd.f32 0.0, %v1697
    %v1699 = vpop.f32.mrf.mxu0
    %v1700 = vpop.f32.mrf.mxu0
    %v1701 = vpop.f32.mrf.mxu0
    %1702 = vdwg.mxu0
    %1704 = vrot.lane.b32.xlu0 %v1698, 32
    %v1705 = vpop.permute.xlu0 %1704
    %v1707 = vadd.f32 %v1541, %v1705
    %v1709 = vlaneseq
    %v1710 = vshrl.u32 %v1709, 7
    %v1711 = vsub.s32 0, %v1710
    %v1712 = vrot.slane %v938, %v1711
    %1713 = vrot.lane.b32.xlu0 %v1712, 32
    %v1714 = vpop.permute.xlu0 %1713
    %v1716 = vadd.f32 %v1707, %v1714
    %1718 = vrot.lane.b32.xlu0 %v1716, 96
    %v1719 = vpop.permute.xlu0 %1718
    %v1721 = vsel %vm92, %v1719, 0.0
    %1722 = vadd.xlane.f32.xlu0 %v1721
    %v1723 = vpop.xlane.xlu0 %1722
    %v1724 = vmul.f32 %v1723, %v189
    %v1725 = vsub.f32 %v1716, %v1724
    %v1726 = vmul.f32 %v1725, %v1725
    %1728 = vrot.lane.b32.xlu0 %v1726, 96
    %v1729 = vpop.permute.xlu0 %1728
    %v1731 = vsel %vm92, %v1729, 0.0
    %1732 = vadd.xlane.f32.xlu0 %v1731
    %v1733 = vpop.xlane.xlu0 %1732
    %v1734 = vmul.f32 %v1733, %v189
    %v1735 = vadd.f32 %v1734, 1e-05
    %v1736 = vrsqrt.pop %v1735
    %v1737 = vmul.f32 %v1725, %v1736
    %1738 = vrot.lane.b32.xlu0 %v1000, 32
    %v1739 = vpop.permute.xlu0 %1738
    %v1741 = vmul.f32 %v1737, %v1739
    %1742 = vrot.lane.b32.xlu0 %v1009, 32
    %v1743 = vpop.permute.xlu0 %1742
    %v1745 = vadd.f32 %v1741, %v1743
    %v1746 = vpack.c.bf16 %v1745, %v1745
    %1748 = vrot.lane.b32.xlu0 %v1746, 96
    %v1749 = vpop.permute.xlu0 %1748
    %v1751 = vsel %vm92, %v1749, 0
    %1753 = vmatprep.subr.bf16.mxu0 0
    %1754 = vmatpush1.bf16.msra.mxu0 0
    %1755 = vmatprep.subr.bf16.mxu0 0
    %1756 = vmatpush1.bf16.msra.mxu0 0
    %1757 = vmatprep.subr.bf16.mxu0 0
    %1758 = vmatpush1.bf16.msra.mxu0 0
    %1759 = vmatprep.subr.bf16.mxu0 0
    %1760 = vmatpush1.bf16.msra.mxu0 0
    %1761 = vmatprep.subr.bf16.mxu0 0
    %1762 = vmatpush1.bf16.msra.mxu0 0
    %1763 = vmatprep.subr.bf16.mxu0 0
    %1764 = vmatpush1.bf16.msra.mxu0 0
    %1765 = vmatprep.subr.bf16.mxu0 0
    %1766 = vmatpush1.bf16.msra.mxu0 %v1035
    %1767 = vmatprep.subr.bf16.mxu0 0
    %1768 = vmatpush1.bf16.msra.mxu0 %v1034
    %1769 = vmatprep.subr.bf16.mxu0 0
    %1770 = vmatpush2.bf16.msra.mxu0 0
    %1771 = vmatprep.subr.bf16.mxu0 0
    %1772 = vmatpush2.bf16.msra.mxu0 0
    %1773 = vmatprep.subr.bf16.mxu0 0
    %1774 = vmatpush2.bf16.msra.mxu0 0
    %1775 = vmatprep.subr.bf16.mxu0 0
    %1776 = vmatpush2.bf16.msra.mxu0 0
    %1777 = vmatprep.subr.bf16.mxu0 0
    %1778 = vmatpush2.bf16.msra.mxu0 0
    %1779 = vmatprep.subr.bf16.mxu0 0
    %1780 = vmatpush2.bf16.msra.mxu0 0
    %1781 = vmatprep.subr.bf16.mxu0 0
    %1782 = vmatpush2.bf16.msra.mxu0 0
    %1783 = vmatprep.subr.bf16.mxu0 0
    %1784 = vmatpush2.bf16.msra.mxu0 0
    %1785 = vmatprep.mubr.bf16.mxu0 0
    %1786 = vmatmul.mubr.bf16.gmra.mxu0 %v1751
    %v1787 = vpop.f32.mrf.mxu0
    %v1788 = vadd.f32 %v1024, %v1787
    %v1789 = vpop.f32.mrf.mxu0
    %v1790 = vpop.f32.mrf.mxu0
    %v1791 = vpop.f32.mrf.mxu0
    %1792 = vdwg.mxu0
    %v1794 = vcombine.high %v1788, %v1788
    %v1796 = vpack.c.bf16 %v1788, %v1788
    %v1797 = vpack.c.bf16 %v1794, %v1794
    %v1799 = vsel %vm92, %v1796, 0
    %1801 = vmatprep.subr.bf16.mxu0 0
    %1802 = vmatpush1.bf16.msra.mxu0 0
    %1803 = vmatprep.subr.bf16.mxu0 0
    %1804 = vmatpush1.bf16.msra.mxu0 0
    %1805 = vmatprep.subr.bf16.mxu0 0
    %1806 = vmatpush1.bf16.msra.mxu0 0
    %1807 = vmatprep.subr.bf16.mxu0 0
    %1808 = vmatpush1.bf16.msra.mxu0 0
    %1809 = vmatprep.subr.bf16.mxu0 0
    %1810 = vmatpush1.bf16.msra.mxu0 0
    %1811 = vmatprep.subr.bf16.mxu0 0
    %1812 = vmatpush1.bf16.msra.mxu0 0
    %1813 = vmatprep.subr.bf16.mxu0 0
    %1814 = vmatpush1.bf16.msra.mxu0 %v911
    %1815 = vmatprep.subr.bf16.mxu0 0
    %1816 = vmatpush1.bf16.msra.mxu0 %v910
    %1817 = vmatprep.subr.bf16.mxu0 0
    %1818 = vmatpush2.bf16.msra.mxu0 0
    %1819 = vmatprep.subr.bf16.mxu0 0
    %1820 = vmatpush2.bf16.msra.mxu0 0
    %1821 = vmatprep.subr.bf16.mxu0 0
    %1822 = vmatpush2.bf16.msra.mxu0 0
    %1823 = vmatprep.subr.bf16.mxu0 0
    %1824 = vmatpush2.bf16.msra.mxu0 0
    %1825 = vmatprep.subr.bf16.mxu0 0
    %1826 = vmatpush2.bf16.msra.mxu0 0
    %1827 = vmatprep.subr.bf16.mxu0 0
    %1828 = vmatpush2.bf16.msra.mxu0 0
    %1829 = vmatprep.subr.bf16.mxu0 0
    %1830 = vmatpush2.bf16.msra.mxu0 0
    %1831 = vmatprep.subr.bf16.mxu0 0
    %1832 = vmatpush2.bf16.msra.mxu0 0
    %1833 = vmatprep.mubr.bf16.mxu0 0
    %1834 = vmatmul.mubr.bf16.gmra.mxu0 %v1799
    %v1835 = vpop.f32.mrf.mxu0
    %v1836 = vadd.f32 0.0, %v1835
    %v1837 = vpop.f32.mrf.mxu0
    %v1838 = vpop.f32.mrf.mxu0
    %v1839 = vpop.f32.mrf.mxu0
    %1840 = vdwg.mxu0
    %v1842 = vsel %vm92, %v1797, 0
    %1844 = vmatprep.subr.bf16.mxu0 0
    %1845 = vmatpush1.bf16.msra.mxu0 0
    %1846 = vmatprep.subr.bf16.mxu0 0
    %1847 = vmatpush1.bf16.msra.mxu0 0
    %1848 = vmatprep.subr.bf16.mxu0 0
    %1849 = vmatpush1.bf16.msra.mxu0 0
    %1850 = vmatprep.subr.bf16.mxu0 0
    %1851 = vmatpush1.bf16.msra.mxu0 0
    %1852 = vmatprep.subr.bf16.mxu0 0
    %1853 = vmatpush1.bf16.msra.mxu0 0
    %1854 = vmatprep.subr.bf16.mxu0 0
    %1855 = vmatpush1.bf16.msra.mxu0 0
    %1856 = vmatprep.subr.bf16.mxu0 0
    %1857 = vmatpush1.bf16.msra.mxu0 %v913
    %1858 = vmatprep.subr.bf16.mxu0 0
    %1859 = vmatpush1.bf16.msra.mxu0 %v912
    %1860 = vmatprep.subr.bf16.mxu0 0
    %1861 = vmatpush2.bf16.msra.mxu0 0
    %1862 = vmatprep.subr.bf16.mxu0 0
    %1863 = vmatpush2.bf16.msra.mxu0 0
    %1864 = vmatprep.subr.bf16.mxu0 0
    %1865 = vmatpush2.bf16.msra.mxu0 0
    %1866 = vmatprep.subr.bf16.mxu0 0
    %1867 = vmatpush2.bf16.msra.mxu0 0
    %1868 = vmatprep.subr.bf16.mxu0 0
    %1869 = vmatpush2.bf16.msra.mxu0 0
    %1870 = vmatprep.subr.bf16.mxu0 0
    %1871 = vmatpush2.bf16.msra.mxu0 0
    %1872 = vmatprep.subr.bf16.mxu0 0
    %1873 = vmatpush2.bf16.msra.mxu0 0
    %1874 = vmatprep.subr.bf16.mxu0 0
    %1875 = vmatpush2.bf16.msra.mxu0 0
    %1876 = vmatprep.mubr.bf16.mxu0 0
    %1877 = vmatmul.mubr.bf16.gmra.mxu0 %v1842
    %v1878 = vpop.f32.mrf.mxu0
    %v1879 = vadd.f32 0.0, %v1878
    %v1880 = vpop.f32.mrf.mxu0
    %v1881 = vpop.f32.mrf.mxu0
    %v1882 = vpop.f32.mrf.mxu0
    %1883 = vdwg.mxu0
    %v1884 = vmul.f32 %v1836, 0.17677669
    %v1885 = vmul.f32 %v1879, 0.17677669
    %v1886 = vsel %vm1174, %v1884, -inf
    %v1887 = vrot.slane %v1886, 4
    %v1888 = vmax.f32 %v1886, %v1887
    %v1889 = vrot.slane %v1888, 2
    %v1890 = vmax.f32 %v1888, %v1889
    %v1891 = vrot.slane %v1890, 1
    %v1892 = vmax.f32 %v1890, %v1891
    %v1893 = vsel %vm1174, %v1885, -inf
    %v1894 = vrot.slane %v1893, 4
    %v1895 = vmax.f32 %v1893, %v1894
    %v1896 = vrot.slane %v1895, 2
    %v1897 = vmax.f32 %v1895, %v1896
    %v1898 = vrot.slane %v1897, 1
    %v1899 = vmax.f32 %v1897, %v1898
    %v1900 = vsub.f32 %v1884, %v1892
    %v1901 = vsub.f32 %v1885, %v1899
    %v1902 = vmul.f32 %v1900, 1.442695
    %v1903 = vpow.pop %v1902
    %v1904 = vmul.f32 %v1901, 1.442695
    %v1905 = vpow.pop %v1904
    %v1906 = vsel %vm1174, %v1903, 0.0
    %v1907 = vrot.slane %v1906, 4
    %v1908 = vadd.f32 %v1906, %v1907
    %v1909 = vrot.slane %v1908, 2
    %v1910 = vadd.f32 %v1908, %v1909
    %v1911 = vrot.slane %v1910, 1
    %v1912 = vadd.f32 %v1910, %v1911
    %v1913 = vsel %vm1174, %v1905, 0.0
    %v1914 = vrot.slane %v1913, 4
    %v1915 = vadd.f32 %v1913, %v1914
    %v1916 = vrot.slane %v1915, 2
    %v1917 = vadd.f32 %v1915, %v1916
    %v1918 = vrot.slane %v1917, 1
    %v1919 = vadd.f32 %v1917, %v1918
    %v1920 = vrcp.pop %v1912
    %v1921 = vrcp.pop %v1919
    %v1922 = vmul.f32 %v1903, %v1920
    %v1923 = vmul.f32 %v1905, %v1921
    %v1924 = vadd.f32 %v1922, 1e-08
    %v1925 = vadd.f32 %v1923, 1e-08
    %v1926 = vmul.f32 %v1924, %v1220
    %v1927 = vmul.f32 %v1925, %v1224
    %v1928 = vsel %vm1174, %v1926, 0.0
    %1929 = vadd.xlane.f32.xlu0 %v1928
    %v1930 = vpop.xlane.xlu0 %1929
    %v1931 = vsel %vm1174, %v1927, 0.0
    %1932 = vadd.xlane.f32.xlu0 %v1931
    %v1933 = vpop.xlane.xlu0 %1932
    %v1934 = vrcp.pop %v1930
    %v1935 = vrcp.pop %v1933
    %v1936 = vmul.f32 %v1926, %v1934
    %v1937 = vmul.f32 %v1927, %v1935
    %v1938 = vpack.c.bf16 %v1936, %v1936
    %v1939 = vpack.c.bf16 %v1937, %v1937
    %1940 = vmatprep.subr.bf16.mxu0 0
    %1941 = vmatpush1.bf16.msra.mxu0 %v1264
    %1942 = vmatprep.subr.bf16.mxu0 0
    %1943 = vmatpush1.bf16.msra.mxu0 %v1262
    %1944 = vmatprep.subr.bf16.mxu0 0
    %1945 = vmatpush1.bf16.msra.mxu0 %v1260
    %1946 = vmatprep.subr.bf16.mxu0 0
    %1947 = vmatpush1.bf16.msra.mxu0 %v1258
    %1948 = vmatprep.subr.bf16.mxu0 0
    %1949 = vmatpush1.bf16.msra.mxu0 %v1256
    %1950 = vmatprep.subr.bf16.mxu0 0
    %1951 = vmatpush1.bf16.msra.mxu0 %v1254
    %1952 = vmatprep.subr.bf16.mxu0 0
    %1953 = vmatpush1.bf16.msra.mxu0 %v1252
    %1954 = vmatprep.subr.bf16.mxu0 0
    %1955 = vmatpush1.bf16.msra.mxu0 %v1250
    %1956 = vmatprep.subr.bf16.mxu0 0
    %1957 = vmatpush2.bf16.msra.mxu0 0
    %1958 = vmatprep.subr.bf16.mxu0 0
    %1959 = vmatpush2.bf16.msra.mxu0 0
    %1960 = vmatprep.subr.bf16.mxu0 0
    %1961 = vmatpush2.bf16.msra.mxu0 0
    %1962 = vmatprep.subr.bf16.mxu0 0
    %1963 = vmatpush2.bf16.msra.mxu0 0
    %1964 = vmatprep.subr.bf16.mxu0 0
    %1965 = vmatpush2.bf16.msra.mxu0 0
    %1966 = vmatprep.subr.bf16.mxu0 0
    %1967 = vmatpush2.bf16.msra.mxu0 0
    %1968 = vmatprep.subr.bf16.mxu0 0
    %1969 = vmatpush2.bf16.msra.mxu0 0
    %1970 = vmatprep.subr.bf16.mxu0 0
    %1971 = vmatpush2.bf16.msra.mxu0 0
    %1972 = vmatprep.mubr.bf16.mxu0 0
    %1973 = vmatmul.mubr.bf16.gmra.mxu0 %v1938
    %v1974 = vpop.f32.mrf.mxu0
    %v1975 = vadd.f32 0.0, %v1974
    %v1976 = vpop.f32.mrf.mxu0
    %v1977 = vpop.f32.mrf.mxu0
    %v1978 = vpop.f32.mrf.mxu0
    %1979 = vdwg.mxu0
    %1980 = vmatprep.subr.bf16.mxu0 0
    %1981 = vmatpush1.bf16.msra.mxu0 %v1336
    %1982 = vmatprep.subr.bf16.mxu0 0
    %1983 = vmatpush1.bf16.msra.mxu0 %v1334
    %1984 = vmatprep.subr.bf16.mxu0 0
    %1985 = vmatpush1.bf16.msra.mxu0 %v1332
    %1986 = vmatprep.subr.bf16.mxu0 0
    %1987 = vmatpush1.bf16.msra.mxu0 %v1330
    %1988 = vmatprep.subr.bf16.mxu0 0
    %1989 = vmatpush1.bf16.msra.mxu0 %v1328
    %1990 = vmatprep.subr.bf16.mxu0 0
    %1991 = vmatpush1.bf16.msra.mxu0 %v1326
    %1992 = vmatprep.subr.bf16.mxu0 0
    %1993 = vmatpush1.bf16.msra.mxu0 %v1324
    %1994 = vmatprep.subr.bf16.mxu0 0
    %1995 = vmatpush1.bf16.msra.mxu0 %v1322
    %1996 = vmatprep.subr.bf16.mxu0 0
    %1997 = vmatpush2.bf16.msra.mxu0 0
    %1998 = vmatprep.subr.bf16.mxu0 0
    %1999 = vmatpush2.bf16.msra.mxu0 0
    %2000 = vmatprep.subr.bf16.mxu0 0
    %2001 = vmatpush2.bf16.msra.mxu0 0
    %2002 = vmatprep.subr.bf16.mxu0 0
    %2003 = vmatpush2.bf16.msra.mxu0 0
    %2004 = vmatprep.subr.bf16.mxu0 0
    %2005 = vmatpush2.bf16.msra.mxu0 0
    %2006 = vmatprep.subr.bf16.mxu0 0
    %2007 = vmatpush2.bf16.msra.mxu0 0
    %2008 = vmatprep.subr.bf16.mxu0 0
    %2009 = vmatpush2.bf16.msra.mxu0 0
    %2010 = vmatprep.subr.bf16.mxu0 0
    %2011 = vmatpush2.bf16.msra.mxu0 0
    %2012 = vmatprep.mubr.bf16.mxu0 0
    %2013 = vmatmul.mubr.bf16.gmra.mxu0 %v1939
    %v2014 = vpop.f32.mrf.mxu0
    %v2015 = vadd.f32 0.0, %v2014
    %v2016 = vpop.f32.mrf.mxu0
    %v2017 = vpop.f32.mrf.mxu0
    %v2018 = vpop.f32.mrf.mxu0
    %2019 = vdwg.mxu0
    %v2022 = vcombine.low %v1975, %v2015
    %v2024 = vpack.c.bf16 %v2022, %v2022
    %v2026 = vsel %vm92, %v2024, 0
    %2028 = vmatprep.subr.bf16.mxu0 0
    %2029 = vmatpush1.bf16.msra.mxu0 0
    %2030 = vmatprep.subr.bf16.mxu0 0
    %2031 = vmatpush1.bf16.msra.mxu0 0
    %2032 = vmatprep.subr.bf16.mxu0 0
    %2033 = vmatpush1.bf16.msra.mxu0 0
    %2034 = vmatprep.subr.bf16.mxu0 0
    %2035 = vmatpush1.bf16.msra.mxu0 0
    %2036 = vmatprep.subr.bf16.mxu0 0
    %2037 = vmatpush1.bf16.msra.mxu0 0
    %2038 = vmatprep.subr.bf16.mxu0 0
    %2039 = vmatpush1.bf16.msra.mxu0 0
    %2040 = vmatprep.subr.bf16.mxu0 0
    %2041 = vmatpush1.bf16.msra.mxu0 %v1405
    %2042 = vmatprep.subr.bf16.mxu0 0
    %2043 = vmatpush1.bf16.msra.mxu0 %v1404
    %2044 = vmatprep.subr.bf16.mxu0 0
    %2045 = vmatpush2.bf16.msra.mxu0 0
    %2046 = vmatprep.subr.bf16.mxu0 0
    %2047 = vmatpush2.bf16.msra.mxu0 0
    %2048 = vmatprep.subr.bf16.mxu0 0
    %2049 = vmatpush2.bf16.msra.mxu0 0
    %2050 = vmatprep.subr.bf16.mxu0 0
    %2051 = vmatpush2.bf16.msra.mxu0 0
    %2052 = vmatprep.subr.bf16.mxu0 0
    %2053 = vmatpush2.bf16.msra.mxu0 0
    %2054 = vmatprep.subr.bf16.mxu0 0
    %2055 = vmatpush2.bf16.msra.mxu0 0
    %2056 = vmatprep.subr.bf16.mxu0 0
    %2057 = vmatpush2.bf16.msra.mxu0 0
    %2058 = vmatprep.subr.bf16.mxu0 0
    %2059 = vmatpush2.bf16.msra.mxu0 0
    %2060 = vmatprep.mubr.bf16.mxu0 0
    %2061 = vmatmul.mubr.bf16.gmra.mxu0 %v2026
    %v2062 = vpop.f32.mrf.mxu0
    %v2063 = vadd.f32 %v1394, %v2062
    %v2064 = vpop.f32.mrf.mxu0
    %v2065 = vpop.f32.mrf.mxu0
    %v2066 = vpop.f32.mrf.mxu0
    %2067 = vdwg.mxu0
    %v2068 = vpack.c.bf16 %v1716, %v1716
    %2070 = vrot.lane.b32.xlu0 %v2068, 96
    %v2071 = vpop.permute.xlu0 %2070
    %v2073 = vsel %vm92, %v2071, 0
    %2075 = vmatprep.subr.bf16.mxu0 0
    %2076 = vmatpush1.bf16.msra.mxu0 0
    %2077 = vmatprep.subr.bf16.mxu0 0
    %2078 = vmatpush1.bf16.msra.mxu0 0
    %2079 = vmatprep.subr.bf16.mxu0 0
    %2080 = vmatpush1.bf16.msra.mxu0 0
    %2081 = vmatprep.subr.bf16.mxu0 0
    %2082 = vmatpush1.bf16.msra.mxu0 0
    %2083 = vmatprep.subr.bf16.mxu0 0
    %2084 = vmatpush1.bf16.msra.mxu0 0
    %2085 = vmatprep.subr.bf16.mxu0 0
    %2086 = vmatpush1.bf16.msra.mxu0 0
    %2087 = vmatprep.subr.bf16.mxu0 0
    %2088 = vmatpush1.bf16.msra.mxu0 %v1467
    %2089 = vmatprep.subr.bf16.mxu0 0
    %2090 = vmatpush1.bf16.msra.mxu0 %v1466
    %2091 = vmatprep.subr.bf16.mxu0 0
    %2092 = vmatpush2.bf16.msra.mxu0 0
    %2093 = vmatprep.subr.bf16.mxu0 0
    %2094 = vmatpush2.bf16.msra.mxu0 0
    %2095 = vmatprep.subr.bf16.mxu0 0
    %2096 = vmatpush2.bf16.msra.mxu0 0
    %2097 = vmatprep.subr.bf16.mxu0 0
    %2098 = vmatpush2.bf16.msra.mxu0 0
    %2099 = vmatprep.subr.bf16.mxu0 0
    %2100 = vmatpush2.bf16.msra.mxu0 0
    %2101 = vmatprep.subr.bf16.mxu0 0
    %2102 = vmatpush2.bf16.msra.mxu0 0
    %2103 = vmatprep.subr.bf16.mxu0 0
    %2104 = vmatpush2.bf16.msra.mxu0 0
    %2105 = vmatprep.subr.bf16.mxu0 0
    %2106 = vmatpush2.bf16.msra.mxu0 0
    %2107 = vmatprep.mubr.bf16.mxu0 0
    %2108 = vmatmul.mubr.bf16.gmra.mxu0 %v2073
    %v2109 = vpop.f32.mrf.mxu0
    %v2110 = vadd.f32 %v1456, %v2109
    %v2111 = vpop.f32.mrf.mxu0
    %v2112 = vpop.f32.mrf.mxu0
    %v2113 = vpop.f32.mrf.mxu0
    %2114 = vdwg.mxu0
    %v2115 = vadd.f32 %v2063, %v2110
    %v2116 = vxor.u32 %v2115, 2147483648
    %v2117 = vmul.f32 %v2116, 1.442695
    %v2118 = vpow.pop %v2117
    %v2119 = vadd.f32 %v2118, 1.0
    %v2120 = vrcp.pop %v2119
    %v2121 = vmul.f32 1.0, %v2120
    %2123 = vrot.lane.b32.xlu0 %v2110, 64
    %v2124 = vpop.permute.xlu0 %2123
    %v2126 = vmul.f32 %v2121, %v2124
    %2128 = vrot.lane.b32.xlu0 %v2126, 64
    %v2129 = vpop.permute.xlu0 %2128
    %v2131 = vadd.f32 %v2063, %v2129
    %v2132 = vtanh.pop %v2131
    %v2133 = vsub.f32 1.0, %v2121
    %2135 = vrot.lane.b32.xlu0 %v2132, 96
    %v2136 = vpop.permute.xlu0 %2135
    %v2138 = vmul.f32 %v2133, %v2136
    %v2139 = vmul.f32 %v2121, %v1716
    %v2140 = vadd.f32 %v2138, %v2139
    %2142 = vrot.lane.b32.xlu0 %v2140, 96
    %v2143 = vpop.permute.xlu0 %2142
    %v2145 = vsel %vm92, %v2143, 0.0
    %2146 = vadd.xlane.f32.xlu0 %v2145
    %v2147 = vpop.xlane.xlu0 %2146
    %v2148 = vmul.f32 %v2147, %v189
    %v2149 = vsub.f32 %v2140, %v2148
    %v2150 = vmul.f32 %v2149, %v2149
    %2152 = vrot.lane.b32.xlu0 %v2150, 96
    %v2153 = vpop.permute.xlu0 %2152
    %v2155 = vsel %vm92, %v2153, 0.0
    %2156 = vadd.xlane.f32.xlu0 %v2155
    %v2157 = vpop.xlane.xlu0 %2156
    %v2158 = vmul.f32 %v2157, %v189
    %v2159 = vadd.f32 %v2158, 1e-05
    %v2160 = vrsqrt.pop %v2159
    %v2161 = vmul.f32 %v2149, %v2160
    %v2162 = vmul.f32 %v2161, %v1569
    %v2163 = vadd.f32 %v2162, %v1578
    %v2164 = vpack.c.bf16 %v2163, %v2163
    %2166 = vrot.lane.b32.xlu0 %v2164, 96
    %v2167 = vpop.permute.xlu0 %2166
    %v2169 = vsel %vm92, %v2167, 0
    %2171 = vmatprep.subr.bf16.mxu0 0
    %2172 = vmatpush1.bf16.msra.mxu0 0
    %2173 = vmatprep.subr.bf16.mxu0 0
    %2174 = vmatpush1.bf16.msra.mxu0 0
    %2175 = vmatprep.subr.bf16.mxu0 0
    %2176 = vmatpush1.bf16.msra.mxu0 0
    %2177 = vmatprep.subr.bf16.mxu0 0
    %2178 = vmatpush1.bf16.msra.mxu0 0
    %2179 = vmatprep.subr.bf16.mxu0 0
    %2180 = vmatpush1.bf16.msra.mxu0 0
    %2181 = vmatprep.subr.bf16.mxu0 0
    %2182 = vmatpush1.bf16.msra.mxu0 0
    %2183 = vmatprep.subr.bf16.mxu0 0
    %2184 = vmatpush1.bf16.msra.mxu0 %v1600
    %2185 = vmatprep.subr.bf16.mxu0 0
    %2186 = vmatpush1.bf16.msra.mxu0 %v1599
    %2187 = vmatprep.subr.bf16.mxu0 0
    %2188 = vmatpush2.bf16.msra.mxu0 0
    %2189 = vmatprep.subr.bf16.mxu0 0
    %2190 = vmatpush2.bf16.msra.mxu0 0
    %2191 = vmatprep.subr.bf16.mxu0 0
    %2192 = vmatpush2.bf16.msra.mxu0 0
    %2193 = vmatprep.subr.bf16.mxu0 0
    %2194 = vmatpush2.bf16.msra.mxu0 0
    %2195 = vmatprep.subr.bf16.mxu0 0
    %2196 = vmatpush2.bf16.msra.mxu0 0
    %2197 = vmatprep.subr.bf16.mxu0 0
    %2198 = vmatpush2.bf16.msra.mxu0 0
    %2199 = vmatprep.subr.bf16.mxu0 0
    %2200 = vmatpush2.bf16.msra.mxu0 0
    %2201 = vmatprep.subr.bf16.mxu0 0
    %2202 = vmatpush2.bf16.msra.mxu0 0
    %2203 = vmatprep.mubr.bf16.mxu0 0
    %2204 = vmatmul.mubr.bf16.gmra.mxu0 %v2169
    %v2205 = vpop.f32.mrf.mxu0
    %v2206 = vadd.f32 %v1586, %v2205
    %v2207 = vpop.f32.mrf.mxu0
    %v2208 = vpop.f32.mrf.mxu0
    %v2209 = vpop.f32.mrf.mxu0
    %2210 = vdwg.mxu0
    %v2211 = vmax.f32 %v2206, 0.0
    %v2212 = vpack.c.bf16 %v2211, %v2211
    %v2214 = vsel %vm92, %v2212, 0
    %2216 = vmatprep.subr.bf16.mxu0 0
    %2217 = vmatpush1.bf16.msra.mxu0 0
    %2218 = vmatprep.subr.bf16.mxu0 0
    %2219 = vmatpush1.bf16.msra.mxu0 0
    %2220 = vmatprep.subr.bf16.mxu0 0
    %2221 = vmatpush1.bf16.msra.mxu0 0
    %2222 = vmatprep.subr.bf16.mxu0 0
    %2223 = vmatpush1.bf16.msra.mxu0 0
    %2224 = vmatprep.subr.bf16.mxu0 0
    %2225 = vmatpush1.bf16.msra.mxu0 0
    %2226 = vmatprep.subr.bf16.mxu0 0
    %2227 = vmatpush1.bf16.msra.mxu0 0
    %2228 = vmatprep.subr.bf16.mxu0 0
    %2229 = vmatpush1.bf16.msra.mxu0 %v1657
    %2230 = vmatprep.subr.bf16.mxu0 0
    %2231 = vmatpush1.bf16.msra.mxu0 %v1656
    %2232 = vmatprep.subr.bf16.mxu0 0
    %2233 = vmatpush2.bf16.msra.mxu0 0
    %2234 = vmatprep.subr.bf16.mxu0 0
    %2235 = vmatpush2.bf16.msra.mxu0 0
    %2236 = vmatprep.subr.bf16.mxu0 0
    %2237 = vmatpush2.bf16.msra.mxu0 0
    %2238 = vmatprep.subr.bf16.mxu0 0
    %2239 = vmatpush2.bf16.msra.mxu0 0
    %2240 = vmatprep.subr.bf16.mxu0 0
    %2241 = vmatpush2.bf16.msra.mxu0 0
    %2242 = vmatprep.subr.bf16.mxu0 0
    %2243 = vmatpush2.bf16.msra.mxu0 0
    %2244 = vmatprep.subr.bf16.mxu0 0
    %2245 = vmatpush2.bf16.msra.mxu0 0
    %2246 = vmatprep.subr.bf16.mxu0 0
    %2247 = vmatpush2.bf16.msra.mxu0 0
    %2248 = vmatprep.mubr.bf16.mxu0 0
    %2249 = vmatmul.mubr.bf16.gmra.mxu0 %v2214
    %v2250 = vpop.f32.mrf.mxu0
    %v2251 = vadd.f32 0.0, %v2250
    %v2252 = vpop.f32.mrf.mxu0
    %v2253 = vpop.f32.mrf.mxu0
    %v2254 = vpop.f32.mrf.mxu0
    %2255 = vdwg.mxu0
    %2257 = vrot.lane.b32.xlu0 %v2251, 32
    %v2258 = vpop.permute.xlu0 %2257
    %v2260 = vadd.f32 %v2140, %v2258
    %v2261 = vadd.f32 %v2260, %v1714
    %2263 = vrot.lane.b32.xlu0 %v2261, 96
    %v2264 = vpop.permute.xlu0 %2263
    %v2266 = vsel %vm92, %v2264, 0.0
    %2267 = vadd.xlane.f32.xlu0 %v2266
    %v2268 = vpop.xlane.xlu0 %2267
    %v2269 = vmul.f32 %v2268, %v189
    %v2270 = vsub.f32 %v2261, %v2269
    %v2271 = vmul.f32 %v2270, %v2270
    %2273 = vrot.lane.b32.xlu0 %v2271, 96
    %v2274 = vpop.permute.xlu0 %2273
    %v2276 = vsel %vm92, %v2274, 0.0
    %2277 = vadd.xlane.f32.xlu0 %v2276
    %v2278 = vpop.xlane.xlu0 %2277
    %v2279 = vmul.f32 %v2278, %v189
    %v2280 = vadd.f32 %v2279, 1e-05
    %v2281 = vrsqrt.pop %v2280
    %v2282 = vmul.f32 %v2270, %v2281
    %v2283 = vmul.f32 %v2282, %v1739
    %v2284 = vadd.f32 %v2283, %v1743
    %v2285 = vpack.c.bf16 %v2284, %v2284
    %2287 = vrot.lane.b32.xlu0 %v2285, 96
    %v2288 = vpop.permute.xlu0 %2287
    %v2290 = vsel %vm92, %v2288, 0
    %2292 = vmatprep.subr.bf16.mxu0 0
    %2293 = vmatpush1.bf16.msra.mxu0 0
    %2294 = vmatprep.subr.bf16.mxu0 0
    %2295 = vmatpush1.bf16.msra.mxu0 0
    %2296 = vmatprep.subr.bf16.mxu0 0
    %2297 = vmatpush1.bf16.msra.mxu0 0
    %2298 = vmatprep.subr.bf16.mxu0 0
    %2299 = vmatpush1.bf16.msra.mxu0 0
    %2300 = vmatprep.subr.bf16.mxu0 0
    %2301 = vmatpush1.bf16.msra.mxu0 0
    %2302 = vmatprep.subr.bf16.mxu0 0
    %2303 = vmatpush1.bf16.msra.mxu0 0
    %2304 = vmatprep.subr.bf16.mxu0 0
    %2305 = vmatpush1.bf16.msra.mxu0 %v1035
    %2306 = vmatprep.subr.bf16.mxu0 0
    %2307 = vmatpush1.bf16.msra.mxu0 %v1034
    %2308 = vmatprep.subr.bf16.mxu0 0
    %2309 = vmatpush2.bf16.msra.mxu0 0
    %2310 = vmatprep.subr.bf16.mxu0 0
    %2311 = vmatpush2.bf16.msra.mxu0 0
    %2312 = vmatprep.subr.bf16.mxu0 0
    %2313 = vmatpush2.bf16.msra.mxu0 0
    %2314 = vmatprep.subr.bf16.mxu0 0
    %2315 = vmatpush2.bf16.msra.mxu0 0
    %2316 = vmatprep.subr.bf16.mxu0 0
    %2317 = vmatpush2.bf16.msra.mxu0 0
    %2318 = vmatprep.subr.bf16.mxu0 0
    %2319 = vmatpush2.bf16.msra.mxu0 0
    %2320 = vmatprep.subr.bf16.mxu0 0
    %2321 = vmatpush2.bf16.msra.mxu0 0
    %2322 = vmatprep.subr.bf16.mxu0 0
    %2323 = vmatpush2.bf16.msra.mxu0 0
    %2324 = vmatprep.mubr.bf16.mxu0 0
    %2325 = vmatmul.mubr.bf16.gmra.mxu0 %v2290
    %v2326 = vpop.f32.mrf.mxu0
    %v2327 = vadd.f32 %v1024, %v2326
    %v2328 = vpop.f32.mrf.mxu0
    %v2329 = vpop.f32.mrf.mxu0
    %v2330 = vpop.f32.mrf.mxu0
    %2331 = vdwg.mxu0
    %v2333 = vcombine.high %v2327, %v2327
    %v2335 = vpack.c.bf16 %v2327, %v2327
    %v2336 = vpack.c.bf16 %v2333, %v2333
    %v2338 = vsel %vm92, %v2335, 0
    %2340 = vmatprep.subr.bf16.mxu0 0
    %2341 = vmatpush1.bf16.msra.mxu0 0
    %2342 = vmatprep.subr.bf16.mxu0 0
    %2343 = vmatpush1.bf16.msra.mxu0 0
    %2344 = vmatprep.subr.bf16.mxu0 0
    %2345 = vmatpush1.bf16.msra.mxu0 0
    %2346 = vmatprep.subr.bf16.mxu0 0
    %2347 = vmatpush1.bf16.msra.mxu0 0
    %2348 = vmatprep.subr.bf16.mxu0 0
    %2349 = vmatpush1.bf16.msra.mxu0 0
    %2350 = vmatprep.subr.bf16.mxu0 0
    %2351 = vmatpush1.bf16.msra.mxu0 0
    %2352 = vmatprep.subr.bf16.mxu0 0
    %2353 = vmatpush1.bf16.msra.mxu0 %v911
    %2354 = vmatprep.subr.bf16.mxu0 0
    %2355 = vmatpush1.bf16.msra.mxu0 %v910
    %2356 = vmatprep.subr.bf16.mxu0 0
    %2357 = vmatpush2.bf16.msra.mxu0 0
    %2358 = vmatprep.subr.bf16.mxu0 0
    %2359 = vmatpush2.bf16.msra.mxu0 0
    %2360 = vmatprep.subr.bf16.mxu0 0
    %2361 = vmatpush2.bf16.msra.mxu0 0
    %2362 = vmatprep.subr.bf16.mxu0 0
    %2363 = vmatpush2.bf16.msra.mxu0 0
    %2364 = vmatprep.subr.bf16.mxu0 0
    %2365 = vmatpush2.bf16.msra.mxu0 0
    %2366 = vmatprep.subr.bf16.mxu0 0
    %2367 = vmatpush2.bf16.msra.mxu0 0
    %2368 = vmatprep.subr.bf16.mxu0 0
    %2369 = vmatpush2.bf16.msra.mxu0 0
    %2370 = vmatprep.subr.bf16.mxu0 0
    %2371 = vmatpush2.bf16.msra.mxu0 0
    %2372 = vmatprep.mubr.bf16.mxu0 0
    %2373 = vmatmul.mubr.bf16.gmra.mxu0 %v2338
    %v2374 = vpop.f32.mrf.mxu0
    %v2375 = vadd.f32 0.0, %v2374
    %v2376 = vpop.f32.mrf.mxu0
    %v2377 = vpop.f32.mrf.mxu0
    %v2378 = vpop.f32.mrf.mxu0
    %2379 = vdwg.mxu0
    %v2381 = vsel %vm92, %v2336, 0
    %2383 = vmatprep.subr.bf16.mxu0 0
    %2384 = vmatpush1.bf16.msra.mxu0 0
    %2385 = vmatprep.subr.bf16.mxu0 0
    %2386 = vmatpush1.bf16.msra.mxu0 0
    %2387 = vmatprep.subr.bf16.mxu0 0
    %2388 = vmatpush1.bf16.msra.mxu0 0
    %2389 = vmatprep.subr.bf16.mxu0 0
    %2390 = vmatpush1.bf16.msra.mxu0 0
    %2391 = vmatprep.subr.bf16.mxu0 0
    %2392 = vmatpush1.bf16.msra.mxu0 0
    %2393 = vmatprep.subr.bf16.mxu0 0
    %2394 = vmatpush1.bf16.msra.mxu0 0
    %2395 = vmatprep.subr.bf16.mxu0 0
    %2396 = vmatpush1.bf16.msra.mxu0 %v913
    %2397 = vmatprep.subr.bf16.mxu0 0
    %2398 = vmatpush1.bf16.msra.mxu0 %v912
    %2399 = vmatprep.subr.bf16.mxu0 0
    %2400 = vmatpush2.bf16.msra.mxu0 0
    %2401 = vmatprep.subr.bf16.mxu0 0
    %2402 = vmatpush2.bf16.msra.mxu0 0
    %2403 = vmatprep.subr.bf16.mxu0 0
    %2404 = vmatpush2.bf16.msra.mxu0 0
    %2405 = vmatprep.subr.bf16.mxu0 0
    %2406 = vmatpush2.bf16.msra.mxu0 0
    %2407 = vmatprep.subr.bf16.mxu0 0
    %2408 = vmatpush2.bf16.msra.mxu0 0
    %2409 = vmatprep.subr.bf16.mxu0 0
    %2410 = vmatpush2.bf16.msra.mxu0 0
    %2411 = vmatprep.subr.bf16.mxu0 0
    %2412 = vmatpush2.bf16.msra.mxu0 0
    %2413 = vmatprep.subr.bf16.mxu0 0
    %2414 = vmatpush2.bf16.msra.mxu0 0
    %2415 = vmatprep.mubr.bf16.mxu0 0
    %2416 = vmatmul.mubr.bf16.gmra.mxu0 %v2381
    %v2417 = vpop.f32.mrf.mxu0
    %v2418 = vadd.f32 0.0, %v2417
    %v2419 = vpop.f32.mrf.mxu0
    %v2420 = vpop.f32.mrf.mxu0
    %v2421 = vpop.f32.mrf.mxu0
    %2422 = vdwg.mxu0
    %v2423 = vmul.f32 %v2375, 0.17677669
    %v2424 = vmul.f32 %v2418, 0.17677669
    %v2425 = vsel %vm1174, %v2423, -inf
    %v2426 = vrot.slane %v2425, 4
    %v2427 = vmax.f32 %v2425, %v2426
    %v2428 = vrot.slane %v2427, 2
    %v2429 = vmax.f32 %v2427, %v2428
    %v2430 = vrot.slane %v2429, 1
    %v2431 = vmax.f32 %v2429, %v2430
    %v2432 = vsel %vm1174, %v2424, -inf
    %v2433 = vrot.slane %v2432, 4
    %v2434 = vmax.f32 %v2432, %v2433
    %v2435 = vrot.slane %v2434, 2
    %v2436 = vmax.f32 %v2434, %v2435
    %v2437 = vrot.slane %v2436, 1
    %v2438 = vmax.f32 %v2436, %v2437
    %v2439 = vsub.f32 %v2423, %v2431
    %v2440 = vsub.f32 %v2424, %v2438
    %v2441 = vmul.f32 %v2439, 1.442695
    %v2442 = vpow.pop %v2441
    %v2443 = vmul.f32 %v2440, 1.442695
    %v2444 = vpow.pop %v2443
    %v2445 = vsel %vm1174, %v2442, 0.0
    %v2446 = vrot.slane %v2445, 4
    %v2447 = vadd.f32 %v2445, %v2446
    %v2448 = vrot.slane %v2447, 2
    %v2449 = vadd.f32 %v2447, %v2448
    %v2450 = vrot.slane %v2449, 1
    %v2451 = vadd.f32 %v2449, %v2450
    %v2452 = vsel %vm1174, %v2444, 0.0
    %v2453 = vrot.slane %v2452, 4
    %v2454 = vadd.f32 %v2452, %v2453
    %v2455 = vrot.slane %v2454, 2
    %v2456 = vadd.f32 %v2454, %v2455
    %v2457 = vrot.slane %v2456, 1
    %v2458 = vadd.f32 %v2456, %v2457
    %v2459 = vrcp.pop %v2451
    %v2460 = vrcp.pop %v2458
    %v2461 = vmul.f32 %v2442, %v2459
    %v2462 = vmul.f32 %v2444, %v2460
    %v2463 = vadd.f32 %v2461, 1e-08
    %v2464 = vadd.f32 %v2462, 1e-08
    %v2465 = vmul.f32 %v2463, %v1220
    %v2466 = vmul.f32 %v2464, %v1224
    %2467 = vst [vmem:[#allocation2] sm:$0xf] %v2465
    %2468 = vst [vmem:[#allocation2 + $0x4] sm:$0xf] %v2466
    // Predicated region
    $region66: #{tpu_custom_call.1} parent=1 // pred_check
      _
    $region67: #{tpu_custom_call.1} parent=1 // pred_check_branch
      %2470 = sbr.rel (0) target = $region69
    $region68: #{tpu_custom_call.1} parent=1 // pred_region
      %s2472 = ssub.s32 128, 128
      %2473 = vsyncadd [#allocation3], %s2472
      %s2474 = sshll.u32 [#allocation2], 4
      %s2475 = int_to_ptr.vmem [resolvable:$true] %s2474
      %2480 = dma.vmem_to_hbm [thread:$0]  %s2475, 128, %s16, [#allocation3], 64, 64, 4
    $region69: #{tpu_custom_call.1} parent=1 // pred_fallthru
      _
    // Predicated region
    $region70: #{tpu_custom_call.1} parent=1 // pred_check
      _
    $region71: #{tpu_custom_call.1} parent=1 // pred_check_branch
      %2482 = sbr.rel (0) target = $region73
    $region72: #{tpu_custom_call.1} parent=1 // pred_region
      %2483 = dma.done [#allocation3], 128
    $region73: #{tpu_custom_call.1} parent=1 // pred_fallthru
      _
    %2484 = vsyncpa [#allocation3], 1

</llo_original>
